<compile_context>
chip_gen: v7x
topology: tpu7x:2x2x1
jax: 0.10.0
libtpu: 0.0.40
codegen_flags: <defaults>
</compile_context>

<pallas_src>
import numpy as np
import jax
import jax.numpy as jnp
from jax.experimental import pallas as pl
from jax.experimental.pallas import tpu as pltpu


def char_gru_kernel(tok_ref,    # SMEM (B, T) int32   scalar-prefetched tokens
                    emb_ref,    # VMEM (V, H)         embedding table
                    w_ih_ref,   # (L, H, 3H)          input->hidden, gates (n|r|z) on out dim
                    w_hh_ref,   # (L, H, 3H)          hidden->hidden, gates (n|r|z)
                    b_i_ref,    # (L, 1, 3H)          [b_ih_n | b_ih_r+b_hh_r | b_ih_z+b_hh_z]
                    b_hn_ref,   # (L, 1, H)           b_hh_n (stays inside r * (.))
                    w1_ref,     # (H, H)              fc1 weight [in, out]
                    b1_ref,     # (1, H)
                    w2_ref,     # (H, O)              fc2 weight [in, out]
                    b2_ref,     # (1, O)
                    out_ref,    # (B, O)
                    seq_scr):   # VMEM (T*B, H)       layer l input, overwritten with layer l output
    L, H, _ = w_ih_ref.shape
    B, T = tok_ref.shape

    # ---- embedding gather prologue: build the time-major flattened input ----
    # row t*B + b of seq_scr = embedding[tokens[b, t]]
    for t in range(T):
        for b in range(B):
            seq_scr[pl.ds(t * B + b, 1), :] = emb_ref[pl.ds(tok_ref[b, t], 1), :]

    h_last = None
    for l in range(L):                         # static layer loop: weights hoisted once per layer
        w_ih = w_ih_ref[l]                     # (H, 3H)
        w_hh = w_hh_ref[l]                     # (H, 3H)
        b_i = b_i_ref[l]                       # (1, 3H)
        b_hn = b_hn_ref[l]                     # (1, H)

        # Hoisted input projection: one MXU pass over all T steps; gi does not
        # depend on h so it leaves the serial recurrence chain entirely.
        gi = jnp.dot(seq_scr[...], w_ih,
                     preferred_element_type=jnp.float32) + b_i          # (T*B, 3H)

        h = jnp.zeros((B, H), jnp.float32)
        for t in range(T):                     # static, fully unrolled (T=8)
            gi_t = gi[t * B:(t + 1) * B, :]                             # (B, 3H)
            gh = jnp.dot(h, w_hh, preferred_element_type=jnp.float32)   # (B, 3H)
            # one sigmoid over the whole 96-lane vreg (same cost as 64 lanes);
            # lanes H:2H hold r, lanes 2H:3H hold z.
            a = jax.nn.sigmoid(gi_t + gh)
            r = a[:, H:2 * H]
            z = a[:, 2 * H:]
            # n-gate operands all at lane offset 0 thanks to the (n|r|z) order.
            n = jnp.tanh(gi_t[:, :H] + r * (gh[:, :H] + b_hn))
            h = n + z * (h - n)                # == (1 - z) * n + z * h
            if l < L - 1:                      # last layer only needs its final h
                seq_scr[pl.ds(t * B, B), :] = h
        h_last = h

    # MLP head: relu(fc1) -> fc2 on the last layer's final hidden state.
    y = jnp.dot(h_last, w1_ref[...], preferred_element_type=jnp.float32) + b1_ref[...]
    y = jnp.maximum(y, 0.0)
    out_ref[...] = (jnp.dot(y, w2_ref[...], preferred_element_type=jnp.float32)
                    + b2_ref[...]).astype(out_ref.dtype)


def prepare_params(params):
    """One-time fused-gate re-layout (kept OUT of the per-call path).

    Raw params store gates as index 0=r, 1=z, 2=n; the fused layout concatenates
    the output dim in order (n | r | z) and folds b_hh_{r,z} into the input-side
    bias (b_hh_n stays separate since it sits inside the r * (.) term).
    """
    w_ih, w_hh = params["w_ih"], params["w_hh"]          # (L, 3, H, H), [in, out]
    b_ih, b_hh = params["b_ih"], params["b_hh"]          # (L, 3, 1, H)
    fused = {
        "embedding": params["embedding"].astype(jnp.float32),
        "w_ih_cat": jnp.concatenate([w_ih[:, 2], w_ih[:, 0], w_ih[:, 1]], axis=-1),
        "w_hh_cat": jnp.concatenate([w_hh[:, 2], w_hh[:, 0], w_hh[:, 1]], axis=-1),
        "b_i_cat": jnp.concatenate([b_ih[:, 2],
                                    b_ih[:, 0] + b_hh[:, 0],
                                    b_ih[:, 1] + b_hh[:, 1]], axis=-1),   # (L, 1, 3H)
        "b_hn": b_hh[:, 2],                                               # (L, 1, H)
        "w1": params["w1"], "b1": params["b1"],
        "w2": params["w2"], "b2": params["b2"],
    }
    return jax.tree_util.tree_map(jnp.asarray, fused)


@jax.jit
def char_gru_forward(tokens, fused):
    """tokens: int32 (B, T). fused: output of prepare_params. Returns (B, O) f32."""
    emb = fused["embedding"]
    V, H = emb.shape
    L = fused["w_ih_cat"].shape[0]
    O = fused["w2"].shape[1]
    B, T = tokens.shape

    grid_spec = pltpu.PrefetchScalarGridSpec(
        num_scalar_prefetch=1,                 # tokens -> SMEM, drives in-kernel gather
        grid=(1,),                             # single program: no per-step grid overhead
        in_specs=[
            pl.BlockSpec((V, H), lambda i, tok: (0, 0)),             # embedding table
            pl.BlockSpec((L, H, 3 * H), lambda i, tok: (0, 0, 0)),   # fused W_ih
            pl.BlockSpec((L, H, 3 * H), lambda i, tok: (0, 0, 0)),   # fused W_hh
            pl.BlockSpec((L, 1, 3 * H), lambda i, tok: (0, 0, 0)),   # fused input-side bias
            pl.BlockSpec((L, 1, H), lambda i, tok: (0, 0, 0)),       # b_hh_n
            pl.BlockSpec((H, H), lambda i, tok: (0, 0)),             # fc1 W
            pl.BlockSpec((1, H), lambda i, tok: (0, 0)),             # fc1 b
            pl.BlockSpec((H, O), lambda i, tok: (0, 0)),             # fc2 W
            pl.BlockSpec((1, O), lambda i, tok: (0, 0)),             # fc2 b
        ],
        out_specs=pl.BlockSpec((B, O), lambda i, tok: (0, 0)),
        scratch_shapes=[pltpu.VMEM((T * B, H), jnp.float32)],        # per-layer sequence buffer
    )
    return pl.pallas_call(
        char_gru_kernel,
        out_shape=jax.ShapeDtypeStruct((B, O), jnp.float32),
        grid_spec=grid_spec,
    )(tokens.astype(jnp.int32), emb,
      fused["w_ih_cat"], fused["w_hh_cat"], fused["b_i_cat"], fused["b_hn"],
      fused["w1"], fused["b1"], fused["w2"], fused["b2"])


def make_params(key, vocab, hidden, output, num_layers):
    ks = jax.random.split(key, 9)
    k = 1.0 / np.sqrt(hidden)
    u = lambda kk, shape: jax.random.uniform(kk, shape, jnp.float32, -k, k)
    return {
        "embedding": jax.random.normal(ks[0], (vocab, hidden), jnp.float32),
        # weights stored pre-transposed as [layer, gate(r,z,n), in, out]
        "w_ih": u(ks[1], (num_layers, 3, hidden, hidden)),
        "w_hh": u(ks[2], (num_layers, 3, hidden, hidden)),
        "b_ih": u(ks[3], (num_layers, 3, 1, hidden)),
        "b_hh": u(ks[4], (num_layers, 3, 1, hidden)),
        "w1": u(ks[5], (hidden, hidden)),
        "b1": u(ks[6], (1, hidden)),
        "w2": u(ks[7], (hidden, output)),
        "b2": u(ks[8], (1, output)),
    }


def reference_forward(tokens, p):
    """Pure-JAX reference matching nn.GRU(batch_first=True, eval mode) semantics."""
    emb = jnp.take(p["embedding"], tokens, axis=0)       # (B, T, H)
    B, T, H = emb.shape
    L = p["w_ih"].shape[0]
    layer_in = emb
    for l in range(L):
        h = jnp.zeros((B, H), jnp.float32)
        outs = []
        for t in range(T):
            x_t = layer_in[:, t, :]
            r = jax.nn.sigmoid(x_t @ p["w_ih"][l, 0] + p["b_ih"][l, 0]
                               + h @ p["w_hh"][l, 0] + p["b_hh"][l, 0])
            z = jax.nn.sigmoid(x_t @ p["w_ih"][l, 1] + p["b_ih"][l, 1]
                               + h @ p["w_hh"][l, 1] + p["b_hh"][l, 1])
            n = jnp.tanh(x_t @ p["w_ih"][l, 2] + p["b_ih"][l, 2]
                         + r * (h @ p["w_hh"][l, 2] + p["b_hh"][l, 2]))
            h = (1.0 - z) * n + z * h
            outs.append(h)
        layer_in = jnp.stack(outs, axis=1)
    last = layer_in[:, -1, :]
    y = jnp.maximum(last @ p["w1"] + p["b1"], 0.0)
    return y @ p["w2"] + p["b2"]


if __name__ == "__main__":
    # small shapes consistent with the module: vocab=16, hidden=32, output=16,
    # num_layers=3, batch=2, seq=8
    VOCAB, HIDDEN, OUTPUT, LAYERS = 16, 32, 16, 3
    BATCH, SEQ = 2, 8

    root = jax.random.PRNGKey(0)
    k_tok, k_par = jax.random.split(root)
    tokens = jax.random.randint(k_tok, (BATCH, SEQ), 0, VOCAB, dtype=jnp.int32)
    params = make_params(k_par, VOCAB, HIDDEN, OUTPUT, LAYERS)
    fused = prepare_params(params)            # one-time weight re-layout, off the call path

    out = char_gru_forward(tokens, fused)
    out = jax.block_until_ready(out)

    ref = reference_forward(tokens, params)
    assert out.shape == (BATCH, OUTPUT), out.shape
    assert np.allclose(np.asarray(out), np.asarray(ref), rtol=1e-4, atol=1e-4), \
        "Pallas kernel output does not match reference"
    print("KERNEL_OK")
</pallas_src>

<mosaic_0001>
module attributes {stable_mosaic.version = 11 : i64} {
  func.func @char_gru_kernel(%arg0: i32, %arg1: memref<2x8xi32, #tpu.memory_space<smem>>, %arg2: memref<16x32xf32, #tpu.memory_space<vmem>>, %arg3: memref<3x32x96xf32, #tpu.memory_space<vmem>>, %arg4: memref<3x32x96xf32, #tpu.memory_space<vmem>>, %arg5: memref<3x1x96xf32, #tpu.memory_space<vmem>>, %arg6: memref<3x1x32xf32, #tpu.memory_space<vmem>>, %arg7: memref<32x32xf32, #tpu.memory_space<vmem>>, %arg8: memref<1x32xf32, #tpu.memory_space<vmem>>, %arg9: memref<32x16xf32, #tpu.memory_space<vmem>>, %arg10: memref<1x16xf32, #tpu.memory_space<vmem>>, %arg11: memref<2x16xf32, #tpu.memory_space<vmem>>, %arg12: memref<16x32xf32, #tpu.memory_space<vmem>>) attributes {dimension_semantics = [#tpu.dimension_semantics<arbitrary>], iteration_bounds = array<i64: 1>, scalar_prefetch = 1 : i64, scratch_operands = 1 : i64, tpu.core_type = #tpu.core_type<tc>, window_params = [{pipeline_mode = #tpu.pipeline_mode<synchronous>, transform_indices = @transform_0, window_bounds = array<i64: 16, 32>}, {pipeline_mode = #tpu.pipeline_mode<synchronous>, transform_indices = @transform_1, window_bounds = array<i64: 3, 32, 96>}, {pipeline_mode = #tpu.pipeline_mode<synchronous>, transform_indices = @transform_2, window_bounds = array<i64: 3, 32, 96>}, {pipeline_mode = #tpu.pipeline_mode<synchronous>, transform_indices = @transform_3, window_bounds = array<i64: 3, 1, 96>}, {pipeline_mode = #tpu.pipeline_mode<synchronous>, transform_indices = @transform_4, window_bounds = array<i64: 3, 1, 32>}, {pipeline_mode = #tpu.pipeline_mode<synchronous>, transform_indices = @transform_5, window_bounds = array<i64: 32, 32>}, {pipeline_mode = #tpu.pipeline_mode<synchronous>, transform_indices = @transform_6, window_bounds = array<i64: 1, 32>}, {pipeline_mode = #tpu.pipeline_mode<synchronous>, transform_indices = @transform_7, window_bounds = array<i64: 32, 16>}, {pipeline_mode = #tpu.pipeline_mode<synchronous>, transform_indices = @transform_8, window_bounds = array<i64: 1, 16>}, {pipeline_mode = #tpu.pipeline_mode<synchronous>, transform_indices = @transform_9, window_bounds = array<i64: 2, 16>}]} {
    %c0 = arith.constant 0 : index
    %c0_0 = arith.constant 0 : index
    %0 = memref.load %arg1[%c0, %c0_0] : memref<2x8xi32, #tpu.memory_space<smem>>
    %1 = arith.index_cast %0 : i32 to index
    %c0_1 = arith.constant 0 : index
    %2 = vector.load %arg2[%1, %c0_1] : memref<16x32xf32, #tpu.memory_space<vmem>>, vector<1x32xf32>
    %c0_2 = arith.constant 0 : index
    %c0_3 = arith.constant 0 : index
    %3 = vector.load %arg12[%c0_2, %c0_3] : memref<16x32xf32, #tpu.memory_space<vmem>>, vector<1x32xf32>
    tpu.vector_store %arg12[%c0_2, %c0_3], %2 {strides = array<i32>} : memref<16x32xf32, #tpu.memory_space<vmem>>, vector<1x32xf32>,
    %c1 = arith.constant 1 : index
    %c0_4 = arith.constant 0 : index
    %4 = memref.load %arg1[%c1, %c0_4] : memref<2x8xi32, #tpu.memory_space<smem>>
    %5 = arith.index_cast %4 : i32 to index
    %c0_5 = arith.constant 0 : index
    %6 = vector.load %arg2[%5, %c0_5] : memref<16x32xf32, #tpu.memory_space<vmem>>, vector<1x32xf32>
    %c1_6 = arith.constant 1 : index
    %c0_7 = arith.constant 0 : index
    %7 = vector.load %arg12[%c1_6, %c0_7] : memref<16x32xf32, #tpu.memory_space<vmem>>, vector<1x32xf32>
    tpu.vector_store %arg12[%c1_6, %c0_7], %6 {strides = array<i32>} : memref<16x32xf32, #tpu.memory_space<vmem>>, vector<1x32xf32>,
    %c0_8 = arith.constant 0 : index
    %c1_9 = arith.constant 1 : index
    %8 = memref.load %arg1[%c0_8, %c1_9] : memref<2x8xi32, #tpu.memory_space<smem>>
    %9 = arith.index_cast %8 : i32 to index
    %c0_10 = arith.constant 0 : index
    %10 = vector.load %arg2[%9, %c0_10] : memref<16x32xf32, #tpu.memory_space<vmem>>, vector<1x32xf32>
    %c2 = arith.constant 2 : index
    %c0_11 = arith.constant 0 : index
    %11 = vector.load %arg12[%c2, %c0_11] : memref<16x32xf32, #tpu.memory_space<vmem>>, vector<1x32xf32>
    tpu.vector_store %arg12[%c2, %c0_11], %10 {strides = array<i32>} : memref<16x32xf32, #tpu.memory_space<vmem>>, vector<1x32xf32>,
    %c1_12 = arith.constant 1 : index
    %c1_13 = arith.constant 1 : index
    %12 = memref.load %arg1[%c1_12, %c1_13] : memref<2x8xi32, #tpu.memory_space<smem>>
    %13 = arith.index_cast %12 : i32 to index
    %c0_14 = arith.constant 0 : index
    %14 = vector.load %arg2[%13, %c0_14] : memref<16x32xf32, #tpu.memory_space<vmem>>, vector<1x32xf32>
    %c3 = arith.constant 3 : index
    %c0_15 = arith.constant 0 : index
    %15 = vector.load %arg12[%c3, %c0_15] : memref<16x32xf32, #tpu.memory_space<vmem>>, vector<1x32xf32>
    tpu.vector_store %arg12[%c3, %c0_15], %14 {strides = array<i32>} : memref<16x32xf32, #tpu.memory_space<vmem>>, vector<1x32xf32>,
    %c0_16 = arith.constant 0 : index
    %c2_17 = arith.constant 2 : index
    %16 = memref.load %arg1[%c0_16, %c2_17] : memref<2x8xi32, #tpu.memory_space<smem>>
    %17 = arith.index_cast %16 : i32 to index
    %c0_18 = arith.constant 0 : index
    %18 = vector.load %arg2[%17, %c0_18] : memref<16x32xf32, #tpu.memory_space<vmem>>, vector<1x32xf32>
    %c4 = arith.constant 4 : index
    %c0_19 = arith.constant 0 : index
    %19 = vector.load %arg12[%c4, %c0_19] : memref<16x32xf32, #tpu.memory_space<vmem>>, vector<1x32xf32>
    tpu.vector_store %arg12[%c4, %c0_19], %18 {strides = array<i32>} : memref<16x32xf32, #tpu.memory_space<vmem>>, vector<1x32xf32>,
    %c1_20 = arith.constant 1 : index
    %c2_21 = arith.constant 2 : index
    %20 = memref.load %arg1[%c1_20, %c2_21] : memref<2x8xi32, #tpu.memory_space<smem>>
    %21 = arith.index_cast %20 : i32 to index
    %c0_22 = arith.constant 0 : index
    %22 = vector.load %arg2[%21, %c0_22] : memref<16x32xf32, #tpu.memory_space<vmem>>, vector<1x32xf32>
    %c5 = arith.constant 5 : index
    %c0_23 = arith.constant 0 : index
    %23 = vector.load %arg12[%c5, %c0_23] : memref<16x32xf32, #tpu.memory_space<vmem>>, vector<1x32xf32>
    tpu.vector_store %arg12[%c5, %c0_23], %22 {strides = array<i32>} : memref<16x32xf32, #tpu.memory_space<vmem>>, vector<1x32xf32>,
    %c0_24 = arith.constant 0 : index
    %c3_25 = arith.constant 3 : index
    %24 = memref.load %arg1[%c0_24, %c3_25] : memref<2x8xi32, #tpu.memory_space<smem>>
    %25 = arith.index_cast %24 : i32 to index
    %c0_26 = arith.constant 0 : index
    %26 = vector.load %arg2[%25, %c0_26] : memref<16x32xf32, #tpu.memory_space<vmem>>, vector<1x32xf32>
    %c6 = arith.constant 6 : index
    %c0_27 = arith.constant 0 : index
    %27 = vector.load %arg12[%c6, %c0_27] : memref<16x32xf32, #tpu.memory_space<vmem>>, vector<1x32xf32>
    tpu.vector_store %arg12[%c6, %c0_27], %26 {strides = array<i32>} : memref<16x32xf32, #tpu.memory_space<vmem>>, vector<1x32xf32>,
    %c1_28 = arith.constant 1 : index
    %c3_29 = arith.constant 3 : index
    %28 = memref.load %arg1[%c1_28, %c3_29] : memref<2x8xi32, #tpu.memory_space<smem>>
    %29 = arith.index_cast %28 : i32 to index
    %c0_30 = arith.constant 0 : index
    %30 = vector.load %arg2[%29, %c0_30] : memref<16x32xf32, #tpu.memory_space<vmem>>, vector<1x32xf32>
    %c7 = arith.constant 7 : index
    %c0_31 = arith.constant 0 : index
    %31 = vector.load %arg12[%c7, %c0_31] : memref<16x32xf32, #tpu.memory_space<vmem>>, vector<1x32xf32>
    tpu.vector_store %arg12[%c7, %c0_31], %30 {strides = array<i32>} : memref<16x32xf32, #tpu.memory_space<vmem>>, vector<1x32xf32>,
    %c0_32 = arith.constant 0 : index
    %c4_33 = arith.constant 4 : index
    %32 = memref.load %arg1[%c0_32, %c4_33] : memref<2x8xi32, #tpu.memory_space<smem>>
    %33 = arith.index_cast %32 : i32 to index
    %c0_34 = arith.constant 0 : index
    %34 = vector.load %arg2[%33, %c0_34] : memref<16x32xf32, #tpu.memory_space<vmem>>, vector<1x32xf32>
    %c8 = arith.constant 8 : index
    %c0_35 = arith.constant 0 : index
    %35 = vector.load %arg12[%c8, %c0_35] : memref<16x32xf32, #tpu.memory_space<vmem>>, vector<1x32xf32>
    tpu.vector_store %arg12[%c8, %c0_35], %34 {strides = array<i32>} : memref<16x32xf32, #tpu.memory_space<vmem>>, vector<1x32xf32>,
    %c1_36 = arith.constant 1 : index
    %c4_37 = arith.constant 4 : index
    %36 = memref.load %arg1[%c1_36, %c4_37] : memref<2x8xi32, #tpu.memory_space<smem>>
    %37 = arith.index_cast %36 : i32 to index
    %c0_38 = arith.constant 0 : index
    %38 = vector.load %arg2[%37, %c0_38] : memref<16x32xf32, #tpu.memory_space<vmem>>, vector<1x32xf32>
    %c9 = arith.constant 9 : index
    %c0_39 = arith.constant 0 : index
    %39 = vector.load %arg12[%c9, %c0_39] : memref<16x32xf32, #tpu.memory_space<vmem>>, vector<1x32xf32>
    tpu.vector_store %arg12[%c9, %c0_39], %38 {strides = array<i32>} : memref<16x32xf32, #tpu.memory_space<vmem>>, vector<1x32xf32>,
    %c0_40 = arith.constant 0 : index
    %c5_41 = arith.constant 5 : index
    %40 = memref.load %arg1[%c0_40, %c5_41] : memref<2x8xi32, #tpu.memory_space<smem>>
    %41 = arith.index_cast %40 : i32 to index
    %c0_42 = arith.constant 0 : index
    %42 = vector.load %arg2[%41, %c0_42] : memref<16x32xf32, #tpu.memory_space<vmem>>, vector<1x32xf32>
    %c10 = arith.constant 10 : index
    %c0_43 = arith.constant 0 : index
    %43 = vector.load %arg12[%c10, %c0_43] : memref<16x32xf32, #tpu.memory_space<vmem>>, vector<1x32xf32>
    tpu.vector_store %arg12[%c10, %c0_43], %42 {strides = array<i32>} : memref<16x32xf32, #tpu.memory_space<vmem>>, vector<1x32xf32>,
    %c1_44 = arith.constant 1 : index
    %c5_45 = arith.constant 5 : index
    %44 = memref.load %arg1[%c1_44, %c5_45] : memref<2x8xi32, #tpu.memory_space<smem>>
    %45 = arith.index_cast %44 : i32 to index
    %c0_46 = arith.constant 0 : index
    %46 = vector.load %arg2[%45, %c0_46] : memref<16x32xf32, #tpu.memory_space<vmem>>, vector<1x32xf32>
    %c11 = arith.constant 11 : index
    %c0_47 = arith.constant 0 : index
    %47 = vector.load %arg12[%c11, %c0_47] : memref<16x32xf32, #tpu.memory_space<vmem>>, vector<1x32xf32>
    tpu.vector_store %arg12[%c11, %c0_47], %46 {strides = array<i32>} : memref<16x32xf32, #tpu.memory_space<vmem>>, vector<1x32xf32>,
    %c0_48 = arith.constant 0 : index
    %c6_49 = arith.constant 6 : index
    %48 = memref.load %arg1[%c0_48, %c6_49] : memref<2x8xi32, #tpu.memory_space<smem>>
    %49 = arith.index_cast %48 : i32 to index
    %c0_50 = arith.constant 0 : index
    %50 = vector.load %arg2[%49, %c0_50] : memref<16x32xf32, #tpu.memory_space<vmem>>, vector<1x32xf32>
    %c12 = arith.constant 12 : index
    %c0_51 = arith.constant 0 : index
    %51 = vector.load %arg12[%c12, %c0_51] : memref<16x32xf32, #tpu.memory_space<vmem>>, vector<1x32xf32>
    tpu.vector_store %arg12[%c12, %c0_51], %50 {strides = array<i32>} : memref<16x32xf32, #tpu.memory_space<vmem>>, vector<1x32xf32>,
    %c1_52 = arith.constant 1 : index
    %c6_53 = arith.constant 6 : index
    %52 = memref.load %arg1[%c1_52, %c6_53] : memref<2x8xi32, #tpu.memory_space<smem>>
    %53 = arith.index_cast %52 : i32 to index
    %c0_54 = arith.constant 0 : index
    %54 = vector.load %arg2[%53, %c0_54] : memref<16x32xf32, #tpu.memory_space<vmem>>, vector<1x32xf32>
    %c13 = arith.constant 13 : index
    %c0_55 = arith.constant 0 : index
    %55 = vector.load %arg12[%c13, %c0_55] : memref<16x32xf32, #tpu.memory_space<vmem>>, vector<1x32xf32>
    tpu.vector_store %arg12[%c13, %c0_55], %54 {strides = array<i32>} : memref<16x32xf32, #tpu.memory_space<vmem>>, vector<1x32xf32>,
    %c0_56 = arith.constant 0 : index
    %c7_57 = arith.constant 7 : index
    %56 = memref.load %arg1[%c0_56, %c7_57] : memref<2x8xi32, #tpu.memory_space<smem>>
    %57 = arith.index_cast %56 : i32 to index
    %c0_58 = arith.constant 0 : index
    %58 = vector.load %arg2[%57, %c0_58] : memref<16x32xf32, #tpu.memory_space<vmem>>, vector<1x32xf32>
    %c14 = arith.constant 14 : index
    %c0_59 = arith.constant 0 : index
    %59 = vector.load %arg12[%c14, %c0_59] : memref<16x32xf32, #tpu.memory_space<vmem>>, vector<1x32xf32>
    tpu.vector_store %arg12[%c14, %c0_59], %58 {strides = array<i32>} : memref<16x32xf32, #tpu.memory_space<vmem>>, vector<1x32xf32>,
    %c1_60 = arith.constant 1 : index
    %c7_61 = arith.constant 7 : index
    %60 = memref.load %arg1[%c1_60, %c7_61] : memref<2x8xi32, #tpu.memory_space<smem>>
    %61 = arith.index_cast %60 : i32 to index
    %c0_62 = arith.constant 0 : index
    %62 = vector.load %arg2[%61, %c0_62] : memref<16x32xf32, #tpu.memory_space<vmem>>, vector<1x32xf32>
    %c15 = arith.constant 15 : index
    %c0_63 = arith.constant 0 : index
    %63 = vector.load %arg12[%c15, %c0_63] : memref<16x32xf32, #tpu.memory_space<vmem>>, vector<1x32xf32>
    tpu.vector_store %arg12[%c15, %c0_63], %62 {strides = array<i32>} : memref<16x32xf32, #tpu.memory_space<vmem>>, vector<1x32xf32>,
    %c0_64 = arith.constant 0 : index
    %c0_65 = arith.constant 0 : index
    %c0_66 = arith.constant 0 : index
    %64 = vector.load %arg3[%c0_64, %c0_65, %c0_66] : memref<3x32x96xf32, #tpu.memory_space<vmem>>, vector<1x32x96xf32>
    %65 = vector.shape_cast %64 : vector<1x32x96xf32> to vector<32x96xf32>
    %c0_67 = arith.constant 0 : index
    %c0_68 = arith.constant 0 : index
    %c0_69 = arith.constant 0 : index
    %66 = vector.load %arg4[%c0_67, %c0_68, %c0_69] : memref<3x32x96xf32, #tpu.memory_space<vmem>>, vector<1x32x96xf32>
    %67 = vector.shape_cast %66 : vector<1x32x96xf32> to vector<32x96xf32>
    %c0_70 = arith.constant 0 : index
    %c0_71 = arith.constant 0 : index
    %c0_72 = arith.constant 0 : index
    %68 = vector.load %arg5[%c0_70, %c0_71, %c0_72] : memref<3x1x96xf32, #tpu.memory_space<vmem>>, vector<1x1x96xf32>
    %69 = vector.shape_cast %68 : vector<1x1x96xf32> to vector<1x96xf32>
    %c0_73 = arith.constant 0 : index
    %c0_74 = arith.constant 0 : index
    %c0_75 = arith.constant 0 : index
    %70 = vector.load %arg6[%c0_73, %c0_74, %c0_75] : memref<3x1x32xf32, #tpu.memory_space<vmem>>, vector<1x1x32xf32>
    %71 = vector.shape_cast %70 : vector<1x1x32xf32> to vector<1x32xf32>
    %c0_76 = arith.constant 0 : index
    %c0_77 = arith.constant 0 : index
    %72 = vector.load %arg12[%c0_76, %c0_77] : memref<16x32xf32, #tpu.memory_space<vmem>>, vector<16x32xf32>
    %cst = arith.constant dense<0.000000e+00> : vector<16x96xf32>
    %73 = tpu.matmul %72, %65, %cst {dimension_numbers = #tpu.dot_dimension_numbers<[1], [0], [0], [1], [0, 0, 1, 1], [], []>} : vector<16x32xf32>, vector<32x96xf32>, vector<16x96xf32> -> vector<16x96xf32>
    %74 = vector.broadcast %69 : vector<1x96xf32> to vector<16x96xf32>
    %75 = arith.addf %73, %74 : vector<16x96xf32>
    %cst_78 = arith.constant 0.000000e+00 : f32
    %76 = vector.broadcast %cst_78 : f32 to vector<2x32xf32>
    %77 = vector.extract_strided_slice %75 {offsets = [0, 0], sizes = [2, 96], strides = [1, 1]} : vector<16x96xf32> to vector<2x96xf32>
    %cst_79 = arith.constant dense<0.000000e+00> : vector<2x96xf32>
    %78 = tpu.matmul %76, %67, %cst_79 {dimension_numbers = #tpu.dot_dimension_numbers<[1], [0], [0], [1], [0, 0, 1, 1], [], []>} : vector<2x32xf32>, vector<32x96xf32>, vector<2x96xf32> -> vector<2x96xf32>
    %79 = arith.addf %77, %78 : vector<2x96xf32>
    %80 = arith.negf %79 : vector<2x96xf32>
    %81 = math.exp %80 : vector<2x96xf32>
    %cst_80 = arith.constant 1.000000e+00 : f32
    %82 = vector.broadcast %cst_80 : f32 to vector<2x96xf32>
    %83 = arith.addf %82, %81 : vector<2x96xf32>
    %84 = arith.divf %82, %83 : vector<2x96xf32>
    %85 = vector.extract_strided_slice %84 {offsets = [0, 32], sizes = [2, 32], strides = [1, 1]} : vector<2x96xf32> to vector<2x32xf32>
    %86 = vector.extract_strided_slice %84 {offsets = [0, 64], sizes = [2, 32], strides = [1, 1]} : vector<2x96xf32> to vector<2x32xf32>
    %87 = vector.extract_strided_slice %77 {offsets = [0, 0], sizes = [2, 32], strides = [1, 1]} : vector<2x96xf32> to vector<2x32xf32>
    %88 = vector.extract_strided_slice %78 {offsets = [0, 0], sizes = [2, 32], strides = [1, 1]} : vector<2x96xf32> to vector<2x32xf32>
    %89 = vector.broadcast %71 : vector<1x32xf32> to vector<2x32xf32>
    %90 = arith.addf %88, %89 : vector<2x32xf32>
    %91 = arith.mulf %85, %90 : vector<2x32xf32>
    %92 = arith.addf %87, %91 : vector<2x32xf32>
    %93 = math.tanh %92 : vector<2x32xf32>
    %94 = arith.subf %76, %93 : vector<2x32xf32>
    %95 = arith.mulf %86, %94 : vector<2x32xf32>
    %96 = arith.addf %93, %95 : vector<2x32xf32>
    %c0_81 = arith.constant 0 : index
    %c0_82 = arith.constant 0 : index
    %97 = vector.load %arg12[%c0_81, %c0_82] : memref<16x32xf32, #tpu.memory_space<vmem>>, vector<2x32xf32>
    tpu.vector_store %arg12[%c0_81, %c0_82], %96 {strides = array<i32>} : memref<16x32xf32, #tpu.memory_space<vmem>>, vector<2x32xf32>,
    %98 = vector.extract_strided_slice %75 {offsets = [2, 0], sizes = [2, 96], strides = [1, 1]} : vector<16x96xf32> to vector<2x96xf32>
    %cst_83 = arith.constant dense<0.000000e+00> : vector<2x96xf32>
    %99 = tpu.matmul %96, %67, %cst_83 {dimension_numbers = #tpu.dot_dimension_numbers<[1], [0], [0], [1], [0, 0, 1, 1], [], []>} : vector<2x32xf32>, vector<32x96xf32>, vector<2x96xf32> -> vector<2x96xf32>
    %100 = arith.addf %98, %99 : vector<2x96xf32>
    %101 = arith.negf %100 : vector<2x96xf32>
    %102 = math.exp %101 : vector<2x96xf32>
    %cst_84 = arith.constant 1.000000e+00 : f32
    %103 = vector.broadcast %cst_84 : f32 to vector<2x96xf32>
    %104 = arith.addf %103, %102 : vector<2x96xf32>
    %105 = arith.divf %103, %104 : vector<2x96xf32>
    %106 = vector.extract_strided_slice %105 {offsets = [0, 32], sizes = [2, 32], strides = [1, 1]} : vector<2x96xf32> to vector<2x32xf32>
    %107 = vector.extract_strided_slice %105 {offsets = [0, 64], sizes = [2, 32], strides = [1, 1]} : vector<2x96xf32> to vector<2x32xf32>
    %108 = vector.extract_strided_slice %98 {offsets = [0, 0], sizes = [2, 32], strides = [1, 1]} : vector<2x96xf32> to vector<2x32xf32>
    %109 = vector.extract_strided_slice %99 {offsets = [0, 0], sizes = [2, 32], strides = [1, 1]} : vector<2x96xf32> to vector<2x32xf32>
    %110 = vector.broadcast %71 : vector<1x32xf32> to vector<2x32xf32>
    %111 = arith.addf %109, %110 : vector<2x32xf32>
    %112 = arith.mulf %106, %111 : vector<2x32xf32>
    %113 = arith.addf %108, %112 : vector<2x32xf32>
    %114 = math.tanh %113 : vector<2x32xf32>
    %115 = arith.subf %96, %114 : vector<2x32xf32>
    %116 = arith.mulf %107, %115 : vector<2x32xf32>
    %117 = arith.addf %114, %116 : vector<2x32xf32>
    %c2_85 = arith.constant 2 : index
    %c0_86 = arith.constant 0 : index
    %118 = vector.load %arg12[%c2_85, %c0_86] : memref<16x32xf32, #tpu.memory_space<vmem>>, vector<2x32xf32>
    tpu.vector_store %arg12[%c2_85, %c0_86], %117 {strides = array<i32>} : memref<16x32xf32, #tpu.memory_space<vmem>>, vector<2x32xf32>,
    %119 = vector.extract_strided_slice %75 {offsets = [4, 0], sizes = [2, 96], strides = [1, 1]} : vector<16x96xf32> to vector<2x96xf32>
    %cst_87 = arith.constant dense<0.000000e+00> : vector<2x96xf32>
    %120 = tpu.matmul %117, %67, %cst_87 {dimension_numbers = #tpu.dot_dimension_numbers<[1], [0], [0], [1], [0, 0, 1, 1], [], []>} : vector<2x32xf32>, vector<32x96xf32>, vector<2x96xf32> -> vector<2x96xf32>
    %121 = arith.addf %119, %120 : vector<2x96xf32>
    %122 = arith.negf %121 : vector<2x96xf32>
    %123 = math.exp %122 : vector<2x96xf32>
    %cst_88 = arith.constant 1.000000e+00 : f32
    %124 = vector.broadcast %cst_88 : f32 to vector<2x96xf32>
    %125 = arith.addf %124, %123 : vector<2x96xf32>
    %126 = arith.divf %124, %125 : vector<2x96xf32>
    %127 = vector.extract_strided_slice %126 {offsets = [0, 32], sizes = [2, 32], strides = [1, 1]} : vector<2x96xf32> to vector<2x32xf32>
    %128 = vector.extract_strided_slice %126 {offsets = [0, 64], sizes = [2, 32], strides = [1, 1]} : vector<2x96xf32> to vector<2x32xf32>
    %129 = vector.extract_strided_slice %119 {offsets = [0, 0], sizes = [2, 32], strides = [1, 1]} : vector<2x96xf32> to vector<2x32xf32>
    %130 = vector.extract_strided_slice %120 {offsets = [0, 0], sizes = [2, 32], strides = [1, 1]} : vector<2x96xf32> to vector<2x32xf32>
    %131 = vector.broadcast %71 : vector<1x32xf32> to vector<2x32xf32>
    %132 = arith.addf %130, %131 : vector<2x32xf32>
    %133 = arith.mulf %127, %132 : vector<2x32xf32>
    %134 = arith.addf %129, %133 : vector<2x32xf32>
    %135 = math.tanh %134 : vector<2x32xf32>
    %136 = arith.subf %117, %135 : vector<2x32xf32>
    %137 = arith.mulf %128, %136 : vector<2x32xf32>
    %138 = arith.addf %135, %137 : vector<2x32xf32>
    %c4_89 = arith.constant 4 : index
    %c0_90 = arith.constant 0 : index
    %139 = vector.load %arg12[%c4_89, %c0_90] : memref<16x32xf32, #tpu.memory_space<vmem>>, vector<2x32xf32>
    tpu.vector_store %arg12[%c4_89, %c0_90], %138 {strides = array<i32>} : memref<16x32xf32, #tpu.memory_space<vmem>>, vector<2x32xf32>,
    %140 = vector.extract_strided_slice %75 {offsets = [6, 0], sizes = [2, 96], strides = [1, 1]} : vector<16x96xf32> to vector<2x96xf32>
    %cst_91 = arith.constant dense<0.000000e+00> : vector<2x96xf32>
    %141 = tpu.matmul %138, %67, %cst_91 {dimension_numbers = #tpu.dot_dimension_numbers<[1], [0], [0], [1], [0, 0, 1, 1], [], []>} : vector<2x32xf32>, vector<32x96xf32>, vector<2x96xf32> -> vector<2x96xf32>
    %142 = arith.addf %140, %141 : vector<2x96xf32>
    %143 = arith.negf %142 : vector<2x96xf32>
    %144 = math.exp %143 : vector<2x96xf32>
    %cst_92 = arith.constant 1.000000e+00 : f32
    %145 = vector.broadcast %cst_92 : f32 to vector<2x96xf32>
    %146 = arith.addf %145, %144 : vector<2x96xf32>
    %147 = arith.divf %145, %146 : vector<2x96xf32>
    %148 = vector.extract_strided_slice %147 {offsets = [0, 32], sizes = [2, 32], strides = [1, 1]} : vector<2x96xf32> to vector<2x32xf32>
    %149 = vector.extract_strided_slice %147 {offsets = [0, 64], sizes = [2, 32], strides = [1, 1]} : vector<2x96xf32> to vector<2x32xf32>
    %150 = vector.extract_strided_slice %140 {offsets = [0, 0], sizes = [2, 32], strides = [1, 1]} : vector<2x96xf32> to vector<2x32xf32>
    %151 = vector.extract_strided_slice %141 {offsets = [0, 0], sizes = [2, 32], strides = [1, 1]} : vector<2x96xf32> to vector<2x32xf32>
    %152 = vector.broadcast %71 : vector<1x32xf32> to vector<2x32xf32>
    %153 = arith.addf %151, %152 : vector<2x32xf32>
    %154 = arith.mulf %148, %153 : vector<2x32xf32>
    %155 = arith.addf %150, %154 : vector<2x32xf32>
    %156 = math.tanh %155 : vector<2x32xf32>
    %157 = arith.subf %138, %156 : vector<2x32xf32>
    %158 = arith.mulf %149, %157 : vector<2x32xf32>
    %159 = arith.addf %156, %158 : vector<2x32xf32>
    %c6_93 = arith.constant 6 : index
    %c0_94 = arith.constant 0 : index
    %160 = vector.load %arg12[%c6_93, %c0_94] : memref<16x32xf32, #tpu.memory_space<vmem>>, vector<2x32xf32>
    tpu.vector_store %arg12[%c6_93, %c0_94], %159 {strides = array<i32>} : memref<16x32xf32, #tpu.memory_space<vmem>>, vector<2x32xf32>,
    %161 = vector.extract_strided_slice %75 {offsets = [8, 0], sizes = [2, 96], strides = [1, 1]} : vector<16x96xf32> to vector<2x96xf32>
    %cst_95 = arith.constant dense<0.000000e+00> : vector<2x96xf32>
    %162 = tpu.matmul %159, %67, %cst_95 {dimension_numbers = #tpu.dot_dimension_numbers<[1], [0], [0], [1], [0, 0, 1, 1], [], []>} : vector<2x32xf32>, vector<32x96xf32>, vector<2x96xf32> -> vector<2x96xf32>
    %163 = arith.addf %161, %162 : vector<2x96xf32>
    %164 = arith.negf %163 : vector<2x96xf32>
    %165 = math.exp %164 : vector<2x96xf32>
    %cst_96 = arith.constant 1.000000e+00 : f32
    %166 = vector.broadcast %cst_96 : f32 to vector<2x96xf32>
    %167 = arith.addf %166, %165 : vector<2x96xf32>
    %168 = arith.divf %166, %167 : vector<2x96xf32>
    %169 = vector.extract_strided_slice %168 {offsets = [0, 32], sizes = [2, 32], strides = [1, 1]} : vector<2x96xf32> to vector<2x32xf32>
    %170 = vector.extract_strided_slice %168 {offsets = [0, 64], sizes = [2, 32], strides = [1, 1]} : vector<2x96xf32> to vector<2x32xf32>
    %171 = vector.extract_strided_slice %161 {offsets = [0, 0], sizes = [2, 32], strides = [1, 1]} : vector<2x96xf32> to vector<2x32xf32>
    %172 = vector.extract_strided_slice %162 {offsets = [0, 0], sizes = [2, 32], strides = [1, 1]} : vector<2x96xf32> to vector<2x32xf32>
    %173 = vector.broadcast %71 : vector<1x32xf32> to vector<2x32xf32>
    %174 = arith.addf %172, %173 : vector<2x32xf32>
    %175 = arith.mulf %169, %174 : vector<2x32xf32>
    %176 = arith.addf %171, %175 : vector<2x32xf32>
    %177 = math.tanh %176 : vector<2x32xf32>
    %178 = arith.subf %159, %177 : vector<2x32xf32>
    %179 = arith.mulf %170, %178 : vector<2x32xf32>
    %180 = arith.addf %177, %179 : vector<2x32xf32>
    %c8_97 = arith.constant 8 : index
    %c0_98 = arith.constant 0 : index
    %181 = vector.load %arg12[%c8_97, %c0_98] : memref<16x32xf32, #tpu.memory_space<vmem>>, vector<2x32xf32>
    tpu.vector_store %arg12[%c8_97, %c0_98], %180 {strides = array<i32>} : memref<16x32xf32, #tpu.memory_space<vmem>>, vector<2x32xf32>,
    %182 = vector.extract_strided_slice %75 {offsets = [10, 0], sizes = [2, 96], strides = [1, 1]} : vector<16x96xf32> to vector<2x96xf32>
    %cst_99 = arith.constant dense<0.000000e+00> : vector<2x96xf32>
    %183 = tpu.matmul %180, %67, %cst_99 {dimension_numbers = #tpu.dot_dimension_numbers<[1], [0], [0], [1], [0, 0, 1, 1], [], []>} : vector<2x32xf32>, vector<32x96xf32>, vector<2x96xf32> -> vector<2x96xf32>
    %184 = arith.addf %182, %183 : vector<2x96xf32>
    %185 = arith.negf %184 : vector<2x96xf32>
    %186 = math.exp %185 : vector<2x96xf32>
    %cst_100 = arith.constant 1.000000e+00 : f32
    %187 = vector.broadcast %cst_100 : f32 to vector<2x96xf32>
    %188 = arith.addf %187, %186 : vector<2x96xf32>
    %189 = arith.divf %187, %188 : vector<2x96xf32>
    %190 = vector.extract_strided_slice %189 {offsets = [0, 32], sizes = [2, 32], strides = [1, 1]} : vector<2x96xf32> to vector<2x32xf32>
    %191 = vector.extract_strided_slice %189 {offsets = [0, 64], sizes = [2, 32], strides = [1, 1]} : vector<2x96xf32> to vector<2x32xf32>
    %192 = vector.extract_strided_slice %182 {offsets = [0, 0], sizes = [2, 32], strides = [1, 1]} : vector<2x96xf32> to vector<2x32xf32>
    %193 = vector.extract_strided_slice %183 {offsets = [0, 0], sizes = [2, 32], strides = [1, 1]} : vector<2x96xf32> to vector<2x32xf32>
    %194 = vector.broadcast %71 : vector<1x32xf32> to vector<2x32xf32>
    %195 = arith.addf %193, %194 : vector<2x32xf32>
    %196 = arith.mulf %190, %195 : vector<2x32xf32>
    %197 = arith.addf %192, %196 : vector<2x32xf32>
    %198 = math.tanh %197 : vector<2x32xf32>
    %199 = arith.subf %180, %198 : vector<2x32xf32>
    %200 = arith.mulf %191, %199 : vector<2x32xf32>
    %201 = arith.addf %198, %200 : vector<2x32xf32>
    %c10_101 = arith.constant 10 : index
    %c0_102 = arith.constant 0 : index
    %202 = vector.load %arg12[%c10_101, %c0_102] : memref<16x32xf32, #tpu.memory_space<vmem>>, vector<2x32xf32>
    tpu.vector_store %arg12[%c10_101, %c0_102], %201 {strides = array<i32>} : memref<16x32xf32, #tpu.memory_space<vmem>>, vector<2x32xf32>,
    %203 = vector.extract_strided_slice %75 {offsets = [12, 0], sizes = [2, 96], strides = [1, 1]} : vector<16x96xf32> to vector<2x96xf32>
    %cst_103 = arith.constant dense<0.000000e+00> : vector<2x96xf32>
    %204 = tpu.matmul %201, %67, %cst_103 {dimension_numbers = #tpu.dot_dimension_numbers<[1], [0], [0], [1], [0, 0, 1, 1], [], []>} : vector<2x32xf32>, vector<32x96xf32>, vector<2x96xf32> -> vector<2x96xf32>
    %205 = arith.addf %203, %204 : vector<2x96xf32>
    %206 = arith.negf %205 : vector<2x96xf32>
    %207 = math.exp %206 : vector<2x96xf32>
    %cst_104 = arith.constant 1.000000e+00 : f32
    %208 = vector.broadcast %cst_104 : f32 to vector<2x96xf32>
    %209 = arith.addf %208, %207 : vector<2x96xf32>
    %210 = arith.divf %208, %209 : vector<2x96xf32>
    %211 = vector.extract_strided_slice %210 {offsets = [0, 32], sizes = [2, 32], strides = [1, 1]} : vector<2x96xf32> to vector<2x32xf32>
    %212 = vector.extract_strided_slice %210 {offsets = [0, 64], sizes = [2, 32], strides = [1, 1]} : vector<2x96xf32> to vector<2x32xf32>
    %213 = vector.extract_strided_slice %203 {offsets = [0, 0], sizes = [2, 32], strides = [1, 1]} : vector<2x96xf32> to vector<2x32xf32>
    %214 = vector.extract_strided_slice %204 {offsets = [0, 0], sizes = [2, 32], strides = [1, 1]} : vector<2x96xf32> to vector<2x32xf32>
    %215 = vector.broadcast %71 : vector<1x32xf32> to vector<2x32xf32>
    %216 = arith.addf %214, %215 : vector<2x32xf32>
    %217 = arith.mulf %211, %216 : vector<2x32xf32>
    %218 = arith.addf %213, %217 : vector<2x32xf32>
    %219 = math.tanh %218 : vector<2x32xf32>
    %220 = arith.subf %201, %219 : vector<2x32xf32>
    %221 = arith.mulf %212, %220 : vector<2x32xf32>
    %222 = arith.addf %219, %221 : vector<2x32xf32>
    %c12_105 = arith.constant 12 : index
    %c0_106 = arith.constant 0 : index
    %223 = vector.load %arg12[%c12_105, %c0_106] : memref<16x32xf32, #tpu.memory_space<vmem>>, vector<2x32xf32>
    tpu.vector_store %arg12[%c12_105, %c0_106], %222 {strides = array<i32>} : memref<16x32xf32, #tpu.memory_space<vmem>>, vector<2x32xf32>,
    %224 = vector.extract_strided_slice %75 {offsets = [14, 0], sizes = [2, 96], strides = [1, 1]} : vector<16x96xf32> to vector<2x96xf32>
    %cst_107 = arith.constant dense<0.000000e+00> : vector<2x96xf32>
    %225 = tpu.matmul %222, %67, %cst_107 {dimension_numbers = #tpu.dot_dimension_numbers<[1], [0], [0], [1], [0, 0, 1, 1], [], []>} : vector<2x32xf32>, vector<32x96xf32>, vector<2x96xf32> -> vector<2x96xf32>
    %226 = arith.addf %224, %225 : vector<2x96xf32>
    %227 = arith.negf %226 : vector<2x96xf32>
    %228 = math.exp %227 : vector<2x96xf32>
    %cst_108 = arith.constant 1.000000e+00 : f32
    %229 = vector.broadcast %cst_108 : f32 to vector<2x96xf32>
    %230 = arith.addf %229, %228 : vector<2x96xf32>
    %231 = arith.divf %229, %230 : vector<2x96xf32>
    %232 = vector.extract_strided_slice %231 {offsets = [0, 32], sizes = [2, 32], strides = [1, 1]} : vector<2x96xf32> to vector<2x32xf32>
    %233 = vector.extract_strided_slice %231 {offsets = [0, 64], sizes = [2, 32], strides = [1, 1]} : vector<2x96xf32> to vector<2x32xf32>
    %234 = vector.extract_strided_slice %224 {offsets = [0, 0], sizes = [2, 32], strides = [1, 1]} : vector<2x96xf32> to vector<2x32xf32>
    %235 = vector.extract_strided_slice %225 {offsets = [0, 0], sizes = [2, 32], strides = [1, 1]} : vector<2x96xf32> to vector<2x32xf32>
    %236 = vector.broadcast %71 : vector<1x32xf32> to vector<2x32xf32>
    %237 = arith.addf %235, %236 : vector<2x32xf32>
    %238 = arith.mulf %232, %237 : vector<2x32xf32>
    %239 = arith.addf %234, %238 : vector<2x32xf32>
    %240 = math.tanh %239 : vector<2x32xf32>
    %241 = arith.subf %222, %240 : vector<2x32xf32>
    %242 = arith.mulf %233, %241 : vector<2x32xf32>
    %243 = arith.addf %240, %242 : vector<2x32xf32>
    %c14_109 = arith.constant 14 : index
    %c0_110 = arith.constant 0 : index
    %244 = vector.load %arg12[%c14_109, %c0_110] : memref<16x32xf32, #tpu.memory_space<vmem>>, vector<2x32xf32>
    tpu.vector_store %arg12[%c14_109, %c0_110], %243 {strides = array<i32>} : memref<16x32xf32, #tpu.memory_space<vmem>>, vector<2x32xf32>,
    %c1_111 = arith.constant 1 : index
    %c0_112 = arith.constant 0 : index
    %c0_113 = arith.constant 0 : index
    %245 = vector.load %arg3[%c1_111, %c0_112, %c0_113] : memref<3x32x96xf32, #tpu.memory_space<vmem>>, vector<1x32x96xf32>
    %246 = vector.shape_cast %245 : vector<1x32x96xf32> to vector<32x96xf32>
    %c1_114 = arith.constant 1 : index
    %c0_115 = arith.constant 0 : index
    %c0_116 = arith.constant 0 : index
    %247 = vector.load %arg4[%c1_114, %c0_115, %c0_116] : memref<3x32x96xf32, #tpu.memory_space<vmem>>, vector<1x32x96xf32>
    %248 = vector.shape_cast %247 : vector<1x32x96xf32> to vector<32x96xf32>
    %c1_117 = arith.constant 1 : index
    %c0_118 = arith.constant 0 : index
    %c0_119 = arith.constant 0 : index
    %249 = vector.load %arg5[%c1_117, %c0_118, %c0_119] : memref<3x1x96xf32, #tpu.memory_space<vmem>>, vector<1x1x96xf32>
    %250 = vector.shape_cast %249 : vector<1x1x96xf32> to vector<1x96xf32>
    %c1_120 = arith.constant 1 : index
    %c0_121 = arith.constant 0 : index
    %c0_122 = arith.constant 0 : index
    %251 = vector.load %arg6[%c1_120, %c0_121, %c0_122] : memref<3x1x32xf32, #tpu.memory_space<vmem>>, vector<1x1x32xf32>
    %252 = vector.shape_cast %251 : vector<1x1x32xf32> to vector<1x32xf32>
    %c0_123 = arith.constant 0 : index
    %c0_124 = arith.constant 0 : index
    %253 = vector.load %arg12[%c0_123, %c0_124] : memref<16x32xf32, #tpu.memory_space<vmem>>, vector<16x32xf32>
    %cst_125 = arith.constant dense<0.000000e+00> : vector<16x96xf32>
    %254 = tpu.matmul %253, %246, %cst_125 {dimension_numbers = #tpu.dot_dimension_numbers<[1], [0], [0], [1], [0, 0, 1, 1], [], []>} : vector<16x32xf32>, vector<32x96xf32>, vector<16x96xf32> -> vector<16x96xf32>
    %255 = vector.broadcast %250 : vector<1x96xf32> to vector<16x96xf32>
    %256 = arith.addf %254, %255 : vector<16x96xf32>
    %cst_126 = arith.constant 0.000000e+00 : f32
    %257 = vector.broadcast %cst_126 : f32 to vector<2x32xf32>
    %258 = vector.extract_strided_slice %256 {offsets = [0, 0], sizes = [2, 96], strides = [1, 1]} : vector<16x96xf32> to vector<2x96xf32>
    %cst_127 = arith.constant dense<0.000000e+00> : vector<2x96xf32>
    %259 = tpu.matmul %257, %248, %cst_127 {dimension_numbers = #tpu.dot_dimension_numbers<[1], [0], [0], [1], [0, 0, 1, 1], [], []>} : vector<2x32xf32>, vector<32x96xf32>, vector<2x96xf32> -> vector<2x96xf32>
    %260 = arith.addf %258, %259 : vector<2x96xf32>
    %261 = arith.negf %260 : vector<2x96xf32>
    %262 = math.exp %261 : vector<2x96xf32>
    %cst_128 = arith.constant 1.000000e+00 : f32
    %263 = vector.broadcast %cst_128 : f32 to vector<2x96xf32>
    %264 = arith.addf %263, %262 : vector<2x96xf32>
    %265 = arith.divf %263, %264 : vector<2x96xf32>
    %266 = vector.extract_strided_slice %265 {offsets = [0, 32], sizes = [2, 32], strides = [1, 1]} : vector<2x96xf32> to vector<2x32xf32>
    %267 = vector.extract_strided_slice %265 {offsets = [0, 64], sizes = [2, 32], strides = [1, 1]} : vector<2x96xf32> to vector<2x32xf32>
    %268 = vector.extract_strided_slice %258 {offsets = [0, 0], sizes = [2, 32], strides = [1, 1]} : vector<2x96xf32> to vector<2x32xf32>
    %269 = vector.extract_strided_slice %259 {offsets = [0, 0], sizes = [2, 32], strides = [1, 1]} : vector<2x96xf32> to vector<2x32xf32>
    %270 = vector.broadcast %252 : vector<1x32xf32> to vector<2x32xf32>
    %271 = arith.addf %269, %270 : vector<2x32xf32>
    %272 = arith.mulf %266, %271 : vector<2x32xf32>
    %273 = arith.addf %268, %272 : vector<2x32xf32>
    %274 = math.tanh %273 : vector<2x32xf32>
    %275 = arith.subf %257, %274 : vector<2x32xf32>
    %276 = arith.mulf %267, %275 : vector<2x32xf32>
    %277 = arith.addf %274, %276 : vector<2x32xf32>
    %c0_129 = arith.constant 0 : index
    %c0_130 = arith.constant 0 : index
    %278 = vector.load %arg12[%c0_129, %c0_130] : memref<16x32xf32, #tpu.memory_space<vmem>>, vector<2x32xf32>
    tpu.vector_store %arg12[%c0_129, %c0_130], %277 {strides = array<i32>} : memref<16x32xf32, #tpu.memory_space<vmem>>, vector<2x32xf32>,
    %279 = vector.extract_strided_slice %256 {offsets = [2, 0], sizes = [2, 96], strides = [1, 1]} : vector<16x96xf32> to vector<2x96xf32>
    %cst_131 = arith.constant dense<0.000000e+00> : vector<2x96xf32>
    %280 = tpu.matmul %277, %248, %cst_131 {dimension_numbers = #tpu.dot_dimension_numbers<[1], [0], [0], [1], [0, 0, 1, 1], [], []>} : vector<2x32xf32>, vector<32x96xf32>, vector<2x96xf32> -> vector<2x96xf32>
    %281 = arith.addf %279, %280 : vector<2x96xf32>
    %282 = arith.negf %281 : vector<2x96xf32>
    %283 = math.exp %282 : vector<2x96xf32>
    %cst_132 = arith.constant 1.000000e+00 : f32
    %284 = vector.broadcast %cst_132 : f32 to vector<2x96xf32>
    %285 = arith.addf %284, %283 : vector<2x96xf32>
    %286 = arith.divf %284, %285 : vector<2x96xf32>
    %287 = vector.extract_strided_slice %286 {offsets = [0, 32], sizes = [2, 32], strides = [1, 1]} : vector<2x96xf32> to vector<2x32xf32>
    %288 = vector.extract_strided_slice %286 {offsets = [0, 64], sizes = [2, 32], strides = [1, 1]} : vector<2x96xf32> to vector<2x32xf32>
    %289 = vector.extract_strided_slice %279 {offsets = [0, 0], sizes = [2, 32], strides = [1, 1]} : vector<2x96xf32> to vector<2x32xf32>
    %290 = vector.extract_strided_slice %280 {offsets = [0, 0], sizes = [2, 32], strides = [1, 1]} : vector<2x96xf32> to vector<2x32xf32>
    %291 = vector.broadcast %252 : vector<1x32xf32> to vector<2x32xf32>
    %292 = arith.addf %290, %291 : vector<2x32xf32>
    %293 = arith.mulf %287, %292 : vector<2x32xf32>
    %294 = arith.addf %289, %293 : vector<2x32xf32>
    %295 = math.tanh %294 : vector<2x32xf32>
    %296 = arith.subf %277, %295 : vector<2x32xf32>
    %297 = arith.mulf %288, %296 : vector<2x32xf32>
    %298 = arith.addf %295, %297 : vector<2x32xf32>
    %c2_133 = arith.constant 2 : index
    %c0_134 = arith.constant 0 : index
    %299 = vector.load %arg12[%c2_133, %c0_134] : memref<16x32xf32, #tpu.memory_space<vmem>>, vector<2x32xf32>
    tpu.vector_store %arg12[%c2_133, %c0_134], %298 {strides = array<i32>} : memref<16x32xf32, #tpu.memory_space<vmem>>, vector<2x32xf32>,
    %300 = vector.extract_strided_slice %256 {offsets = [4, 0], sizes = [2, 96], strides = [1, 1]} : vector<16x96xf32> to vector<2x96xf32>
    %cst_135 = arith.constant dense<0.000000e+00> : vector<2x96xf32>
    %301 = tpu.matmul %298, %248, %cst_135 {dimension_numbers = #tpu.dot_dimension_numbers<[1], [0], [0], [1], [0, 0, 1, 1], [], []>} : vector<2x32xf32>, vector<32x96xf32>, vector<2x96xf32> -> vector<2x96xf32>
    %302 = arith.addf %300, %301 : vector<2x96xf32>
    %303 = arith.negf %302 : vector<2x96xf32>
    %304 = math.exp %303 : vector<2x96xf32>
    %cst_136 = arith.constant 1.000000e+00 : f32
    %305 = vector.broadcast %cst_136 : f32 to vector<2x96xf32>
    %306 = arith.addf %305, %304 : vector<2x96xf32>
    %307 = arith.divf %305, %306 : vector<2x96xf32>
    %308 = vector.extract_strided_slice %307 {offsets = [0, 32], sizes = [2, 32], strides = [1, 1]} : vector<2x96xf32> to vector<2x32xf32>
    %309 = vector.extract_strided_slice %307 {offsets = [0, 64], sizes = [2, 32], strides = [1, 1]} : vector<2x96xf32> to vector<2x32xf32>
    %310 = vector.extract_strided_slice %300 {offsets = [0, 0], sizes = [2, 32], strides = [1, 1]} : vector<2x96xf32> to vector<2x32xf32>
    %311 = vector.extract_strided_slice %301 {offsets = [0, 0], sizes = [2, 32], strides = [1, 1]} : vector<2x96xf32> to vector<2x32xf32>
    %312 = vector.broadcast %252 : vector<1x32xf32> to vector<2x32xf32>
    %313 = arith.addf %311, %312 : vector<2x32xf32>
    %314 = arith.mulf %308, %313 : vector<2x32xf32>
    %315 = arith.addf %310, %314 : vector<2x32xf32>
    %316 = math.tanh %315 : vector<2x32xf32>
    %317 = arith.subf %298, %316 : vector<2x32xf32>
    %318 = arith.mulf %309, %317 : vector<2x32xf32>
    %319 = arith.addf %316, %318 : vector<2x32xf32>
    %c4_137 = arith.constant 4 : index
    %c0_138 = arith.constant 0 : index
    %320 = vector.load %arg12[%c4_137, %c0_138] : memref<16x32xf32, #tpu.memory_space<vmem>>, vector<2x32xf32>
    tpu.vector_store %arg12[%c4_137, %c0_138], %319 {strides = array<i32>} : memref<16x32xf32, #tpu.memory_space<vmem>>, vector<2x32xf32>,
    %321 = vector.extract_strided_slice %256 {offsets = [6, 0], sizes = [2, 96], strides = [1, 1]} : vector<16x96xf32> to vector<2x96xf32>
    %cst_139 = arith.constant dense<0.000000e+00> : vector<2x96xf32>
    %322 = tpu.matmul %319, %248, %cst_139 {dimension_numbers = #tpu.dot_dimension_numbers<[1], [0], [0], [1], [0, 0, 1, 1], [], []>} : vector<2x32xf32>, vector<32x96xf32>, vector<2x96xf32> -> vector<2x96xf32>
    %323 = arith.addf %321, %322 : vector<2x96xf32>
    %324 = arith.negf %323 : vector<2x96xf32>
    %325 = math.exp %324 : vector<2x96xf32>
    %cst_140 = arith.constant 1.000000e+00 : f32
    %326 = vector.broadcast %cst_140 : f32 to vector<2x96xf32>
    %327 = arith.addf %326, %325 : vector<2x96xf32>
    %328 = arith.divf %326, %327 : vector<2x96xf32>
    %329 = vector.extract_strided_slice %328 {offsets = [0, 32], sizes = [2, 32], strides = [1, 1]} : vector<2x96xf32> to vector<2x32xf32>
    %330 = vector.extract_strided_slice %328 {offsets = [0, 64], sizes = [2, 32], strides = [1, 1]} : vector<2x96xf32> to vector<2x32xf32>
    %331 = vector.extract_strided_slice %321 {offsets = [0, 0], sizes = [2, 32], strides = [1, 1]} : vector<2x96xf32> to vector<2x32xf32>
    %332 = vector.extract_strided_slice %322 {offsets = [0, 0], sizes = [2, 32], strides = [1, 1]} : vector<2x96xf32> to vector<2x32xf32>
    %333 = vector.broadcast %252 : vector<1x32xf32> to vector<2x32xf32>
    %334 = arith.addf %332, %333 : vector<2x32xf32>
    %335 = arith.mulf %329, %334 : vector<2x32xf32>
    %336 = arith.addf %331, %335 : vector<2x32xf32>
    %337 = math.tanh %336 : vector<2x32xf32>
    %338 = arith.subf %319, %337 : vector<2x32xf32>
    %339 = arith.mulf %330, %338 : vector<2x32xf32>
    %340 = arith.addf %337, %339 : vector<2x32xf32>
    %c6_141 = arith.constant 6 : index
    %c0_142 = arith.constant 0 : index
    %341 = vector.load %arg12[%c6_141, %c0_142] : memref<16x32xf32, #tpu.memory_space<vmem>>, vector<2x32xf32>
    tpu.vector_store %arg12[%c6_141, %c0_142], %340 {strides = array<i32>} : memref<16x32xf32, #tpu.memory_space<vmem>>, vector<2x32xf32>,
    %342 = vector.extract_strided_slice %256 {offsets = [8, 0], sizes = [2, 96], strides = [1, 1]} : vector<16x96xf32> to vector<2x96xf32>
    %cst_143 = arith.constant dense<0.000000e+00> : vector<2x96xf32>
    %343 = tpu.matmul %340, %248, %cst_143 {dimension_numbers = #tpu.dot_dimension_numbers<[1], [0], [0], [1], [0, 0, 1, 1], [], []>} : vector<2x32xf32>, vector<32x96xf32>, vector<2x96xf32> -> vector<2x96xf32>
    %344 = arith.addf %342, %343 : vector<2x96xf32>
    %345 = arith.negf %344 : vector<2x96xf32>
    %346 = math.exp %345 : vector<2x96xf32>
    %cst_144 = arith.constant 1.000000e+00 : f32
    %347 = vector.broadcast %cst_144 : f32 to vector<2x96xf32>
    %348 = arith.addf %347, %346 : vector<2x96xf32>
    %349 = arith.divf %347, %348 : vector<2x96xf32>
    %350 = vector.extract_strided_slice %349 {offsets = [0, 32], sizes = [2, 32], strides = [1, 1]} : vector<2x96xf32> to vector<2x32xf32>
    %351 = vector.extract_strided_slice %349 {offsets = [0, 64], sizes = [2, 32], strides = [1, 1]} : vector<2x96xf32> to vector<2x32xf32>
    %352 = vector.extract_strided_slice %342 {offsets = [0, 0], sizes = [2, 32], strides = [1, 1]} : vector<2x96xf32> to vector<2x32xf32>
    %353 = vector.extract_strided_slice %343 {offsets = [0, 0], sizes = [2, 32], strides = [1, 1]} : vector<2x96xf32> to vector<2x32xf32>
    %354 = vector.broadcast %252 : vector<1x32xf32> to vector<2x32xf32>
    %355 = arith.addf %353, %354 : vector<2x32xf32>
    %356 = arith.mulf %350, %355 : vector<2x32xf32>
    %357 = arith.addf %352, %356 : vector<2x32xf32>
    %358 = math.tanh %357 : vector<2x32xf32>
    %359 = arith.subf %340, %358 : vector<2x32xf32>
    %360 = arith.mulf %351, %359 : vector<2x32xf32>
    %361 = arith.addf %358, %360 : vector<2x32xf32>
    %c8_145 = arith.constant 8 : index
    %c0_146 = arith.constant 0 : index
    %362 = vector.load %arg12[%c8_145, %c0_146] : memref<16x32xf32, #tpu.memory_space<vmem>>, vector<2x32xf32>
    tpu.vector_store %arg12[%c8_145, %c0_146], %361 {strides = array<i32>} : memref<16x32xf32, #tpu.memory_space<vmem>>, vector<2x32xf32>,
    %363 = vector.extract_strided_slice %256 {offsets = [10, 0], sizes = [2, 96], strides = [1, 1]} : vector<16x96xf32> to vector<2x96xf32>
    %cst_147 = arith.constant dense<0.000000e+00> : vector<2x96xf32>
    %364 = tpu.matmul %361, %248, %cst_147 {dimension_numbers = #tpu.dot_dimension_numbers<[1], [0], [0], [1], [0, 0, 1, 1], [], []>} : vector<2x32xf32>, vector<32x96xf32>, vector<2x96xf32> -> vector<2x96xf32>
    %365 = arith.addf %363, %364 : vector<2x96xf32>
    %366 = arith.negf %365 : vector<2x96xf32>
    %367 = math.exp %366 : vector<2x96xf32>
    %cst_148 = arith.constant 1.000000e+00 : f32
    %368 = vector.broadcast %cst_148 : f32 to vector<2x96xf32>
    %369 = arith.addf %368, %367 : vector<2x96xf32>
    %370 = arith.divf %368, %369 : vector<2x96xf32>
    %371 = vector.extract_strided_slice %370 {offsets = [0, 32], sizes = [2, 32], strides = [1, 1]} : vector<2x96xf32> to vector<2x32xf32>
    %372 = vector.extract_strided_slice %370 {offsets = [0, 64], sizes = [2, 32], strides = [1, 1]} : vector<2x96xf32> to vector<2x32xf32>
    %373 = vector.extract_strided_slice %363 {offsets = [0, 0], sizes = [2, 32], strides = [1, 1]} : vector<2x96xf32> to vector<2x32xf32>
    %374 = vector.extract_strided_slice %364 {offsets = [0, 0], sizes = [2, 32], strides = [1, 1]} : vector<2x96xf32> to vector<2x32xf32>
    %375 = vector.broadcast %252 : vector<1x32xf32> to vector<2x32xf32>
    %376 = arith.addf %374, %375 : vector<2x32xf32>
    %377 = arith.mulf %371, %376 : vector<2x32xf32>
    %378 = arith.addf %373, %377 : vector<2x32xf32>
    %379 = math.tanh %378 : vector<2x32xf32>
    %380 = arith.subf %361, %379 : vector<2x32xf32>
    %381 = arith.mulf %372, %380 : vector<2x32xf32>
    %382 = arith.addf %379, %381 : vector<2x32xf32>
    %c10_149 = arith.constant 10 : index
    %c0_150 = arith.constant 0 : index
    %383 = vector.load %arg12[%c10_149, %c0_150] : memref<16x32xf32, #tpu.memory_space<vmem>>, vector<2x32xf32>
    tpu.vector_store %arg12[%c10_149, %c0_150], %382 {strides = array<i32>} : memref<16x32xf32, #tpu.memory_space<vmem>>, vector<2x32xf32>,
    %384 = vector.extract_strided_slice %256 {offsets = [12, 0], sizes = [2, 96], strides = [1, 1]} : vector<16x96xf32> to vector<2x96xf32>
    %cst_151 = arith.constant dense<0.000000e+00> : vector<2x96xf32>
    %385 = tpu.matmul %382, %248, %cst_151 {dimension_numbers = #tpu.dot_dimension_numbers<[1], [0], [0], [1], [0, 0, 1, 1], [], []>} : vector<2x32xf32>, vector<32x96xf32>, vector<2x96xf32> -> vector<2x96xf32>
    %386 = arith.addf %384, %385 : vector<2x96xf32>
    %387 = arith.negf %386 : vector<2x96xf32>
    %388 = math.exp %387 : vector<2x96xf32>
    %cst_152 = arith.constant 1.000000e+00 : f32
    %389 = vector.broadcast %cst_152 : f32 to vector<2x96xf32>
    %390 = arith.addf %389, %388 : vector<2x96xf32>
    %391 = arith.divf %389, %390 : vector<2x96xf32>
    %392 = vector.extract_strided_slice %391 {offsets = [0, 32], sizes = [2, 32], strides = [1, 1]} : vector<2x96xf32> to vector<2x32xf32>
    %393 = vector.extract_strided_slice %391 {offsets = [0, 64], sizes = [2, 32], strides = [1, 1]} : vector<2x96xf32> to vector<2x32xf32>
    %394 = vector.extract_strided_slice %384 {offsets = [0, 0], sizes = [2, 32], strides = [1, 1]} : vector<2x96xf32> to vector<2x32xf32>
    %395 = vector.extract_strided_slice %385 {offsets = [0, 0], sizes = [2, 32], strides = [1, 1]} : vector<2x96xf32> to vector<2x32xf32>
    %396 = vector.broadcast %252 : vector<1x32xf32> to vector<2x32xf32>
    %397 = arith.addf %395, %396 : vector<2x32xf32>
    %398 = arith.mulf %392, %397 : vector<2x32xf32>
    %399 = arith.addf %394, %398 : vector<2x32xf32>
    %400 = math.tanh %399 : vector<2x32xf32>
    %401 = arith.subf %382, %400 : vector<2x32xf32>
    %402 = arith.mulf %393, %401 : vector<2x32xf32>
    %403 = arith.addf %400, %402 : vector<2x32xf32>
    %c12_153 = arith.constant 12 : index
    %c0_154 = arith.constant 0 : index
    %404 = vector.load %arg12[%c12_153, %c0_154] : memref<16x32xf32, #tpu.memory_space<vmem>>, vector<2x32xf32>
    tpu.vector_store %arg12[%c12_153, %c0_154], %403 {strides = array<i32>} : memref<16x32xf32, #tpu.memory_space<vmem>>, vector<2x32xf32>,
    %405 = vector.extract_strided_slice %256 {offsets = [14, 0], sizes = [2, 96], strides = [1, 1]} : vector<16x96xf32> to vector<2x96xf32>
    %cst_155 = arith.constant dense<0.000000e+00> : vector<2x96xf32>
    %406 = tpu.matmul %403, %248, %cst_155 {dimension_numbers = #tpu.dot_dimension_numbers<[1], [0], [0], [1], [0, 0, 1, 1], [], []>} : vector<2x32xf32>, vector<32x96xf32>, vector<2x96xf32> -> vector<2x96xf32>
    %407 = arith.addf %405, %406 : vector<2x96xf32>
    %408 = arith.negf %407 : vector<2x96xf32>
    %409 = math.exp %408 : vector<2x96xf32>
    %cst_156 = arith.constant 1.000000e+00 : f32
    %410 = vector.broadcast %cst_156 : f32 to vector<2x96xf32>
    %411 = arith.addf %410, %409 : vector<2x96xf32>
    %412 = arith.divf %410, %411 : vector<2x96xf32>
    %413 = vector.extract_strided_slice %412 {offsets = [0, 32], sizes = [2, 32], strides = [1, 1]} : vector<2x96xf32> to vector<2x32xf32>
    %414 = vector.extract_strided_slice %412 {offsets = [0, 64], sizes = [2, 32], strides = [1, 1]} : vector<2x96xf32> to vector<2x32xf32>
    %415 = vector.extract_strided_slice %405 {offsets = [0, 0], sizes = [2, 32], strides = [1, 1]} : vector<2x96xf32> to vector<2x32xf32>
    %416 = vector.extract_strided_slice %406 {offsets = [0, 0], sizes = [2, 32], strides = [1, 1]} : vector<2x96xf32> to vector<2x32xf32>
    %417 = vector.broadcast %252 : vector<1x32xf32> to vector<2x32xf32>
    %418 = arith.addf %416, %417 : vector<2x32xf32>
    %419 = arith.mulf %413, %418 : vector<2x32xf32>
    %420 = arith.addf %415, %419 : vector<2x32xf32>
    %421 = math.tanh %420 : vector<2x32xf32>
    %422 = arith.subf %403, %421 : vector<2x32xf32>
    %423 = arith.mulf %414, %422 : vector<2x32xf32>
    %424 = arith.addf %421, %423 : vector<2x32xf32>
    %c14_157 = arith.constant 14 : index
    %c0_158 = arith.constant 0 : index
    %425 = vector.load %arg12[%c14_157, %c0_158] : memref<16x32xf32, #tpu.memory_space<vmem>>, vector<2x32xf32>
    tpu.vector_store %arg12[%c14_157, %c0_158], %424 {strides = array<i32>} : memref<16x32xf32, #tpu.memory_space<vmem>>, vector<2x32xf32>,
    %c2_159 = arith.constant 2 : index
    %c0_160 = arith.constant 0 : index
    %c0_161 = arith.constant 0 : index
    %426 = vector.load %arg3[%c2_159, %c0_160, %c0_161] : memref<3x32x96xf32, #tpu.memory_space<vmem>>, vector<1x32x96xf32>
    %427 = vector.shape_cast %426 : vector<1x32x96xf32> to vector<32x96xf32>
    %c2_162 = arith.constant 2 : index
    %c0_163 = arith.constant 0 : index
    %c0_164 = arith.constant 0 : index
    %428 = vector.load %arg4[%c2_162, %c0_163, %c0_164] : memref<3x32x96xf32, #tpu.memory_space<vmem>>, vector<1x32x96xf32>
    %429 = vector.shape_cast %428 : vector<1x32x96xf32> to vector<32x96xf32>
    %c2_165 = arith.constant 2 : index
    %c0_166 = arith.constant 0 : index
    %c0_167 = arith.constant 0 : index
    %430 = vector.load %arg5[%c2_165, %c0_166, %c0_167] : memref<3x1x96xf32, #tpu.memory_space<vmem>>, vector<1x1x96xf32>
    %431 = vector.shape_cast %430 : vector<1x1x96xf32> to vector<1x96xf32>
    %c2_168 = arith.constant 2 : index
    %c0_169 = arith.constant 0 : index
    %c0_170 = arith.constant 0 : index
    %432 = vector.load %arg6[%c2_168, %c0_169, %c0_170] : memref<3x1x32xf32, #tpu.memory_space<vmem>>, vector<1x1x32xf32>
    %433 = vector.shape_cast %432 : vector<1x1x32xf32> to vector<1x32xf32>
    %c0_171 = arith.constant 0 : index
    %c0_172 = arith.constant 0 : index
    %434 = vector.load %arg12[%c0_171, %c0_172] : memref<16x32xf32, #tpu.memory_space<vmem>>, vector<16x32xf32>
    %cst_173 = arith.constant dense<0.000000e+00> : vector<16x96xf32>
    %435 = tpu.matmul %434, %427, %cst_173 {dimension_numbers = #tpu.dot_dimension_numbers<[1], [0], [0], [1], [0, 0, 1, 1], [], []>} : vector<16x32xf32>, vector<32x96xf32>, vector<16x96xf32> -> vector<16x96xf32>
    %436 = vector.broadcast %431 : vector<1x96xf32> to vector<16x96xf32>
    %437 = arith.addf %435, %436 : vector<16x96xf32>
    %cst_174 = arith.constant 0.000000e+00 : f32
    %438 = vector.broadcast %cst_174 : f32 to vector<2x32xf32>
    %439 = vector.extract_strided_slice %437 {offsets = [0, 0], sizes = [2, 96], strides = [1, 1]} : vector<16x96xf32> to vector<2x96xf32>
    %cst_175 = arith.constant dense<0.000000e+00> : vector<2x96xf32>
    %440 = tpu.matmul %438, %429, %cst_175 {dimension_numbers = #tpu.dot_dimension_numbers<[1], [0], [0], [1], [0, 0, 1, 1], [], []>} : vector<2x32xf32>, vector<32x96xf32>, vector<2x96xf32> -> vector<2x96xf32>
    %441 = arith.addf %439, %440 : vector<2x96xf32>
    %442 = arith.negf %441 : vector<2x96xf32>
    %443 = math.exp %442 : vector<2x96xf32>
    %cst_176 = arith.constant 1.000000e+00 : f32
    %444 = vector.broadcast %cst_176 : f32 to vector<2x96xf32>
    %445 = arith.addf %444, %443 : vector<2x96xf32>
    %446 = arith.divf %444, %445 : vector<2x96xf32>
    %447 = vector.extract_strided_slice %446 {offsets = [0, 32], sizes = [2, 32], strides = [1, 1]} : vector<2x96xf32> to vector<2x32xf32>
    %448 = vector.extract_strided_slice %446 {offsets = [0, 64], sizes = [2, 32], strides = [1, 1]} : vector<2x96xf32> to vector<2x32xf32>
    %449 = vector.extract_strided_slice %439 {offsets = [0, 0], sizes = [2, 32], strides = [1, 1]} : vector<2x96xf32> to vector<2x32xf32>
    %450 = vector.extract_strided_slice %440 {offsets = [0, 0], sizes = [2, 32], strides = [1, 1]} : vector<2x96xf32> to vector<2x32xf32>
    %451 = vector.broadcast %433 : vector<1x32xf32> to vector<2x32xf32>
    %452 = arith.addf %450, %451 : vector<2x32xf32>
    %453 = arith.mulf %447, %452 : vector<2x32xf32>
    %454 = arith.addf %449, %453 : vector<2x32xf32>
    %455 = math.tanh %454 : vector<2x32xf32>
    %456 = arith.subf %438, %455 : vector<2x32xf32>
    %457 = arith.mulf %448, %456 : vector<2x32xf32>
    %458 = arith.addf %455, %457 : vector<2x32xf32>
    %459 = vector.extract_strided_slice %437 {offsets = [2, 0], sizes = [2, 96], strides = [1, 1]} : vector<16x96xf32> to vector<2x96xf32>
    %cst_177 = arith.constant dense<0.000000e+00> : vector<2x96xf32>
    %460 = tpu.matmul %458, %429, %cst_177 {dimension_numbers = #tpu.dot_dimension_numbers<[1], [0], [0], [1], [0, 0, 1, 1], [], []>} : vector<2x32xf32>, vector<32x96xf32>, vector<2x96xf32> -> vector<2x96xf32>
    %461 = arith.addf %459, %460 : vector<2x96xf32>
    %462 = arith.negf %461 : vector<2x96xf32>
    %463 = math.exp %462 : vector<2x96xf32>
    %cst_178 = arith.constant 1.000000e+00 : f32
    %464 = vector.broadcast %cst_178 : f32 to vector<2x96xf32>
    %465 = arith.addf %464, %463 : vector<2x96xf32>
    %466 = arith.divf %464, %465 : vector<2x96xf32>
    %467 = vector.extract_strided_slice %466 {offsets = [0, 32], sizes = [2, 32], strides = [1, 1]} : vector<2x96xf32> to vector<2x32xf32>
    %468 = vector.extract_strided_slice %466 {offsets = [0, 64], sizes = [2, 32], strides = [1, 1]} : vector<2x96xf32> to vector<2x32xf32>
    %469 = vector.extract_strided_slice %459 {offsets = [0, 0], sizes = [2, 32], strides = [1, 1]} : vector<2x96xf32> to vector<2x32xf32>
    %470 = vector.extract_strided_slice %460 {offsets = [0, 0], sizes = [2, 32], strides = [1, 1]} : vector<2x96xf32> to vector<2x32xf32>
    %471 = vector.broadcast %433 : vector<1x32xf32> to vector<2x32xf32>
    %472 = arith.addf %470, %471 : vector<2x32xf32>
    %473 = arith.mulf %467, %472 : vector<2x32xf32>
    %474 = arith.addf %469, %473 : vector<2x32xf32>
    %475 = math.tanh %474 : vector<2x32xf32>
    %476 = arith.subf %458, %475 : vector<2x32xf32>
    %477 = arith.mulf %468, %476 : vector<2x32xf32>
    %478 = arith.addf %475, %477 : vector<2x32xf32>
    %479 = vector.extract_strided_slice %437 {offsets = [4, 0], sizes = [2, 96], strides = [1, 1]} : vector<16x96xf32> to vector<2x96xf32>
    %cst_179 = arith.constant dense<0.000000e+00> : vector<2x96xf32>
    %480 = tpu.matmul %478, %429, %cst_179 {dimension_numbers = #tpu.dot_dimension_numbers<[1], [0], [0], [1], [0, 0, 1, 1], [], []>} : vector<2x32xf32>, vector<32x96xf32>, vector<2x96xf32> -> vector<2x96xf32>
    %481 = arith.addf %479, %480 : vector<2x96xf32>
    %482 = arith.negf %481 : vector<2x96xf32>
    %483 = math.exp %482 : vector<2x96xf32>
    %cst_180 = arith.constant 1.000000e+00 : f32
    %484 = vector.broadcast %cst_180 : f32 to vector<2x96xf32>
    %485 = arith.addf %484, %483 : vector<2x96xf32>
    %486 = arith.divf %484, %485 : vector<2x96xf32>
    %487 = vector.extract_strided_slice %486 {offsets = [0, 32], sizes = [2, 32], strides = [1, 1]} : vector<2x96xf32> to vector<2x32xf32>
    %488 = vector.extract_strided_slice %486 {offsets = [0, 64], sizes = [2, 32], strides = [1, 1]} : vector<2x96xf32> to vector<2x32xf32>
    %489 = vector.extract_strided_slice %479 {offsets = [0, 0], sizes = [2, 32], strides = [1, 1]} : vector<2x96xf32> to vector<2x32xf32>
    %490 = vector.extract_strided_slice %480 {offsets = [0, 0], sizes = [2, 32], strides = [1, 1]} : vector<2x96xf32> to vector<2x32xf32>
    %491 = vector.broadcast %433 : vector<1x32xf32> to vector<2x32xf32>
    %492 = arith.addf %490, %491 : vector<2x32xf32>
    %493 = arith.mulf %487, %492 : vector<2x32xf32>
    %494 = arith.addf %489, %493 : vector<2x32xf32>
    %495 = math.tanh %494 : vector<2x32xf32>
    %496 = arith.subf %478, %495 : vector<2x32xf32>
    %497 = arith.mulf %488, %496 : vector<2x32xf32>
    %498 = arith.addf %495, %497 : vector<2x32xf32>
    %499 = vector.extract_strided_slice %437 {offsets = [6, 0], sizes = [2, 96], strides = [1, 1]} : vector<16x96xf32> to vector<2x96xf32>
    %cst_181 = arith.constant dense<0.000000e+00> : vector<2x96xf32>
    %500 = tpu.matmul %498, %429, %cst_181 {dimension_numbers = #tpu.dot_dimension_numbers<[1], [0], [0], [1], [0, 0, 1, 1], [], []>} : vector<2x32xf32>, vector<32x96xf32>, vector<2x96xf32> -> vector<2x96xf32>
    %501 = arith.addf %499, %500 : vector<2x96xf32>
    %502 = arith.negf %501 : vector<2x96xf32>
    %503 = math.exp %502 : vector<2x96xf32>
    %cst_182 = arith.constant 1.000000e+00 : f32
    %504 = vector.broadcast %cst_182 : f32 to vector<2x96xf32>
    %505 = arith.addf %504, %503 : vector<2x96xf32>
    %506 = arith.divf %504, %505 : vector<2x96xf32>
    %507 = vector.extract_strided_slice %506 {offsets = [0, 32], sizes = [2, 32], strides = [1, 1]} : vector<2x96xf32> to vector<2x32xf32>
    %508 = vector.extract_strided_slice %506 {offsets = [0, 64], sizes = [2, 32], strides = [1, 1]} : vector<2x96xf32> to vector<2x32xf32>
    %509 = vector.extract_strided_slice %499 {offsets = [0, 0], sizes = [2, 32], strides = [1, 1]} : vector<2x96xf32> to vector<2x32xf32>
    %510 = vector.extract_strided_slice %500 {offsets = [0, 0], sizes = [2, 32], strides = [1, 1]} : vector<2x96xf32> to vector<2x32xf32>
    %511 = vector.broadcast %433 : vector<1x32xf32> to vector<2x32xf32>
    %512 = arith.addf %510, %511 : vector<2x32xf32>
    %513 = arith.mulf %507, %512 : vector<2x32xf32>
    %514 = arith.addf %509, %513 : vector<2x32xf32>
    %515 = math.tanh %514 : vector<2x32xf32>
    %516 = arith.subf %498, %515 : vector<2x32xf32>
    %517 = arith.mulf %508, %516 : vector<2x32xf32>
    %518 = arith.addf %515, %517 : vector<2x32xf32>
    %519 = vector.extract_strided_slice %437 {offsets = [8, 0], sizes = [2, 96], strides = [1, 1]} : vector<16x96xf32> to vector<2x96xf32>
    %cst_183 = arith.constant dense<0.000000e+00> : vector<2x96xf32>
    %520 = tpu.matmul %518, %429, %cst_183 {dimension_numbers = #tpu.dot_dimension_numbers<[1], [0], [0], [1], [0, 0, 1, 1], [], []>} : vector<2x32xf32>, vector<32x96xf32>, vector<2x96xf32> -> vector<2x96xf32>
    %521 = arith.addf %519, %520 : vector<2x96xf32>
    %522 = arith.negf %521 : vector<2x96xf32>
    %523 = math.exp %522 : vector<2x96xf32>
    %cst_184 = arith.constant 1.000000e+00 : f32
    %524 = vector.broadcast %cst_184 : f32 to vector<2x96xf32>
    %525 = arith.addf %524, %523 : vector<2x96xf32>
    %526 = arith.divf %524, %525 : vector<2x96xf32>
    %527 = vector.extract_strided_slice %526 {offsets = [0, 32], sizes = [2, 32], strides = [1, 1]} : vector<2x96xf32> to vector<2x32xf32>
    %528 = vector.extract_strided_slice %526 {offsets = [0, 64], sizes = [2, 32], strides = [1, 1]} : vector<2x96xf32> to vector<2x32xf32>
    %529 = vector.extract_strided_slice %519 {offsets = [0, 0], sizes = [2, 32], strides = [1, 1]} : vector<2x96xf32> to vector<2x32xf32>
    %530 = vector.extract_strided_slice %520 {offsets = [0, 0], sizes = [2, 32], strides = [1, 1]} : vector<2x96xf32> to vector<2x32xf32>
    %531 = vector.broadcast %433 : vector<1x32xf32> to vector<2x32xf32>
    %532 = arith.addf %530, %531 : vector<2x32xf32>
    %533 = arith.mulf %527, %532 : vector<2x32xf32>
    %534 = arith.addf %529, %533 : vector<2x32xf32>
    %535 = math.tanh %534 : vector<2x32xf32>
    %536 = arith.subf %518, %535 : vector<2x32xf32>
    %537 = arith.mulf %528, %536 : vector<2x32xf32>
    %538 = arith.addf %535, %537 : vector<2x32xf32>
    %539 = vector.extract_strided_slice %437 {offsets = [10, 0], sizes = [2, 96], strides = [1, 1]} : vector<16x96xf32> to vector<2x96xf32>
    %cst_185 = arith.constant dense<0.000000e+00> : vector<2x96xf32>
    %540 = tpu.matmul %538, %429, %cst_185 {dimension_numbers = #tpu.dot_dimension_numbers<[1], [0], [0], [1], [0, 0, 1, 1], [], []>} : vector<2x32xf32>, vector<32x96xf32>, vector<2x96xf32> -> vector<2x96xf32>
    %541 = arith.addf %539, %540 : vector<2x96xf32>
    %542 = arith.negf %541 : vector<2x96xf32>
    %543 = math.exp %542 : vector<2x96xf32>
    %cst_186 = arith.constant 1.000000e+00 : f32
    %544 = vector.broadcast %cst_186 : f32 to vector<2x96xf32>
    %545 = arith.addf %544, %543 : vector<2x96xf32>
    %546 = arith.divf %544, %545 : vector<2x96xf32>
    %547 = vector.extract_strided_slice %546 {offsets = [0, 32], sizes = [2, 32], strides = [1, 1]} : vector<2x96xf32> to vector<2x32xf32>
    %548 = vector.extract_strided_slice %546 {offsets = [0, 64], sizes = [2, 32], strides = [1, 1]} : vector<2x96xf32> to vector<2x32xf32>
    %549 = vector.extract_strided_slice %539 {offsets = [0, 0], sizes = [2, 32], strides = [1, 1]} : vector<2x96xf32> to vector<2x32xf32>
    %550 = vector.extract_strided_slice %540 {offsets = [0, 0], sizes = [2, 32], strides = [1, 1]} : vector<2x96xf32> to vector<2x32xf32>
    %551 = vector.broadcast %433 : vector<1x32xf32> to vector<2x32xf32>
    %552 = arith.addf %550, %551 : vector<2x32xf32>
    %553 = arith.mulf %547, %552 : vector<2x32xf32>
    %554 = arith.addf %549, %553 : vector<2x32xf32>
    %555 = math.tanh %554 : vector<2x32xf32>
    %556 = arith.subf %538, %555 : vector<2x32xf32>
    %557 = arith.mulf %548, %556 : vector<2x32xf32>
    %558 = arith.addf %555, %557 : vector<2x32xf32>
    %559 = vector.extract_strided_slice %437 {offsets = [12, 0], sizes = [2, 96], strides = [1, 1]} : vector<16x96xf32> to vector<2x96xf32>
    %cst_187 = arith.constant dense<0.000000e+00> : vector<2x96xf32>
    %560 = tpu.matmul %558, %429, %cst_187 {dimension_numbers = #tpu.dot_dimension_numbers<[1], [0], [0], [1], [0, 0, 1, 1], [], []>} : vector<2x32xf32>, vector<32x96xf32>, vector<2x96xf32> -> vector<2x96xf32>
    %561 = arith.addf %559, %560 : vector<2x96xf32>
    %562 = arith.negf %561 : vector<2x96xf32>
    %563 = math.exp %562 : vector<2x96xf32>
    %cst_188 = arith.constant 1.000000e+00 : f32
    %564 = vector.broadcast %cst_188 : f32 to vector<2x96xf32>
    %565 = arith.addf %564, %563 : vector<2x96xf32>
    %566 = arith.divf %564, %565 : vector<2x96xf32>
    %567 = vector.extract_strided_slice %566 {offsets = [0, 32], sizes = [2, 32], strides = [1, 1]} : vector<2x96xf32> to vector<2x32xf32>
    %568 = vector.extract_strided_slice %566 {offsets = [0, 64], sizes = [2, 32], strides = [1, 1]} : vector<2x96xf32> to vector<2x32xf32>
    %569 = vector.extract_strided_slice %559 {offsets = [0, 0], sizes = [2, 32], strides = [1, 1]} : vector<2x96xf32> to vector<2x32xf32>
    %570 = vector.extract_strided_slice %560 {offsets = [0, 0], sizes = [2, 32], strides = [1, 1]} : vector<2x96xf32> to vector<2x32xf32>
    %571 = vector.broadcast %433 : vector<1x32xf32> to vector<2x32xf32>
    %572 = arith.addf %570, %571 : vector<2x32xf32>
    %573 = arith.mulf %567, %572 : vector<2x32xf32>
    %574 = arith.addf %569, %573 : vector<2x32xf32>
    %575 = math.tanh %574 : vector<2x32xf32>
    %576 = arith.subf %558, %575 : vector<2x32xf32>
    %577 = arith.mulf %568, %576 : vector<2x32xf32>
    %578 = arith.addf %575, %577 : vector<2x32xf32>
    %579 = vector.extract_strided_slice %437 {offsets = [14, 0], sizes = [2, 96], strides = [1, 1]} : vector<16x96xf32> to vector<2x96xf32>
    %cst_189 = arith.constant dense<0.000000e+00> : vector<2x96xf32>
    %580 = tpu.matmul %578, %429, %cst_189 {dimension_numbers = #tpu.dot_dimension_numbers<[1], [0], [0], [1], [0, 0, 1, 1], [], []>} : vector<2x32xf32>, vector<32x96xf32>, vector<2x96xf32> -> vector<2x96xf32>
    %581 = arith.addf %579, %580 : vector<2x96xf32>
    %582 = arith.negf %581 : vector<2x96xf32>
    %583 = math.exp %582 : vector<2x96xf32>
    %cst_190 = arith.constant 1.000000e+00 : f32
    %584 = vector.broadcast %cst_190 : f32 to vector<2x96xf32>
    %585 = arith.addf %584, %583 : vector<2x96xf32>
    %586 = arith.divf %584, %585 : vector<2x96xf32>
    %587 = vector.extract_strided_slice %586 {offsets = [0, 32], sizes = [2, 32], strides = [1, 1]} : vector<2x96xf32> to vector<2x32xf32>
    %588 = vector.extract_strided_slice %586 {offsets = [0, 64], sizes = [2, 32], strides = [1, 1]} : vector<2x96xf32> to vector<2x32xf32>
    %589 = vector.extract_strided_slice %579 {offsets = [0, 0], sizes = [2, 32], strides = [1, 1]} : vector<2x96xf32> to vector<2x32xf32>
    %590 = vector.extract_strided_slice %580 {offsets = [0, 0], sizes = [2, 32], strides = [1, 1]} : vector<2x96xf32> to vector<2x32xf32>
    %591 = vector.broadcast %433 : vector<1x32xf32> to vector<2x32xf32>
    %592 = arith.addf %590, %591 : vector<2x32xf32>
    %593 = arith.mulf %587, %592 : vector<2x32xf32>
    %594 = arith.addf %589, %593 : vector<2x32xf32>
    %595 = math.tanh %594 : vector<2x32xf32>
    %596 = arith.subf %578, %595 : vector<2x32xf32>
    %597 = arith.mulf %588, %596 : vector<2x32xf32>
    %598 = arith.addf %595, %597 : vector<2x32xf32>
    %c0_191 = arith.constant 0 : index
    %c0_192 = arith.constant 0 : index
    %599 = vector.load %arg7[%c0_191, %c0_192] : memref<32x32xf32, #tpu.memory_space<vmem>>, vector<32x32xf32>
    %cst_193 = arith.constant dense<0.000000e+00> : vector<2x32xf32>
    %600 = tpu.matmul %598, %599, %cst_193 {dimension_numbers = #tpu.dot_dimension_numbers<[1], [0], [0], [1], [0, 0, 1, 1], [], []>} : vector<2x32xf32>, vector<32x32xf32>, vector<2x32xf32> -> vector<2x32xf32>
    %c0_194 = arith.constant 0 : index
    %c0_195 = arith.constant 0 : index
    %601 = vector.load %arg8[%c0_194, %c0_195] : memref<1x32xf32, #tpu.memory_space<vmem>>, vector<1x32xf32>
    %602 = vector.broadcast %601 : vector<1x32xf32> to vector<2x32xf32>
    %603 = arith.addf %600, %602 : vector<2x32xf32>
    %cst_196 = arith.constant 0.000000e+00 : f32
    %604 = vector.broadcast %cst_196 : f32 to vector<2x32xf32>
    %605 = arith.maximumf %603, %604 : vector<2x32xf32>
    %c0_197 = arith.constant 0 : index
    %c0_198 = arith.constant 0 : index
    %606 = vector.load %arg9[%c0_197, %c0_198] : memref<32x16xf32, #tpu.memory_space<vmem>>, vector<32x16xf32>
    %cst_199 = arith.constant dense<0.000000e+00> : vector<2x16xf32>
    %607 = tpu.matmul %605, %606, %cst_199 {dimension_numbers = #tpu.dot_dimension_numbers<[1], [0], [0], [1], [0, 0, 1, 1], [], []>} : vector<2x32xf32>, vector<32x16xf32>, vector<2x16xf32> -> vector<2x16xf32>
    %c0_200 = arith.constant 0 : index
    %c0_201 = arith.constant 0 : index
    %608 = vector.load %arg10[%c0_200, %c0_201] : memref<1x16xf32, #tpu.memory_space<vmem>>, vector<1x16xf32>
    %609 = vector.broadcast %608 : vector<1x16xf32> to vector<2x16xf32>
    %610 = arith.addf %607, %609 : vector<2x16xf32>
    %c0_202 = arith.constant 0 : index
    %c0_203 = arith.constant 0 : index
    %611 = vector.load %arg11[%c0_202, %c0_203] : memref<2x16xf32, #tpu.memory_space<vmem>>, vector<2x16xf32>
    tpu.vector_store %arg11[%c0_202, %c0_203], %610 {strides = array<i32>} : memref<2x16xf32, #tpu.memory_space<vmem>>, vector<2x16xf32>,
    return
  }
  func.func @transform_0(%arg0: i32, %arg1: memref<2x8xi32, #tpu.memory_space<smem>>) -> (i32, i32) {
    %c0_i32 = arith.constant 0 : i32
    %c0_i32_0 = arith.constant 0 : i32
    %c0_i32_1 = arith.constant 0 : i32
    return %c0_i32, %c0_i32_0 : i32, i32
  }
  func.func @transform_1(%arg0: i32, %arg1: memref<2x8xi32, #tpu.memory_space<smem>>) -> (i32, i32, i32) {
    %c0_i32 = arith.constant 0 : i32
    %c0_i32_0 = arith.constant 0 : i32
    %c0_i32_1 = arith.constant 0 : i32
    %c0_i32_2 = arith.constant 0 : i32
    return %c0_i32, %c0_i32_0, %c0_i32_1 : i32, i32, i32
  }
  func.func @transform_2(%arg0: i32, %arg1: memref<2x8xi32, #tpu.memory_space<smem>>) -> (i32, i32, i32) {
    %c0_i32 = arith.constant 0 : i32
    %c0_i32_0 = arith.constant 0 : i32
    %c0_i32_1 = arith.constant 0 : i32
    %c0_i32_2 = arith.constant 0 : i32
    return %c0_i32, %c0_i32_0, %c0_i32_1 : i32, i32, i32
  }
  func.func @transform_3(%arg0: i32, %arg1: memref<2x8xi32, #tpu.memory_space<smem>>) -> (i32, i32, i32) {
    %c0_i32 = arith.constant 0 : i32
    %c0_i32_0 = arith.constant 0 : i32
    %c0_i32_1 = arith.constant 0 : i32
    %c0_i32_2 = arith.constant 0 : i32
    return %c0_i32, %c0_i32_0, %c0_i32_1 : i32, i32, i32
  }
  func.func @transform_4(%arg0: i32, %arg1: memref<2x8xi32, #tpu.memory_space<smem>>) -> (i32, i32, i32) {
    %c0_i32 = arith.constant 0 : i32
    %c0_i32_0 = arith.constant 0 : i32
    %c0_i32_1 = arith.constant 0 : i32
    %c0_i32_2 = arith.constant 0 : i32
    return %c0_i32, %c0_i32_0, %c0_i32_1 : i32, i32, i32
  }
  func.func @transform_5(%arg0: i32, %arg1: memref<2x8xi32, #tpu.memory_space<smem>>) -> (i32, i32) {
    %c0_i32 = arith.constant 0 : i32
    %c0_i32_0 = arith.constant 0 : i32
    %c0_i32_1 = arith.constant 0 : i32
    return %c0_i32, %c0_i32_0 : i32, i32
  }
  func.func @transform_6(%arg0: i32, %arg1: memref<2x8xi32, #tpu.memory_space<smem>>) -> (i32, i32) {
    %c0_i32 = arith.constant 0 : i32
    %c0_i32_0 = arith.constant 0 : i32
    %c0_i32_1 = arith.constant 0 : i32
    return %c0_i32, %c0_i32_0 : i32, i32
  }
  func.func @transform_7(%arg0: i32, %arg1: memref<2x8xi32, #tpu.memory_space<smem>>) -> (i32, i32) {
    %c0_i32 = arith.constant 0 : i32
    %c0_i32_0 = arith.constant 0 : i32
    %c0_i32_1 = arith.constant 0 : i32
    return %c0_i32, %c0_i32_0 : i32, i32
  }
  func.func @transform_8(%arg0: i32, %arg1: memref<2x8xi32, #tpu.memory_space<smem>>) -> (i32, i32) {
    %c0_i32 = arith.constant 0 : i32
    %c0_i32_0 = arith.constant 0 : i32
    %c0_i32_1 = arith.constant 0 : i32
    return %c0_i32, %c0_i32_0 : i32, i32
  }
  func.func @transform_9(%arg0: i32, %arg1: memref<2x8xi32, #tpu.memory_space<smem>>) -> (i32, i32) {
    %c0_i32 = arith.constant 0 : i32
    %c0_i32_0 = arith.constant 0 : i32
    %c0_i32_1 = arith.constant 0 : i32
    return %c0_i32, %c0_i32_0 : i32, i32
  }
}

</mosaic_0001>

<llo_original>
// kernel: char_gru_forward.1
$region0: #{char_gru_forward.1}
  #allocation0 [shape = 'u32[]', space=smem, size = 0x4, offset = 0x4, fixed_abs, tag = 'smem constant byte address 0x4 - core index']
  #allocation1 [shape = 'u32[144,128]{1,0:T(1,128)}', space=vmem, size = 0x12000, scoped, tag = 'internal scratch']
  #allocation2 [shape = 'f32[16,32]{1,0:T(8,128)}', space=vmem, size = 0x2000, scoped, tag = 'scratch operand']
  #allocation3 [shape = 's32[1]{0}', space=sflag, size = 0x4, scoped, tag = 'scoped memory for char_gru_forward.1']
  #allocation4 [shape = 'u8[1024]{0}', space=smem, size = 0x400, scoped, tag = 'prefetched SMEM operand 0']
  %s0 = inlined_call_operand.vmem [shape: s32[2,8], index: 0, kind: input, shape index: {}]
  %s1 = inlined_call_operand.vmem [shape: f32[16,32], index: 1, kind: input, shape index: {}]
  %s2 = inlined_call_operand.hbm [shape: f32[3,32,96], index: 2, kind: input, shape index: {}]
  %s3 = inlined_call_operand.hbm [shape: f32[3,32,96], index: 3, kind: input, shape index: {}]
  %s4 = inlined_call_operand.vmem [shape: f32[3,1,96], index: 4, kind: input, shape index: {}]
  %s5 = inlined_call_operand.vmem [shape: f32[3,1,32], index: 5, kind: input, shape index: {}]
  %s6 = inlined_call_operand.vmem [shape: f32[32,32], index: 6, kind: input, shape index: {}]
  %s7 = inlined_call_operand.vmem [shape: f32[1,32], index: 7, kind: input, shape index: {}]
  %s8 = inlined_call_operand.vmem [shape: f32[32,16], index: 8, kind: input, shape index: {}]
  %s9 = inlined_call_operand.vmem [shape: f32[1,16], index: 9, kind: input, shape index: {}]
  %s10 = inlined_call_operand.hbm [shape: f32[2,16], index: 10, kind: output, shape index: {}]
  %s11 = sld [smem:[#allocation0]]
  $region54: #{char_gru_forward.1} parent=0
    _
  %s13 = ssub.s32 1, %s11
  %s14 = scalar_select 0, %s13, %s11
  %s15 = sshll.u32 %s0, 4
  %s16 = int_to_ptr.vmem [resolvable:$true] %s15
  %18 = dma.vmem_to_smem %s16, 32, [#allocation4], [#allocation3]
  %19 = dma.done [#allocation3], 32
  %20 = sfence
  $region1: #{char_gru_forward.1} parent=0
    #allocation5 [shape = 'u8[49152]{0}', space=vmem, size = 0xc000, scoped, tag = 'input window, operand 2, single buffered']
    #allocation6 [shape = 's32[1]{0}', space=sflag, size = 0x4, scoped, tag = 'scoped memory for char_gru_forward.1']
    #allocation7 [shape = 's32[1]{0}', space=sflag, size = 0x4, scoped, tag = 'scoped memory for char_gru_forward.1']
    #allocation8 [shape = 'u8[49152]{0}', space=vmem, size = 0xc000, scoped, tag = 'input window, operand 3, single buffered']
    #allocation9 [shape = 's32[1]{0}', space=sflag, size = 0x4, scoped, tag = 'scoped memory for char_gru_forward.1']
    #allocation10 [shape = 'u8[1024]{0}', space=vmem, size = 0x400, scoped, tag = 'output window, operand 0, single buffered']
    %21 = vsyncpa [#allocation6], 0
    %22 = vsyncpa [#allocation9], 0
    %23 = vsyncpa [#allocation7], 0
    // Predicated region
    $region2: #{char_gru_forward.1} parent=1 // pred_check
      _
    $region3: #{char_gru_forward.1} parent=1 // pred_check_branch
      %25 = sbr.rel (0) target = $region5
    $region4: #{char_gru_forward.1} parent=1 // pred_region
      _
    $region5: #{char_gru_forward.1} parent=1 // pred_fallthru
      _
    // Predicated region
    $region6: #{char_gru_forward.1} parent=1 // pred_check
      _
    $region7: #{char_gru_forward.1} parent=1 // pred_check_branch
      %27 = sbr.rel (0) target = $region9
    $region8: #{char_gru_forward.1} parent=1 // pred_region
      %s29 = ssub.s32 1536, 1536
      %30 = vsyncadd [#allocation6], %s29
      %s31 = sshll.u32 [#allocation5], 4
      %s32 = int_to_ptr.vmem [resolvable:$true] %s31
      %37 = dma.hbm_to_vmem [thread:$0]  %s2, 1536, %s32, [#allocation6], 128, 128, 8
    $region9: #{char_gru_forward.1} parent=1 // pred_fallthru
      _
    // Predicated region
    $region10: #{char_gru_forward.1} parent=1 // pred_check
      _
    $region11: #{char_gru_forward.1} parent=1 // pred_check_branch
      %39 = sbr.rel (0) target = $region13
    $region12: #{char_gru_forward.1} parent=1 // pred_region
      %s41 = ssub.s32 1536, 1536
      %42 = vsyncadd [#allocation9], %s41
      %s43 = sshll.u32 [#allocation8], 4
      %s44 = int_to_ptr.vmem [resolvable:$true] %s43
      %49 = dma.hbm_to_vmem [thread:$0]  %s3, 1536, %s44, [#allocation9], 128, 128, 8
    $region13: #{char_gru_forward.1} parent=1 // pred_fallthru
      _
    // Predicated region
    $region14: #{char_gru_forward.1} parent=1 // pred_check
      _
    $region15: #{char_gru_forward.1} parent=1 // pred_check_branch
      %51 = sbr.rel (0) target = $region17
    $region16: #{char_gru_forward.1} parent=1 // pred_region
      _
    $region17: #{char_gru_forward.1} parent=1 // pred_fallthru
      _
    // Predicated region
    $region18: #{char_gru_forward.1} parent=1 // pred_check
      _
    $region19: #{char_gru_forward.1} parent=1 // pred_check_branch
      %53 = sbr.rel (0) target = $region21
    $region20: #{char_gru_forward.1} parent=1 // pred_region
      _
    $region21: #{char_gru_forward.1} parent=1 // pred_fallthru
      _
    // Predicated region
    $region22: #{char_gru_forward.1} parent=1 // pred_check
      _
    $region23: #{char_gru_forward.1} parent=1 // pred_check_branch
      %55 = sbr.rel (0) target = $region25
    $region24: #{char_gru_forward.1} parent=1 // pred_region
      _
    $region25: #{char_gru_forward.1} parent=1 // pred_fallthru
      _
    // Predicated region
    $region26: #{char_gru_forward.1} parent=1 // pred_check
      _
    $region27: #{char_gru_forward.1} parent=1 // pred_check_branch
      %57 = sbr.rel (0) target = $region29
    $region28: #{char_gru_forward.1} parent=1 // pred_region
      _
    $region29: #{char_gru_forward.1} parent=1 // pred_fallthru
      _
    // Predicated region
    $region30: #{char_gru_forward.1} parent=1 // pred_check
      _
    $region31: #{char_gru_forward.1} parent=1 // pred_check_branch
      %59 = sbr.rel (0) target = $region33
    $region32: #{char_gru_forward.1} parent=1 // pred_region
      _
    $region33: #{char_gru_forward.1} parent=1 // pred_fallthru
      _
    // Predicated region
    $region34: #{char_gru_forward.1} parent=1 // pred_check
      _
    $region35: #{char_gru_forward.1} parent=1 // pred_check_branch
      %61 = sbr.rel (0) target = $region37
    $region36: #{char_gru_forward.1} parent=1 // pred_region
      _
    $region37: #{char_gru_forward.1} parent=1 // pred_fallthru
      _
    // Predicated region
    $region38: #{char_gru_forward.1} parent=1 // pred_check
      _
    $region39: #{char_gru_forward.1} parent=1 // pred_check_branch
      %63 = sbr.rel (0) target = $region41
    $region40: #{char_gru_forward.1} parent=1 // pred_region
      %64 = dma.done [#allocation6], 1536
    $region41: #{char_gru_forward.1} parent=1 // pred_fallthru
      _
    // Predicated region
    $region42: #{char_gru_forward.1} parent=1 // pred_check
      _
    $region43: #{char_gru_forward.1} parent=1 // pred_check_branch
      %66 = sbr.rel (0) target = $region45
    $region44: #{char_gru_forward.1} parent=1 // pred_region
      %67 = dma.done [#allocation9], 1536
    $region45: #{char_gru_forward.1} parent=1 // pred_fallthru
      _
    %s68 = sld [smem:[#allocation4]]
    %s69 = scalar_lea.vmem %s1, %s68
    %v70 = vld [vmem:[%s69] sm:$0x1]
    %vm71 = vcmask 253952
    %72 = vst.msk [vmem:[#allocation2] sm:$0x1] %vm71, %v70
    %s73 = sld [smem:[#allocation4 + $0x80]]
    %s74 = scalar_lea.vmem %s1, %s73
    %v75 = vld [vmem:[%s74] sm:$0x1]
    %76 = vst.msk [vmem:[#allocation2 + $0x1] sm:$0x1] %vm71, %v75
    %s77 = sld [smem:[#allocation4 + $0x1]]
    %s78 = scalar_lea.vmem %s1, %s77
    %v79 = vld [vmem:[%s78] sm:$0x1]
    %80 = vst.msk [vmem:[#allocation2 + $0x2] sm:$0x1] %vm71, %v79
    %s81 = sld [smem:[#allocation4 + $0x81]]
    %s82 = scalar_lea.vmem %s1, %s81
    %v83 = vld [vmem:[%s82] sm:$0x1]
    %84 = vst.msk [vmem:[#allocation2 + $0x3] sm:$0x1] %vm71, %v83
    %s85 = sld [smem:[#allocation4 + $0x2]]
    %s86 = scalar_lea.vmem %s1, %s85
    %v87 = vld [vmem:[%s86] sm:$0x1]
    %88 = vst.msk [vmem:[#allocation2 + $0x4] sm:$0x1] %vm71, %v87
    %s89 = sld [smem:[#allocation4 + $0x82]]
    %s90 = scalar_lea.vmem %s1, %s89
    %v91 = vld [vmem:[%s90] sm:$0x1]
    %92 = vst.msk [vmem:[#allocation2 + $0x5] sm:$0x1] %vm71, %v91
    %s93 = sld [smem:[#allocation4 + $0x3]]
    %s94 = scalar_lea.vmem %s1, %s93
    %v95 = vld [vmem:[%s94] sm:$0x1]
    %96 = vst.msk [vmem:[#allocation2 + $0x6] sm:$0x1] %vm71, %v95
    %s97 = sld [smem:[#allocation4 + $0x83]]
    %s98 = scalar_lea.vmem %s1, %s97
    %v99 = vld [vmem:[%s98] sm:$0x1]
    %100 = vst.msk [vmem:[#allocation2 + $0x7] sm:$0x1] %vm71, %v99
    %s101 = sld [smem:[#allocation4 + $0x4]]
    %s102 = scalar_lea.vmem %s1, %s101
    %v103 = vld [vmem:[%s102] sm:$0x1]
    %104 = vst.msk [vmem:[#allocation2 + $0x8] sm:$0x1] %vm71, %v103
    %s105 = sld [smem:[#allocation4 + $0x84]]
    %s106 = scalar_lea.vmem %s1, %s105
    %v107 = vld [vmem:[%s106] sm:$0x1]
    %108 = vst.msk [vmem:[#allocation2 + $0x9] sm:$0x1] %vm71, %v107
    %s109 = sld [smem:[#allocation4 + $0x5]]
    %s110 = scalar_lea.vmem %s1, %s109
    %v111 = vld [vmem:[%s110] sm:$0x1]
    %112 = vst.msk [vmem:[#allocation2 + $0xa] sm:$0x1] %vm71, %v111
    %s113 = sld [smem:[#allocation4 + $0x85]]
    %s114 = scalar_lea.vmem %s1, %s113
    %v115 = vld [vmem:[%s114] sm:$0x1]
    %116 = vst.msk [vmem:[#allocation2 + $0xb] sm:$0x1] %vm71, %v115
    %s117 = sld [smem:[#allocation4 + $0x6]]
    %s118 = scalar_lea.vmem %s1, %s117
    %v119 = vld [vmem:[%s118] sm:$0x1]
    %120 = vst.msk [vmem:[#allocation2 + $0xc] sm:$0x1] %vm71, %v119
    %s121 = sld [smem:[#allocation4 + $0x86]]
    %s122 = scalar_lea.vmem %s1, %s121
    %v123 = vld [vmem:[%s122] sm:$0x1]
    %124 = vst.msk [vmem:[#allocation2 + $0xd] sm:$0x1] %vm71, %v123
    %s125 = sld [smem:[#allocation4 + $0x7]]
    %s126 = scalar_lea.vmem %s1, %s125
    %v127 = vld [vmem:[%s126] sm:$0x1]
    %128 = vst.msk [vmem:[#allocation2 + $0xe] sm:$0x1] %vm71, %v127
    %s129 = sld [smem:[#allocation4 + $0x87]]
    %s130 = scalar_lea.vmem %s1, %s129
    %v131 = vld [vmem:[%s130] sm:$0x1]
    %132 = vst.msk [vmem:[#allocation2 + $0xf] sm:$0x1] %vm71, %v131
    %v133 = vld [vmem:[#allocation5] sm:$0xff]
    %v134 = vld [vmem:[#allocation5 + $0x8] sm:$0xff]
    %v135 = vld [vmem:[#allocation5 + $0x10] sm:$0xff]
    %v136 = vld [vmem:[#allocation5 + $0x18] sm:$0xff]
    %v137 = vld [vmem:[#allocation8] sm:$0xff]
    %v138 = vld [vmem:[#allocation8 + $0x8] sm:$0xff]
    %v139 = vld [vmem:[#allocation8 + $0x10] sm:$0xff]
    %v140 = vld [vmem:[#allocation8 + $0x18] sm:$0xff]
    %v141 = vld [vmem:[%s4] sm:$0x1]
    %v142 = vld [vmem:[%s5] sm:$0x1]
    %v143 = vld [vmem:[#allocation2] sm:$0xff]
    %v144 = vld [vmem:[#allocation2 + $0x8] sm:$0xff]
    %v146 = vlaneseq
    %v147 = vshrl.u32 %v146, 7
    %v148 = vsub.s32 0, %v147
    %v149 = vrot.slane %v141, %v148
    %vm151 = vcmask 261120
    %v153 = vsel %vm151, %v143, 0
    %v156 = vsel %vm151, %v144, 0
    %158 = vmatprep.subr.mxu0 0.0
    %159 = vmatpush1.msra.mxu0 %v133
    %160 = vmatprep.subr.mxu0 0.0
    %161 = vmatpush1.msra.mxu0 %v134
    %162 = vmatprep.subr.mxu0 0.0
    %163 = vmatpush1.msra.mxu0 %v135
    %164 = vmatprep.subr.mxu0 0.0
    %165 = vmatpush1.msra.mxu0 %v136
    %166 = vmatprep.subr.mxu0 0.0
    %167 = vmatpush1.msra.mxu0 0.0
    %168 = vmatprep.subr.mxu0 0.0
    %169 = vmatpush1.msra.mxu0 0.0
    %170 = vmatprep.subr.mxu0 0.0
    %171 = vmatpush1.msra.mxu0 0.0
    %172 = vmatprep.subr.mxu0 0.0
    %173 = vmatpush1.msra.mxu0 0.0
    %174 = vmatprep.subr.mxu0 0.0
    %175 = vmatpush1.msra.mxu0 0.0
    %176 = vmatprep.subr.mxu0 0.0
    %177 = vmatpush1.msra.mxu0 0.0
    %178 = vmatprep.subr.mxu0 0.0
    %179 = vmatpush1.msra.mxu0 0.0
    %180 = vmatprep.subr.mxu0 0.0
    %181 = vmatpush1.msra.mxu0 0.0
    %182 = vmatprep.subr.mxu0 0.0
    %183 = vmatpush1.msra.mxu0 0.0
    %184 = vmatprep.subr.mxu0 0.0
    %185 = vmatpush1.msra.mxu0 0.0
    %186 = vmatprep.subr.mxu0 0.0
    %187 = vmatpush1.msra.mxu0 0.0
    %188 = vmatprep.subr.mxu0 0.0
    %189 = vmatpush1.msra.mxu0 0.0
    %190 = vmatprep.subr.mxu0 0.0
    %191 = vmatpush1.msra.mxu0 0.0
    %192 = vmatprep.subr.mxu0 0.0
    %193 = vmatpush1.msra.mxu0 0.0
    %194 = vmatprep.subr.mxu0 0.0
    %195 = vmatpush1.msra.mxu0 0.0
    %196 = vmatprep.subr.mxu0 0.0
    %197 = vmatpush1.msra.mxu0 0.0
    %198 = vmatprep.subr.mxu0 0.0
    %199 = vmatpush1.msra.mxu0 0.0
    %200 = vmatprep.subr.mxu0 0.0
    %201 = vmatpush1.msra.mxu0 0.0
    %202 = vmatprep.subr.mxu0 0.0
    %203 = vmatpush1.msra.mxu0 0.0
    %204 = vmatprep.subr.mxu0 0.0
    %205 = vmatpush1.msra.mxu0 0.0
    %206 = vmatprep.subr.mxu0 0.0
    %207 = vmatpush1.msra.mxu0 0.0
    %208 = vmatprep.subr.mxu0 0.0
    %209 = vmatpush1.msra.mxu0 0.0
    %210 = vmatprep.subr.mxu0 0.0
    %211 = vmatpush1.msra.mxu0 0.0
    %212 = vmatprep.subr.mxu0 0.0
    %213 = vmatpush1.msra.mxu0 0.0
    %214 = vmatprep.subr.mxu0 0.0
    %215 = vmatpush1.msra.mxu0 0.0
    %216 = vmatprep.subr.mxu0 0.0
    %217 = vmatpush1.msra.mxu0 0.0
    %218 = vmatprep.subr.mxu0 0.0
    %219 = vmatpush1.msra.mxu0 0.0
    %220 = vmatprep.subr.mxu0 0.0
    %221 = vmatpush1.msra.mxu0 0.0
    %222 = vmatprep.mubr.f32.mxu0 0.0
    %223 = vmatmul.mubr.f32.gmra.mrb[0].mxu0 %v153
    %v224 = vpop.f32.mrb[0].mxu0
    %v225 = vadd.f32 %v149, %v224
    %v226 = vpop.f32.mrb[0].mxu0
    %227 = vmatprep.mubr.f32.mxu0 0.0
    %228 = vmatmul.mubr.f32.gmra.mrb[0].mxu0 %v156
    %v229 = vpop.f32.mrb[0].mxu0
    %v230 = vadd.f32 %v149, %v229
    %v231 = vpop.f32.mrb[0].mxu0
    %232 = vdwg.mxu0
    %v234 = vsel %vm151, 0.0, 0
    %236 = vmatprep.subr.mxu0 0.0
    %237 = vmatpush1.msra.mxu0 %v137
    %238 = vmatprep.subr.mxu0 0.0
    %239 = vmatpush1.msra.mxu0 %v138
    %240 = vmatprep.subr.mxu0 0.0
    %241 = vmatpush1.msra.mxu0 %v139
    %242 = vmatprep.subr.mxu0 0.0
    %243 = vmatpush1.msra.mxu0 %v140
    %244 = vmatprep.subr.mxu0 0.0
    %245 = vmatpush1.msra.mxu0 0.0
    %246 = vmatprep.subr.mxu0 0.0
    %247 = vmatpush1.msra.mxu0 0.0
    %248 = vmatprep.subr.mxu0 0.0
    %249 = vmatpush1.msra.mxu0 0.0
    %250 = vmatprep.subr.mxu0 0.0
    %251 = vmatpush1.msra.mxu0 0.0
    %252 = vmatprep.subr.mxu0 0.0
    %253 = vmatpush1.msra.mxu0 0.0
    %254 = vmatprep.subr.mxu0 0.0
    %255 = vmatpush1.msra.mxu0 0.0
    %256 = vmatprep.subr.mxu0 0.0
    %257 = vmatpush1.msra.mxu0 0.0
    %258 = vmatprep.subr.mxu0 0.0
    %259 = vmatpush1.msra.mxu0 0.0
    %260 = vmatprep.subr.mxu0 0.0
    %261 = vmatpush1.msra.mxu0 0.0
    %262 = vmatprep.subr.mxu0 0.0
    %263 = vmatpush1.msra.mxu0 0.0
    %264 = vmatprep.subr.mxu0 0.0
    %265 = vmatpush1.msra.mxu0 0.0
    %266 = vmatprep.subr.mxu0 0.0
    %267 = vmatpush1.msra.mxu0 0.0
    %268 = vmatprep.subr.mxu0 0.0
    %269 = vmatpush1.msra.mxu0 0.0
    %270 = vmatprep.subr.mxu0 0.0
    %271 = vmatpush1.msra.mxu0 0.0
    %272 = vmatprep.subr.mxu0 0.0
    %273 = vmatpush1.msra.mxu0 0.0
    %274 = vmatprep.subr.mxu0 0.0
    %275 = vmatpush1.msra.mxu0 0.0
    %276 = vmatprep.subr.mxu0 0.0
    %277 = vmatpush1.msra.mxu0 0.0
    %278 = vmatprep.subr.mxu0 0.0
    %279 = vmatpush1.msra.mxu0 0.0
    %280 = vmatprep.subr.mxu0 0.0
    %281 = vmatpush1.msra.mxu0 0.0
    %282 = vmatprep.subr.mxu0 0.0
    %283 = vmatpush1.msra.mxu0 0.0
    %284 = vmatprep.subr.mxu0 0.0
    %285 = vmatpush1.msra.mxu0 0.0
    %286 = vmatprep.subr.mxu0 0.0
    %287 = vmatpush1.msra.mxu0 0.0
    %288 = vmatprep.subr.mxu0 0.0
    %289 = vmatpush1.msra.mxu0 0.0
    %290 = vmatprep.subr.mxu0 0.0
    %291 = vmatpush1.msra.mxu0 0.0
    %292 = vmatprep.subr.mxu0 0.0
    %293 = vmatpush1.msra.mxu0 0.0
    %294 = vmatprep.subr.mxu0 0.0
    %295 = vmatpush1.msra.mxu0 0.0
    %296 = vmatprep.subr.mxu0 0.0
    %297 = vmatpush1.msra.mxu0 0.0
    %298 = vmatprep.subr.mxu0 0.0
    %299 = vmatpush1.msra.mxu0 0.0
    %300 = vmatprep.mubr.f32.mxu0 0.0
    %301 = vmatmul.mubr.f32.gmra.mrb[0].mxu0 %v234
    %v302 = vpop.f32.mrb[0].mxu0
    %v303 = vadd.f32 0.0, %v302
    %v304 = vpop.f32.mrb[0].mxu0
    %305 = vdwg.mxu0
    %v306 = vadd.f32 %v225, %v303
    %v307 = vxor.u32 %v306, 2147483648
    %v308 = vmul.f32 %v307, 1.442695
    %v309 = vpow.pop %v308
    %v310 = vadd.f32 %v309, 1.0
    %v311 = vrcp.pop %v310
    %v312 = vmul.f32 1.0, %v311
    %v314 = vlaneseq
    %v315 = vshrl.u32 %v314, 7
    %v316 = vsub.s32 0, %v315
    %v317 = vrot.slane %v142, %v316
    %v319 = vadd.f32 %v303, %v317
    %321 = vrot.lane.b32.xlu0 %v319, 32
    %v322 = vpop.permute.xlu0 %321
    %v324 = vmul.f32 %v312, %v322
    %326 = vrot.lane.b32.xlu0 %v324, 96
    %v327 = vpop.permute.xlu0 %326
    %v329 = vadd.f32 %v225, %v327
    %v330 = vtanh.pop %v329
    %v331 = vsub.f32 0.0, %v330
    %333 = vrot.lane.b32.xlu0 %v331, 64
    %v334 = vpop.permute.xlu0 %333
    %v336 = vmul.f32 %v312, %v334
    %338 = vrot.lane.b32.xlu0 %v336, 64
    %v339 = vpop.permute.xlu0 %338
    %v341 = vadd.f32 %v330, %v339
    %vm342 = vcmask 254976
    %343 = vst.msk [vmem:[#allocation2] sm:$0x3] %vm342, %v341
    %v345 = vsel %vm151, %v341, 0
    %347 = vmatprep.subr.mxu0 0.0
    %348 = vmatpush1.msra.mxu0 %v137
    %349 = vmatprep.subr.mxu0 0.0
    %350 = vmatpush1.msra.mxu0 %v138
    %351 = vmatprep.subr.mxu0 0.0
    %352 = vmatpush1.msra.mxu0 %v139
    %353 = vmatprep.subr.mxu0 0.0
    %354 = vmatpush1.msra.mxu0 %v140
    %355 = vmatprep.subr.mxu0 0.0
    %356 = vmatpush1.msra.mxu0 0.0
    %357 = vmatprep.subr.mxu0 0.0
    %358 = vmatpush1.msra.mxu0 0.0
    %359 = vmatprep.subr.mxu0 0.0
    %360 = vmatpush1.msra.mxu0 0.0
    %361 = vmatprep.subr.mxu0 0.0
    %362 = vmatpush1.msra.mxu0 0.0
    %363 = vmatprep.subr.mxu0 0.0
    %364 = vmatpush1.msra.mxu0 0.0
    %365 = vmatprep.subr.mxu0 0.0
    %366 = vmatpush1.msra.mxu0 0.0
    %367 = vmatprep.subr.mxu0 0.0
    %368 = vmatpush1.msra.mxu0 0.0
    %369 = vmatprep.subr.mxu0 0.0
    %370 = vmatpush1.msra.mxu0 0.0
    %371 = vmatprep.subr.mxu0 0.0
    %372 = vmatpush1.msra.mxu0 0.0
    %373 = vmatprep.subr.mxu0 0.0
    %374 = vmatpush1.msra.mxu0 0.0
    %375 = vmatprep.subr.mxu0 0.0
    %376 = vmatpush1.msra.mxu0 0.0
    %377 = vmatprep.subr.mxu0 0.0
    %378 = vmatpush1.msra.mxu0 0.0
    %379 = vmatprep.subr.mxu0 0.0
    %380 = vmatpush1.msra.mxu0 0.0
    %381 = vmatprep.subr.mxu0 0.0
    %382 = vmatpush1.msra.mxu0 0.0
    %383 = vmatprep.subr.mxu0 0.0
    %384 = vmatpush1.msra.mxu0 0.0
    %385 = vmatprep.subr.mxu0 0.0
    %386 = vmatpush1.msra.mxu0 0.0
    %387 = vmatprep.subr.mxu0 0.0
    %388 = vmatpush1.msra.mxu0 0.0
    %389 = vmatprep.subr.mxu0 0.0
    %390 = vmatpush1.msra.mxu0 0.0
    %391 = vmatprep.subr.mxu0 0.0
    %392 = vmatpush1.msra.mxu0 0.0
    %393 = vmatprep.subr.mxu0 0.0
    %394 = vmatpush1.msra.mxu0 0.0
    %395 = vmatprep.subr.mxu0 0.0
    %396 = vmatpush1.msra.mxu0 0.0
    %397 = vmatprep.subr.mxu0 0.0
    %398 = vmatpush1.msra.mxu0 0.0
    %399 = vmatprep.subr.mxu0 0.0
    %400 = vmatpush1.msra.mxu0 0.0
    %401 = vmatprep.subr.mxu0 0.0
    %402 = vmatpush1.msra.mxu0 0.0
    %403 = vmatprep.subr.mxu0 0.0
    %404 = vmatpush1.msra.mxu0 0.0
    %405 = vmatprep.subr.mxu0 0.0
    %406 = vmatpush1.msra.mxu0 0.0
    %407 = vmatprep.subr.mxu0 0.0
    %408 = vmatpush1.msra.mxu0 0.0
    %409 = vmatprep.subr.mxu0 0.0
    %410 = vmatpush1.msra.mxu0 0.0
    %411 = vmatprep.mubr.f32.mxu0 0.0
    %412 = vmatmul.mubr.f32.gmra.mrb[0].mxu0 %v345
    %v413 = vpop.f32.mrb[0].mxu0
    %v414 = vadd.f32 0.0, %v413
    %v415 = vpop.f32.mrb[0].mxu0
    %416 = vdwg.mxu0
    %v418 = vrot.slane %v414, 6
    %v420 = vadd.f32 %v225, %v418
    %v421 = vxor.u32 %v420, 2147483648
    %v422 = vmul.f32 %v421, 1.442695
    %v423 = vpow.pop %v422
    %v424 = vadd.f32 %v423, 1.0
    %v425 = vrcp.pop %v424
    %v426 = vmul.f32 1.0, %v425
    %v427 = vadd.f32 %v414, %v317
    %v429 = vrot.slane %v427, 6
    %430 = vrot.lane.b32.xlu0 %v429, 32
    %v431 = vpop.permute.xlu0 %430
    %v433 = vmul.f32 %v426, %v431
    %435 = vrot.lane.b32.xlu0 %v433, 96
    %v436 = vpop.permute.xlu0 %435
    %v438 = vadd.f32 %v225, %v436
    %v439 = vtanh.pop %v438
    %v441 = vrot.slane %v439, 2
    %v443 = vsub.f32 %v341, %v441
    %v445 = vrot.slane %v443, 6
    %446 = vrot.lane.b32.xlu0 %v445, 64
    %v447 = vpop.permute.xlu0 %446
    %v449 = vmul.f32 %v426, %v447
    %451 = vrot.lane.b32.xlu0 %v449, 64
    %v452 = vpop.permute.xlu0 %451
    %v454 = vadd.f32 %v439, %v452
    %vm455 = vcmask 257026
    %456 = vst.msk [vmem:[#allocation2] sm:$0xc] %vm455, %v454
    %v458 = vrot.slane %v454, 2
    %v459 = vsel %vm151, %v458, 0
    %461 = vmatprep.subr.mxu0 0.0
    %462 = vmatpush1.msra.mxu0 %v137
    %463 = vmatprep.subr.mxu0 0.0
    %464 = vmatpush1.msra.mxu0 %v138
    %465 = vmatprep.subr.mxu0 0.0
    %466 = vmatpush1.msra.mxu0 %v139
    %467 = vmatprep.subr.mxu0 0.0
    %468 = vmatpush1.msra.mxu0 %v140
    %469 = vmatprep.subr.mxu0 0.0
    %470 = vmatpush1.msra.mxu0 0.0
    %471 = vmatprep.subr.mxu0 0.0
    %472 = vmatpush1.msra.mxu0 0.0
    %473 = vmatprep.subr.mxu0 0.0
    %474 = vmatpush1.msra.mxu0 0.0
    %475 = vmatprep.subr.mxu0 0.0
    %476 = vmatpush1.msra.mxu0 0.0
    %477 = vmatprep.subr.mxu0 0.0
    %478 = vmatpush1.msra.mxu0 0.0
    %479 = vmatprep.subr.mxu0 0.0
    %480 = vmatpush1.msra.mxu0 0.0
    %481 = vmatprep.subr.mxu0 0.0
    %482 = vmatpush1.msra.mxu0 0.0
    %483 = vmatprep.subr.mxu0 0.0
    %484 = vmatpush1.msra.mxu0 0.0
    %485 = vmatprep.subr.mxu0 0.0
    %486 = vmatpush1.msra.mxu0 0.0
    %487 = vmatprep.subr.mxu0 0.0
    %488 = vmatpush1.msra.mxu0 0.0
    %489 = vmatprep.subr.mxu0 0.0
    %490 = vmatpush1.msra.mxu0 0.0
    %491 = vmatprep.subr.mxu0 0.0
    %492 = vmatpush1.msra.mxu0 0.0
    %493 = vmatprep.subr.mxu0 0.0
    %494 = vmatpush1.msra.mxu0 0.0
    %495 = vmatprep.subr.mxu0 0.0
    %496 = vmatpush1.msra.mxu0 0.0
    %497 = vmatprep.subr.mxu0 0.0
    %498 = vmatpush1.msra.mxu0 0.0
    %499 = vmatprep.subr.mxu0 0.0
    %500 = vmatpush1.msra.mxu0 0.0
    %501 = vmatprep.subr.mxu0 0.0
    %502 = vmatpush1.msra.mxu0 0.0
    %503 = vmatprep.subr.mxu0 0.0
    %504 = vmatpush1.msra.mxu0 0.0
    %505 = vmatprep.subr.mxu0 0.0
    %506 = vmatpush1.msra.mxu0 0.0
    %507 = vmatprep.subr.mxu0 0.0
    %508 = vmatpush1.msra.mxu0 0.0
    %509 = vmatprep.subr.mxu0 0.0
    %510 = vmatpush1.msra.mxu0 0.0
    %511 = vmatprep.subr.mxu0 0.0
    %512 = vmatpush1.msra.mxu0 0.0
    %513 = vmatprep.subr.mxu0 0.0
    %514 = vmatpush1.msra.mxu0 0.0
    %515 = vmatprep.subr.mxu0 0.0
    %516 = vmatpush1.msra.mxu0 0.0
    %517 = vmatprep.subr.mxu0 0.0
    %518 = vmatpush1.msra.mxu0 0.0
    %519 = vmatprep.subr.mxu0 0.0
    %520 = vmatpush1.msra.mxu0 0.0
    %521 = vmatprep.subr.mxu0 0.0
    %522 = vmatpush1.msra.mxu0 0.0
    %523 = vmatprep.subr.mxu0 0.0
    %524 = vmatpush1.msra.mxu0 0.0
    %525 = vmatprep.mubr.f32.mxu0 0.0
    %526 = vmatmul.mubr.f32.gmra.mrb[0].mxu0 %v459
    %v527 = vpop.f32.mrb[0].mxu0
    %v528 = vadd.f32 0.0, %v527
    %v529 = vpop.f32.mrb[0].mxu0
    %530 = vdwg.mxu0
    %v532 = vrot.slane %v528, 4
    %v534 = vadd.f32 %v225, %v532
    %v535 = vxor.u32 %v534, 2147483648
    %v536 = vmul.f32 %v535, 1.442695
    %v537 = vpow.pop %v536
    %v538 = vadd.f32 %v537, 1.0
    %v539 = vrcp.pop %v538
    %v540 = vmul.f32 1.0, %v539
    %v541 = vadd.f32 %v528, %v317
    %v543 = vrot.slane %v541, 4
    %544 = vrot.lane.b32.xlu0 %v543, 32
    %v545 = vpop.permute.xlu0 %544
    %v547 = vmul.f32 %v540, %v545
    %549 = vrot.lane.b32.xlu0 %v547, 96
    %v550 = vpop.permute.xlu0 %549
    %v552 = vadd.f32 %v225, %v550
    %v553 = vtanh.pop %v552
    %v555 = vrot.slane %v553, 2
    %v557 = vsub.f32 %v454, %v555
    %v559 = vrot.slane %v557, 6
    %560 = vrot.lane.b32.xlu0 %v559, 64
    %v561 = vpop.permute.xlu0 %560
    %v563 = vmul.f32 %v540, %v561
    %565 = vrot.lane.b32.xlu0 %v563, 64
    %v566 = vpop.permute.xlu0 %565
    %v568 = vadd.f32 %v553, %v566
    %vm569 = vcmask 259076
    %570 = vst.msk [vmem:[#allocation2] sm:$0x30] %vm569, %v568
    %v572 = vrot.slane %v568, 4
    %v573 = vsel %vm151, %v572, 0
    %575 = vmatprep.subr.mxu0 0.0
    %576 = vmatpush1.msra.mxu0 %v137
    %577 = vmatprep.subr.mxu0 0.0
    %578 = vmatpush1.msra.mxu0 %v138
    %579 = vmatprep.subr.mxu0 0.0
    %580 = vmatpush1.msra.mxu0 %v139
    %581 = vmatprep.subr.mxu0 0.0
    %582 = vmatpush1.msra.mxu0 %v140
    %583 = vmatprep.subr.mxu0 0.0
    %584 = vmatpush1.msra.mxu0 0.0
    %585 = vmatprep.subr.mxu0 0.0
    %586 = vmatpush1.msra.mxu0 0.0
    %587 = vmatprep.subr.mxu0 0.0
    %588 = vmatpush1.msra.mxu0 0.0
    %589 = vmatprep.subr.mxu0 0.0
    %590 = vmatpush1.msra.mxu0 0.0
    %591 = vmatprep.subr.mxu0 0.0
    %592 = vmatpush1.msra.mxu0 0.0
    %593 = vmatprep.subr.mxu0 0.0
    %594 = vmatpush1.msra.mxu0 0.0
    %595 = vmatprep.subr.mxu0 0.0
    %596 = vmatpush1.msra.mxu0 0.0
    %597 = vmatprep.subr.mxu0 0.0
    %598 = vmatpush1.msra.mxu0 0.0
    %599 = vmatprep.subr.mxu0 0.0
    %600 = vmatpush1.msra.mxu0 0.0
    %601 = vmatprep.subr.mxu0 0.0
    %602 = vmatpush1.msra.mxu0 0.0
    %603 = vmatprep.subr.mxu0 0.0
    %604 = vmatpush1.msra.mxu0 0.0
    %605 = vmatprep.subr.mxu0 0.0
    %606 = vmatpush1.msra.mxu0 0.0
    %607 = vmatprep.subr.mxu0 0.0
    %608 = vmatpush1.msra.mxu0 0.0
    %609 = vmatprep.subr.mxu0 0.0
    %610 = vmatpush1.msra.mxu0 0.0
    %611 = vmatprep.subr.mxu0 0.0
    %612 = vmatpush1.msra.mxu0 0.0
    %613 = vmatprep.subr.mxu0 0.0
    %614 = vmatpush1.msra.mxu0 0.0
    %615 = vmatprep.subr.mxu0 0.0
    %616 = vmatpush1.msra.mxu0 0.0
    %617 = vmatprep.subr.mxu0 0.0
    %618 = vmatpush1.msra.mxu0 0.0
    %619 = vmatprep.subr.mxu0 0.0
    %620 = vmatpush1.msra.mxu0 0.0
    %621 = vmatprep.subr.mxu0 0.0
    %622 = vmatpush1.msra.mxu0 0.0
    %623 = vmatprep.subr.mxu0 0.0
    %624 = vmatpush1.msra.mxu0 0.0
    %625 = vmatprep.subr.mxu0 0.0
    %626 = vmatpush1.msra.mxu0 0.0
    %627 = vmatprep.subr.mxu0 0.0
    %628 = vmatpush1.msra.mxu0 0.0
    %629 = vmatprep.subr.mxu0 0.0
    %630 = vmatpush1.msra.mxu0 0.0
    %631 = vmatprep.subr.mxu0 0.0
    %632 = vmatpush1.msra.mxu0 0.0
    %633 = vmatprep.subr.mxu0 0.0
    %634 = vmatpush1.msra.mxu0 0.0
    %635 = vmatprep.subr.mxu0 0.0
    %636 = vmatpush1.msra.mxu0 0.0
    %637 = vmatprep.subr.mxu0 0.0
    %638 = vmatpush1.msra.mxu0 0.0
    %639 = vmatprep.mubr.f32.mxu0 0.0
    %640 = vmatmul.mubr.f32.gmra.mrb[0].mxu0 %v573
    %v641 = vpop.f32.mrb[0].mxu0
    %v642 = vadd.f32 0.0, %v641
    %v643 = vpop.f32.mrb[0].mxu0
    %644 = vdwg.mxu0
    %v646 = vrot.slane %v642, 2
    %v648 = vadd.f32 %v225, %v646
    %v649 = vxor.u32 %v648, 2147483648
    %v650 = vmul.f32 %v649, 1.442695
    %v651 = vpow.pop %v650
    %v652 = vadd.f32 %v651, 1.0
    %v653 = vrcp.pop %v652
    %v654 = vmul.f32 1.0, %v653
    %v655 = vadd.f32 %v642, %v317
    %v657 = vrot.slane %v655, 2
    %658 = vrot.lane.b32.xlu0 %v657, 32
    %v659 = vpop.permute.xlu0 %658
    %v661 = vmul.f32 %v654, %v659
    %663 = vrot.lane.b32.xlu0 %v661, 96
    %v664 = vpop.permute.xlu0 %663
    %v666 = vadd.f32 %v225, %v664
    %v667 = vtanh.pop %v666
    %v669 = vrot.slane %v667, 2
    %v671 = vsub.f32 %v568, %v669
    %v673 = vrot.slane %v671, 6
    %674 = vrot.lane.b32.xlu0 %v673, 64
    %v675 = vpop.permute.xlu0 %674
    %v677 = vmul.f32 %v654, %v675
    %679 = vrot.lane.b32.xlu0 %v677, 64
    %v680 = vpop.permute.xlu0 %679
    %v682 = vadd.f32 %v667, %v680
    %vm683 = vcmask 261126
    %684 = vst.msk [vmem:[#allocation2] sm:$0xc0] %vm683, %v682
    %v686 = vrot.slane %v682, 6
    %v687 = vsel %vm151, %v686, 0
    %689 = vmatprep.subr.mxu0 0.0
    %690 = vmatpush1.msra.mxu0 %v137
    %691 = vmatprep.subr.mxu0 0.0
    %692 = vmatpush1.msra.mxu0 %v138
    %693 = vmatprep.subr.mxu0 0.0
    %694 = vmatpush1.msra.mxu0 %v139
    %695 = vmatprep.subr.mxu0 0.0
    %696 = vmatpush1.msra.mxu0 %v140
    %697 = vmatprep.subr.mxu0 0.0
    %698 = vmatpush1.msra.mxu0 0.0
    %699 = vmatprep.subr.mxu0 0.0
    %700 = vmatpush1.msra.mxu0 0.0
    %701 = vmatprep.subr.mxu0 0.0
    %702 = vmatpush1.msra.mxu0 0.0
    %703 = vmatprep.subr.mxu0 0.0
    %704 = vmatpush1.msra.mxu0 0.0
    %705 = vmatprep.subr.mxu0 0.0
    %706 = vmatpush1.msra.mxu0 0.0
    %707 = vmatprep.subr.mxu0 0.0
    %708 = vmatpush1.msra.mxu0 0.0
    %709 = vmatprep.subr.mxu0 0.0
    %710 = vmatpush1.msra.mxu0 0.0
    %711 = vmatprep.subr.mxu0 0.0
    %712 = vmatpush1.msra.mxu0 0.0
    %713 = vmatprep.subr.mxu0 0.0
    %714 = vmatpush1.msra.mxu0 0.0
    %715 = vmatprep.subr.mxu0 0.0
    %716 = vmatpush1.msra.mxu0 0.0
    %717 = vmatprep.subr.mxu0 0.0
    %718 = vmatpush1.msra.mxu0 0.0
    %719 = vmatprep.subr.mxu0 0.0
    %720 = vmatpush1.msra.mxu0 0.0
    %721 = vmatprep.subr.mxu0 0.0
    %722 = vmatpush1.msra.mxu0 0.0
    %723 = vmatprep.subr.mxu0 0.0
    %724 = vmatpush1.msra.mxu0 0.0
    %725 = vmatprep.subr.mxu0 0.0
    %726 = vmatpush1.msra.mxu0 0.0
    %727 = vmatprep.subr.mxu0 0.0
    %728 = vmatpush1.msra.mxu0 0.0
    %729 = vmatprep.subr.mxu0 0.0
    %730 = vmatpush1.msra.mxu0 0.0
    %731 = vmatprep.subr.mxu0 0.0
    %732 = vmatpush1.msra.mxu0 0.0
    %733 = vmatprep.subr.mxu0 0.0
    %734 = vmatpush1.msra.mxu0 0.0
    %735 = vmatprep.subr.mxu0 0.0
    %736 = vmatpush1.msra.mxu0 0.0
    %737 = vmatprep.subr.mxu0 0.0
    %738 = vmatpush1.msra.mxu0 0.0
    %739 = vmatprep.subr.mxu0 0.0
    %740 = vmatpush1.msra.mxu0 0.0
    %741 = vmatprep.subr.mxu0 0.0
    %742 = vmatpush1.msra.mxu0 0.0
    %743 = vmatprep.subr.mxu0 0.0
    %744 = vmatpush1.msra.mxu0 0.0
    %745 = vmatprep.subr.mxu0 0.0
    %746 = vmatpush1.msra.mxu0 0.0
    %747 = vmatprep.subr.mxu0 0.0
    %748 = vmatpush1.msra.mxu0 0.0
    %749 = vmatprep.subr.mxu0 0.0
    %750 = vmatpush1.msra.mxu0 0.0
    %751 = vmatprep.subr.mxu0 0.0
    %752 = vmatpush1.msra.mxu0 0.0
    %753 = vmatprep.mubr.f32.mxu0 0.0
    %754 = vmatmul.mubr.f32.gmra.mrb[0].mxu0 %v687
    %v755 = vpop.f32.mrb[0].mxu0
    %v756 = vadd.f32 0.0, %v755
    %v757 = vpop.f32.mrb[0].mxu0
    %758 = vdwg.mxu0
    %v759 = vadd.f32 %v230, %v756
    %v760 = vxor.u32 %v759, 2147483648
    %v761 = vmul.f32 %v760, 1.442695
    %v762 = vpow.pop %v761
    %v763 = vadd.f32 %v762, 1.0
    %v764 = vrcp.pop %v763
    %v765 = vmul.f32 1.0, %v764
    %v766 = vadd.f32 %v756, %v317
    %768 = vrot.lane.b32.xlu0 %v766, 32
    %v769 = vpop.permute.xlu0 %768
    %v771 = vmul.f32 %v765, %v769
    %773 = vrot.lane.b32.xlu0 %v771, 96
    %v774 = vpop.permute.xlu0 %773
    %v776 = vadd.f32 %v230, %v774
    %v777 = vtanh.pop %v776
    %v779 = vrot.slane %v777, 2
    %v781 = vsub.f32 %v682, %v779
    %v783 = vrot.slane %v781, 6
    %784 = vrot.lane.b32.xlu0 %v783, 64
    %v785 = vpop.permute.xlu0 %784
    %v787 = vmul.f32 %v765, %v785
    %789 = vrot.lane.b32.xlu0 %v787, 64
    %v790 = vpop.permute.xlu0 %789
    %v792 = vadd.f32 %v777, %v790
    %793 = vst.msk [vmem:[#allocation2 + $0x8] sm:$0x3] %vm342, %v792
    %v795 = vsel %vm151, %v792, 0
    %797 = vmatprep.subr.mxu0 0.0
    %798 = vmatpush1.msra.mxu0 %v137
    %799 = vmatprep.subr.mxu0 0.0
    %800 = vmatpush1.msra.mxu0 %v138
    %801 = vmatprep.subr.mxu0 0.0
    %802 = vmatpush1.msra.mxu0 %v139
    %803 = vmatprep.subr.mxu0 0.0
    %804 = vmatpush1.msra.mxu0 %v140
    %805 = vmatprep.subr.mxu0 0.0
    %806 = vmatpush1.msra.mxu0 0.0
    %807 = vmatprep.subr.mxu0 0.0
    %808 = vmatpush1.msra.mxu0 0.0
    %809 = vmatprep.subr.mxu0 0.0
    %810 = vmatpush1.msra.mxu0 0.0
    %811 = vmatprep.subr.mxu0 0.0
    %812 = vmatpush1.msra.mxu0 0.0
    %813 = vmatprep.subr.mxu0 0.0
    %814 = vmatpush1.msra.mxu0 0.0
    %815 = vmatprep.subr.mxu0 0.0
    %816 = vmatpush1.msra.mxu0 0.0
    %817 = vmatprep.subr.mxu0 0.0
    %818 = vmatpush1.msra.mxu0 0.0
    %819 = vmatprep.subr.mxu0 0.0
    %820 = vmatpush1.msra.mxu0 0.0
    %821 = vmatprep.subr.mxu0 0.0
    %822 = vmatpush1.msra.mxu0 0.0
    %823 = vmatprep.subr.mxu0 0.0
    %824 = vmatpush1.msra.mxu0 0.0
    %825 = vmatprep.subr.mxu0 0.0
    %826 = vmatpush1.msra.mxu0 0.0
    %827 = vmatprep.subr.mxu0 0.0
    %828 = vmatpush1.msra.mxu0 0.0
    %829 = vmatprep.subr.mxu0 0.0
    %830 = vmatpush1.msra.mxu0 0.0
    %831 = vmatprep.subr.mxu0 0.0
    %832 = vmatpush1.msra.mxu0 0.0
    %833 = vmatprep.subr.mxu0 0.0
    %834 = vmatpush1.msra.mxu0 0.0
    %835 = vmatprep.subr.mxu0 0.0
    %836 = vmatpush1.msra.mxu0 0.0
    %837 = vmatprep.subr.mxu0 0.0
    %838 = vmatpush1.msra.mxu0 0.0
    %839 = vmatprep.subr.mxu0 0.0
    %840 = vmatpush1.msra.mxu0 0.0
    %841 = vmatprep.subr.mxu0 0.0
    %842 = vmatpush1.msra.mxu0 0.0
    %843 = vmatprep.subr.mxu0 0.0
    %844 = vmatpush1.msra.mxu0 0.0
    %845 = vmatprep.subr.mxu0 0.0
    %846 = vmatpush1.msra.mxu0 0.0
    %847 = vmatprep.subr.mxu0 0.0
    %848 = vmatpush1.msra.mxu0 0.0
    %849 = vmatprep.subr.mxu0 0.0
    %850 = vmatpush1.msra.mxu0 0.0
    %851 = vmatprep.subr.mxu0 0.0
    %852 = vmatpush1.msra.mxu0 0.0
    %853 = vmatprep.subr.mxu0 0.0
    %854 = vmatpush1.msra.mxu0 0.0
    %855 = vmatprep.subr.mxu0 0.0
    %856 = vmatpush1.msra.mxu0 0.0
    %857 = vmatprep.subr.mxu0 0.0
    %858 = vmatpush1.msra.mxu0 0.0
    %859 = vmatprep.subr.mxu0 0.0
    %860 = vmatpush1.msra.mxu0 0.0
    %861 = vmatprep.mubr.f32.mxu0 0.0
    %862 = vmatmul.mubr.f32.gmra.mrb[0].mxu0 %v795
    %v863 = vpop.f32.mrb[0].mxu0
    %v864 = vadd.f32 0.0, %v863
    %v865 = vpop.f32.mrb[0].mxu0
    %866 = vdwg.mxu0
    %v868 = vrot.slane %v864, 6
    %v870 = vadd.f32 %v230, %v868
    %v871 = vxor.u32 %v870, 2147483648
    %v872 = vmul.f32 %v871, 1.442695
    %v873 = vpow.pop %v872
    %v874 = vadd.f32 %v873, 1.0
    %v875 = vrcp.pop %v874
    %v876 = vmul.f32 1.0, %v875
    %v877 = vadd.f32 %v864, %v317
    %v879 = vrot.slane %v877, 6
    %880 = vrot.lane.b32.xlu0 %v879, 32
    %v881 = vpop.permute.xlu0 %880
    %v883 = vmul.f32 %v876, %v881
    %885 = vrot.lane.b32.xlu0 %v883, 96
    %v886 = vpop.permute.xlu0 %885
    %v888 = vadd.f32 %v230, %v886
    %v889 = vtanh.pop %v888
    %v891 = vrot.slane %v889, 2
    %v893 = vsub.f32 %v792, %v891
    %v895 = vrot.slane %v893, 6
    %896 = vrot.lane.b32.xlu0 %v895, 64
    %v897 = vpop.permute.xlu0 %896
    %v899 = vmul.f32 %v876, %v897
    %901 = vrot.lane.b32.xlu0 %v899, 64
    %v902 = vpop.permute.xlu0 %901
    %v904 = vadd.f32 %v889, %v902
    %905 = vst.msk [vmem:[#allocation2 + $0x8] sm:$0xc] %vm455, %v904
    %v907 = vrot.slane %v904, 2
    %v908 = vsel %vm151, %v907, 0
    %910 = vmatprep.subr.mxu0 0.0
    %911 = vmatpush1.msra.mxu0 %v137
    %912 = vmatprep.subr.mxu0 0.0
    %913 = vmatpush1.msra.mxu0 %v138
    %914 = vmatprep.subr.mxu0 0.0
    %915 = vmatpush1.msra.mxu0 %v139
    %916 = vmatprep.subr.mxu0 0.0
    %917 = vmatpush1.msra.mxu0 %v140
    %918 = vmatprep.subr.mxu0 0.0
    %919 = vmatpush1.msra.mxu0 0.0
    %920 = vmatprep.subr.mxu0 0.0
    %921 = vmatpush1.msra.mxu0 0.0
    %922 = vmatprep.subr.mxu0 0.0
    %923 = vmatpush1.msra.mxu0 0.0
    %924 = vmatprep.subr.mxu0 0.0
    %925 = vmatpush1.msra.mxu0 0.0
    %926 = vmatprep.subr.mxu0 0.0
    %927 = vmatpush1.msra.mxu0 0.0
    %928 = vmatprep.subr.mxu0 0.0
    %929 = vmatpush1.msra.mxu0 0.0
    %930 = vmatprep.subr.mxu0 0.0
    %931 = vmatpush1.msra.mxu0 0.0
    %932 = vmatprep.subr.mxu0 0.0
    %933 = vmatpush1.msra.mxu0 0.0
    %934 = vmatprep.subr.mxu0 0.0
    %935 = vmatpush1.msra.mxu0 0.0
    %936 = vmatprep.subr.mxu0 0.0
    %937 = vmatpush1.msra.mxu0 0.0
    %938 = vmatprep.subr.mxu0 0.0
    %939 = vmatpush1.msra.mxu0 0.0
    %940 = vmatprep.subr.mxu0 0.0
    %941 = vmatpush1.msra.mxu0 0.0
    %942 = vmatprep.subr.mxu0 0.0
    %943 = vmatpush1.msra.mxu0 0.0
    %944 = vmatprep.subr.mxu0 0.0
    %945 = vmatpush1.msra.mxu0 0.0
    %946 = vmatprep.subr.mxu0 0.0
    %947 = vmatpush1.msra.mxu0 0.0
    %948 = vmatprep.subr.mxu0 0.0
    %949 = vmatpush1.msra.mxu0 0.0
    %950 = vmatprep.subr.mxu0 0.0
    %951 = vmatpush1.msra.mxu0 0.0
    %952 = vmatprep.subr.mxu0 0.0
    %953 = vmatpush1.msra.mxu0 0.0
    %954 = vmatprep.subr.mxu0 0.0
    %955 = vmatpush1.msra.mxu0 0.0
    %956 = vmatprep.subr.mxu0 0.0
    %957 = vmatpush1.msra.mxu0 0.0
    %958 = vmatprep.subr.mxu0 0.0
    %959 = vmatpush1.msra.mxu0 0.0
    %960 = vmatprep.subr.mxu0 0.0
    %961 = vmatpush1.msra.mxu0 0.0
    %962 = vmatprep.subr.mxu0 0.0
    %963 = vmatpush1.msra.mxu0 0.0
    %964 = vmatprep.subr.mxu0 0.0
    %965 = vmatpush1.msra.mxu0 0.0
    %966 = vmatprep.subr.mxu0 0.0
    %967 = vmatpush1.msra.mxu0 0.0
    %968 = vmatprep.subr.mxu0 0.0
    %969 = vmatpush1.msra.mxu0 0.0
    %970 = vmatprep.subr.mxu0 0.0
    %971 = vmatpush1.msra.mxu0 0.0
    %972 = vmatprep.subr.mxu0 0.0
    %973 = vmatpush1.msra.mxu0 0.0
    %974 = vmatprep.mubr.f32.mxu0 0.0
    %975 = vmatmul.mubr.f32.gmra.mrb[0].mxu0 %v908
    %v976 = vpop.f32.mrb[0].mxu0
    %v977 = vadd.f32 0.0, %v976
    %v978 = vpop.f32.mrb[0].mxu0
    %979 = vdwg.mxu0
    %v981 = vrot.slane %v977, 4
    %v983 = vadd.f32 %v230, %v981
    %v984 = vxor.u32 %v983, 2147483648
    %v985 = vmul.f32 %v984, 1.442695
    %v986 = vpow.pop %v985
    %v987 = vadd.f32 %v986, 1.0
    %v988 = vrcp.pop %v987
    %v989 = vmul.f32 1.0, %v988
    %v990 = vadd.f32 %v977, %v317
    %v992 = vrot.slane %v990, 4
    %993 = vrot.lane.b32.xlu0 %v992, 32
    %v994 = vpop.permute.xlu0 %993
    %v996 = vmul.f32 %v989, %v994
    %998 = vrot.lane.b32.xlu0 %v996, 96
    %v999 = vpop.permute.xlu0 %998
    %v1001 = vadd.f32 %v230, %v999
    %v1002 = vtanh.pop %v1001
    %v1004 = vrot.slane %v1002, 2
    %v1006 = vsub.f32 %v904, %v1004
    %v1008 = vrot.slane %v1006, 6
    %1009 = vrot.lane.b32.xlu0 %v1008, 64
    %v1010 = vpop.permute.xlu0 %1009
    %v1012 = vmul.f32 %v989, %v1010
    %1014 = vrot.lane.b32.xlu0 %v1012, 64
    %v1015 = vpop.permute.xlu0 %1014
    %v1017 = vadd.f32 %v1002, %v1015
    %1018 = vst.msk [vmem:[#allocation2 + $0x8] sm:$0x30] %vm569, %v1017
    %v1020 = vrot.slane %v1017, 4
    %v1021 = vsel %vm151, %v1020, 0
    %1023 = vmatprep.subr.mxu0 0.0
    %1024 = vmatpush1.msra.mxu0 %v137
    %1025 = vmatprep.subr.mxu0 0.0
    %1026 = vmatpush1.msra.mxu0 %v138
    %1027 = vmatprep.subr.mxu0 0.0
    %1028 = vmatpush1.msra.mxu0 %v139
    %1029 = vmatprep.subr.mxu0 0.0
    %1030 = vmatpush1.msra.mxu0 %v140
    %1031 = vmatprep.subr.mxu0 0.0
    %1032 = vmatpush1.msra.mxu0 0.0
    %1033 = vmatprep.subr.mxu0 0.0
    %1034 = vmatpush1.msra.mxu0 0.0
    %1035 = vmatprep.subr.mxu0 0.0
    %1036 = vmatpush1.msra.mxu0 0.0
    %1037 = vmatprep.subr.mxu0 0.0
    %1038 = vmatpush1.msra.mxu0 0.0
    %1039 = vmatprep.subr.mxu0 0.0
    %1040 = vmatpush1.msra.mxu0 0.0
    %1041 = vmatprep.subr.mxu0 0.0
    %1042 = vmatpush1.msra.mxu0 0.0
    %1043 = vmatprep.subr.mxu0 0.0
    %1044 = vmatpush1.msra.mxu0 0.0
    %1045 = vmatprep.subr.mxu0 0.0
    %1046 = vmatpush1.msra.mxu0 0.0
    %1047 = vmatprep.subr.mxu0 0.0
    %1048 = vmatpush1.msra.mxu0 0.0
    %1049 = vmatprep.subr.mxu0 0.0
    %1050 = vmatpush1.msra.mxu0 0.0
    %1051 = vmatprep.subr.mxu0 0.0
    %1052 = vmatpush1.msra.mxu0 0.0
    %1053 = vmatprep.subr.mxu0 0.0
    %1054 = vmatpush1.msra.mxu0 0.0
    %1055 = vmatprep.subr.mxu0 0.0
    %1056 = vmatpush1.msra.mxu0 0.0
    %1057 = vmatprep.subr.mxu0 0.0
    %1058 = vmatpush1.msra.mxu0 0.0
    %1059 = vmatprep.subr.mxu0 0.0
    %1060 = vmatpush1.msra.mxu0 0.0
    %1061 = vmatprep.subr.mxu0 0.0
    %1062 = vmatpush1.msra.mxu0 0.0
    %1063 = vmatprep.subr.mxu0 0.0
    %1064 = vmatpush1.msra.mxu0 0.0
    %1065 = vmatprep.subr.mxu0 0.0
    %1066 = vmatpush1.msra.mxu0 0.0
    %1067 = vmatprep.subr.mxu0 0.0
    %1068 = vmatpush1.msra.mxu0 0.0
    %1069 = vmatprep.subr.mxu0 0.0
    %1070 = vmatpush1.msra.mxu0 0.0
    %1071 = vmatprep.subr.mxu0 0.0
    %1072 = vmatpush1.msra.mxu0 0.0
    %1073 = vmatprep.subr.mxu0 0.0
    %1074 = vmatpush1.msra.mxu0 0.0
    %1075 = vmatprep.subr.mxu0 0.0
    %1076 = vmatpush1.msra.mxu0 0.0
    %1077 = vmatprep.subr.mxu0 0.0
    %1078 = vmatpush1.msra.mxu0 0.0
    %1079 = vmatprep.subr.mxu0 0.0
    %1080 = vmatpush1.msra.mxu0 0.0
    %1081 = vmatprep.subr.mxu0 0.0
    %1082 = vmatpush1.msra.mxu0 0.0
    %1083 = vmatprep.subr.mxu0 0.0
    %1084 = vmatpush1.msra.mxu0 0.0
    %1085 = vmatprep.subr.mxu0 0.0
    %1086 = vmatpush1.msra.mxu0 0.0
    %1087 = vmatprep.mubr.f32.mxu0 0.0
    %1088 = vmatmul.mubr.f32.gmra.mrb[0].mxu0 %v1021
    %v1089 = vpop.f32.mrb[0].mxu0
    %v1090 = vadd.f32 0.0, %v1089
    %v1091 = vpop.f32.mrb[0].mxu0
    %1092 = vdwg.mxu0
    %v1094 = vrot.slane %v1090, 2
    %v1096 = vadd.f32 %v230, %v1094
    %v1097 = vxor.u32 %v1096, 2147483648
    %v1098 = vmul.f32 %v1097, 1.442695
    %v1099 = vpow.pop %v1098
    %v1100 = vadd.f32 %v1099, 1.0
    %v1101 = vrcp.pop %v1100
    %v1102 = vmul.f32 1.0, %v1101
    %v1103 = vadd.f32 %v1090, %v317
    %v1105 = vrot.slane %v1103, 2
    %1106 = vrot.lane.b32.xlu0 %v1105, 32
    %v1107 = vpop.permute.xlu0 %1106
    %v1109 = vmul.f32 %v1102, %v1107
    %1111 = vrot.lane.b32.xlu0 %v1109, 96
    %v1112 = vpop.permute.xlu0 %1111
    %v1114 = vadd.f32 %v230, %v1112
    %v1115 = vtanh.pop %v1114
    %v1117 = vrot.slane %v1115, 2
    %v1119 = vsub.f32 %v1017, %v1117
    %v1121 = vrot.slane %v1119, 6
    %1122 = vrot.lane.b32.xlu0 %v1121, 64
    %v1123 = vpop.permute.xlu0 %1122
    %v1125 = vmul.f32 %v1102, %v1123
    %1127 = vrot.lane.b32.xlu0 %v1125, 64
    %v1128 = vpop.permute.xlu0 %1127
    %v1130 = vadd.f32 %v1115, %v1128
    %1131 = vst.msk [vmem:[#allocation2 + $0x8] sm:$0xc0] %vm683, %v1130
    %s1132 = scalar_lea.vmem [#allocation5], 32
    %v1133 = vld [vmem:[%s1132] sm:$0xff]
    %v1134 = vld [vmem:[%s1132 + $0x8] sm:$0xff]
    %v1135 = vld [vmem:[%s1132 + $0x10] sm:$0xff]
    %v1136 = vld [vmem:[%s1132 + $0x18] sm:$0xff]
    %s1137 = scalar_lea.vmem [#allocation8], 32
    %v1138 = vld [vmem:[%s1137] sm:$0xff]
    %v1139 = vld [vmem:[%s1137 + $0x8] sm:$0xff]
    %v1140 = vld [vmem:[%s1137 + $0x10] sm:$0xff]
    %v1141 = vld [vmem:[%s1137 + $0x18] sm:$0xff]
    %s1142 = scalar_lea.vmem %s4, 1
    %v1143 = vld [vmem:[%s1142] sm:$0x1]
    %s1144 = scalar_lea.vmem %s5, 1
    %v1145 = vld [vmem:[%s1144] sm:$0x1]
    %v1146 = vld [vmem:[#allocation2] sm:$0xff]
    %v1147 = vld [vmem:[#allocation2 + $0x8] sm:$0xff]
    %v1149 = vlaneseq
    %v1150 = vshrl.u32 %v1149, 7
    %v1151 = vsub.s32 0, %v1150
    %v1152 = vrot.slane %v1143, %v1151
    %v1155 = vsel %vm151, %v1146, 0
    %v1158 = vsel %vm151, %v1147, 0
    %1160 = vmatprep.subr.mxu0 0.0
    %1161 = vmatpush1.msra.mxu0 %v1133
    %1162 = vmatprep.subr.mxu0 0.0
    %1163 = vmatpush1.msra.mxu0 %v1134
    %1164 = vmatprep.subr.mxu0 0.0
    %1165 = vmatpush1.msra.mxu0 %v1135
    %1166 = vmatprep.subr.mxu0 0.0
    %1167 = vmatpush1.msra.mxu0 %v1136
    %1168 = vmatprep.subr.mxu0 0.0
    %1169 = vmatpush1.msra.mxu0 0.0
    %1170 = vmatprep.subr.mxu0 0.0
    %1171 = vmatpush1.msra.mxu0 0.0
    %1172 = vmatprep.subr.mxu0 0.0
    %1173 = vmatpush1.msra.mxu0 0.0
    %1174 = vmatprep.subr.mxu0 0.0
    %1175 = vmatpush1.msra.mxu0 0.0
    %1176 = vmatprep.subr.mxu0 0.0
    %1177 = vmatpush1.msra.mxu0 0.0
    %1178 = vmatprep.subr.mxu0 0.0
    %1179 = vmatpush1.msra.mxu0 0.0
    %1180 = vmatprep.subr.mxu0 0.0
    %1181 = vmatpush1.msra.mxu0 0.0
    %1182 = vmatprep.subr.mxu0 0.0
    %1183 = vmatpush1.msra.mxu0 0.0
    %1184 = vmatprep.subr.mxu0 0.0
    %1185 = vmatpush1.msra.mxu0 0.0
    %1186 = vmatprep.subr.mxu0 0.0
    %1187 = vmatpush1.msra.mxu0 0.0
    %1188 = vmatprep.subr.mxu0 0.0
    %1189 = vmatpush1.msra.mxu0 0.0
    %1190 = vmatprep.subr.mxu0 0.0
    %1191 = vmatpush1.msra.mxu0 0.0
    %1192 = vmatprep.subr.mxu0 0.0
    %1193 = vmatpush1.msra.mxu0 0.0
    %1194 = vmatprep.subr.mxu0 0.0
    %1195 = vmatpush1.msra.mxu0 0.0
    %1196 = vmatprep.subr.mxu0 0.0
    %1197 = vmatpush1.msra.mxu0 0.0
    %1198 = vmatprep.subr.mxu0 0.0
    %1199 = vmatpush1.msra.mxu0 0.0
    %1200 = vmatprep.subr.mxu0 0.0
    %1201 = vmatpush1.msra.mxu0 0.0
    %1202 = vmatprep.subr.mxu0 0.0
    %1203 = vmatpush1.msra.mxu0 0.0
    %1204 = vmatprep.subr.mxu0 0.0
    %1205 = vmatpush1.msra.mxu0 0.0
    %1206 = vmatprep.subr.mxu0 0.0
    %1207 = vmatpush1.msra.mxu0 0.0
    %1208 = vmatprep.subr.mxu0 0.0
    %1209 = vmatpush1.msra.mxu0 0.0
    %1210 = vmatprep.subr.mxu0 0.0
    %1211 = vmatpush1.msra.mxu0 0.0
    %1212 = vmatprep.subr.mxu0 0.0
    %1213 = vmatpush1.msra.mxu0 0.0
    %1214 = vmatprep.subr.mxu0 0.0
    %1215 = vmatpush1.msra.mxu0 0.0
    %1216 = vmatprep.subr.mxu0 0.0
    %1217 = vmatpush1.msra.mxu0 0.0
    %1218 = vmatprep.subr.mxu0 0.0
    %1219 = vmatpush1.msra.mxu0 0.0
    %1220 = vmatprep.subr.mxu0 0.0
    %1221 = vmatpush1.msra.mxu0 0.0
    %1222 = vmatprep.subr.mxu0 0.0
    %1223 = vmatpush1.msra.mxu0 0.0
    %1224 = vmatprep.mubr.f32.mxu0 0.0
    %1225 = vmatmul.mubr.f32.gmra.mrb[0].mxu0 %v1155
    %v1226 = vpop.f32.mrb[0].mxu0
    %v1227 = vadd.f32 %v1152, %v1226
    %v1228 = vpop.f32.mrb[0].mxu0
    %1229 = vmatprep.mubr.f32.mxu0 0.0
    %1230 = vmatmul.mubr.f32.gmra.mrb[0].mxu0 %v1158
    %v1231 = vpop.f32.mrb[0].mxu0
    %v1232 = vadd.f32 %v1152, %v1231
    %v1233 = vpop.f32.mrb[0].mxu0
    %1234 = vdwg.mxu0
    %1235 = vmatprep.subr.mxu0 0.0
    %1236 = vmatpush1.msra.mxu0 %v1138
    %1237 = vmatprep.subr.mxu0 0.0
    %1238 = vmatpush1.msra.mxu0 %v1139
    %1239 = vmatprep.subr.mxu0 0.0
    %1240 = vmatpush1.msra.mxu0 %v1140
    %1241 = vmatprep.subr.mxu0 0.0
    %1242 = vmatpush1.msra.mxu0 %v1141
    %1243 = vmatprep.subr.mxu0 0.0
    %1244 = vmatpush1.msra.mxu0 0.0
    %1245 = vmatprep.subr.mxu0 0.0
    %1246 = vmatpush1.msra.mxu0 0.0
    %1247 = vmatprep.subr.mxu0 0.0
    %1248 = vmatpush1.msra.mxu0 0.0
    %1249 = vmatprep.subr.mxu0 0.0
    %1250 = vmatpush1.msra.mxu0 0.0
    %1251 = vmatprep.subr.mxu0 0.0
    %1252 = vmatpush1.msra.mxu0 0.0
    %1253 = vmatprep.subr.mxu0 0.0
    %1254 = vmatpush1.msra.mxu0 0.0
    %1255 = vmatprep.subr.mxu0 0.0
    %1256 = vmatpush1.msra.mxu0 0.0
    %1257 = vmatprep.subr.mxu0 0.0
    %1258 = vmatpush1.msra.mxu0 0.0
    %1259 = vmatprep.subr.mxu0 0.0
    %1260 = vmatpush1.msra.mxu0 0.0
    %1261 = vmatprep.subr.mxu0 0.0
    %1262 = vmatpush1.msra.mxu0 0.0
    %1263 = vmatprep.subr.mxu0 0.0
    %1264 = vmatpush1.msra.mxu0 0.0
    %1265 = vmatprep.subr.mxu0 0.0
    %1266 = vmatpush1.msra.mxu0 0.0
    %1267 = vmatprep.subr.mxu0 0.0
    %1268 = vmatpush1.msra.mxu0 0.0
    %1269 = vmatprep.subr.mxu0 0.0
    %1270 = vmatpush1.msra.mxu0 0.0
    %1271 = vmatprep.subr.mxu0 0.0
    %1272 = vmatpush1.msra.mxu0 0.0
    %1273 = vmatprep.subr.mxu0 0.0
    %1274 = vmatpush1.msra.mxu0 0.0
    %1275 = vmatprep.subr.mxu0 0.0
    %1276 = vmatpush1.msra.mxu0 0.0
    %1277 = vmatprep.subr.mxu0 0.0
    %1278 = vmatpush1.msra.mxu0 0.0
    %1279 = vmatprep.subr.mxu0 0.0
    %1280 = vmatpush1.msra.mxu0 0.0
    %1281 = vmatprep.subr.mxu0 0.0
    %1282 = vmatpush1.msra.mxu0 0.0
    %1283 = vmatprep.subr.mxu0 0.0
    %1284 = vmatpush1.msra.mxu0 0.0
    %1285 = vmatprep.subr.mxu0 0.0
    %1286 = vmatpush1.msra.mxu0 0.0
    %1287 = vmatprep.subr.mxu0 0.0
    %1288 = vmatpush1.msra.mxu0 0.0
    %1289 = vmatprep.subr.mxu0 0.0
    %1290 = vmatpush1.msra.mxu0 0.0
    %1291 = vmatprep.subr.mxu0 0.0
    %1292 = vmatpush1.msra.mxu0 0.0
    %1293 = vmatprep.subr.mxu0 0.0
    %1294 = vmatpush1.msra.mxu0 0.0
    %1295 = vmatprep.subr.mxu0 0.0
    %1296 = vmatpush1.msra.mxu0 0.0
    %1297 = vmatprep.subr.mxu0 0.0
    %1298 = vmatpush1.msra.mxu0 0.0
    %1299 = vmatprep.mubr.f32.mxu0 0.0
    %1300 = vmatmul.mubr.f32.gmra.mrb[0].mxu0 %v234
    %v1301 = vpop.f32.mrb[0].mxu0
    %v1302 = vadd.f32 0.0, %v1301
    %v1303 = vpop.f32.mrb[0].mxu0
    %1304 = vdwg.mxu0
    %v1305 = vadd.f32 %v1227, %v1302
    %v1306 = vxor.u32 %v1305, 2147483648
    %v1307 = vmul.f32 %v1306, 1.442695
    %v1308 = vpow.pop %v1307
    %v1309 = vadd.f32 %v1308, 1.0
    %v1310 = vrcp.pop %v1309
    %v1311 = vmul.f32 1.0, %v1310
    %v1313 = vlaneseq
    %v1314 = vshrl.u32 %v1313, 7
    %v1315 = vsub.s32 0, %v1314
    %v1316 = vrot.slane %v1145, %v1315
    %v1318 = vadd.f32 %v1302, %v1316
    %1320 = vrot.lane.b32.xlu0 %v1318, 32
    %v1321 = vpop.permute.xlu0 %1320
    %v1323 = vmul.f32 %v1311, %v1321
    %1325 = vrot.lane.b32.xlu0 %v1323, 96
    %v1326 = vpop.permute.xlu0 %1325
    %v1328 = vadd.f32 %v1227, %v1326
    %v1329 = vtanh.pop %v1328
    %v1330 = vsub.f32 0.0, %v1329
    %1332 = vrot.lane.b32.xlu0 %v1330, 64
    %v1333 = vpop.permute.xlu0 %1332
    %v1335 = vmul.f32 %v1311, %v1333
    %1337 = vrot.lane.b32.xlu0 %v1335, 64
    %v1338 = vpop.permute.xlu0 %1337
    %v1340 = vadd.f32 %v1329, %v1338
    %1341 = vst.msk [vmem:[#allocation2] sm:$0x3] %vm342, %v1340
    %v1343 = vsel %vm151, %v1340, 0
    %1345 = vmatprep.subr.mxu0 0.0
    %1346 = vmatpush1.msra.mxu0 %v1138
    %1347 = vmatprep.subr.mxu0 0.0
    %1348 = vmatpush1.msra.mxu0 %v1139
    %1349 = vmatprep.subr.mxu0 0.0
    %1350 = vmatpush1.msra.mxu0 %v1140
    %1351 = vmatprep.subr.mxu0 0.0
    %1352 = vmatpush1.msra.mxu0 %v1141
    %1353 = vmatprep.subr.mxu0 0.0
    %1354 = vmatpush1.msra.mxu0 0.0
    %1355 = vmatprep.subr.mxu0 0.0
    %1356 = vmatpush1.msra.mxu0 0.0
    %1357 = vmatprep.subr.mxu0 0.0
    %1358 = vmatpush1.msra.mxu0 0.0
    %1359 = vmatprep.subr.mxu0 0.0
    %1360 = vmatpush1.msra.mxu0 0.0
    %1361 = vmatprep.subr.mxu0 0.0
    %1362 = vmatpush1.msra.mxu0 0.0
    %1363 = vmatprep.subr.mxu0 0.0
    %1364 = vmatpush1.msra.mxu0 0.0
    %1365 = vmatprep.subr.mxu0 0.0
    %1366 = vmatpush1.msra.mxu0 0.0
    %1367 = vmatprep.subr.mxu0 0.0
    %1368 = vmatpush1.msra.mxu0 0.0
    %1369 = vmatprep.subr.mxu0 0.0
    %1370 = vmatpush1.msra.mxu0 0.0
    %1371 = vmatprep.subr.mxu0 0.0
    %1372 = vmatpush1.msra.mxu0 0.0
    %1373 = vmatprep.subr.mxu0 0.0
    %1374 = vmatpush1.msra.mxu0 0.0
    %1375 = vmatprep.subr.mxu0 0.0
    %1376 = vmatpush1.msra.mxu0 0.0
    %1377 = vmatprep.subr.mxu0 0.0
    %1378 = vmatpush1.msra.mxu0 0.0
    %1379 = vmatprep.subr.mxu0 0.0
    %1380 = vmatpush1.msra.mxu0 0.0
    %1381 = vmatprep.subr.mxu0 0.0
    %1382 = vmatpush1.msra.mxu0 0.0
    %1383 = vmatprep.subr.mxu0 0.0
    %1384 = vmatpush1.msra.mxu0 0.0
    %1385 = vmatprep.subr.mxu0 0.0
    %1386 = vmatpush1.msra.mxu0 0.0
    %1387 = vmatprep.subr.mxu0 0.0
    %1388 = vmatpush1.msra.mxu0 0.0
    %1389 = vmatprep.subr.mxu0 0.0
    %1390 = vmatpush1.msra.mxu0 0.0
    %1391 = vmatprep.subr.mxu0 0.0
    %1392 = vmatpush1.msra.mxu0 0.0
    %1393 = vmatprep.subr.mxu0 0.0
    %1394 = vmatpush1.msra.mxu0 0.0
    %1395 = vmatprep.subr.mxu0 0.0
    %1396 = vmatpush1.msra.mxu0 0.0
    %1397 = vmatprep.subr.mxu0 0.0
    %1398 = vmatpush1.msra.mxu0 0.0
    %1399 = vmatprep.subr.mxu0 0.0
    %1400 = vmatpush1.msra.mxu0 0.0
    %1401 = vmatprep.subr.mxu0 0.0
    %1402 = vmatpush1.msra.mxu0 0.0
    %1403 = vmatprep.subr.mxu0 0.0
    %1404 = vmatpush1.msra.mxu0 0.0
    %1405 = vmatprep.subr.mxu0 0.0
    %1406 = vmatpush1.msra.mxu0 0.0
    %1407 = vmatprep.subr.mxu0 0.0
    %1408 = vmatpush1.msra.mxu0 0.0
    %1409 = vmatprep.mubr.f32.mxu0 0.0
    %1410 = vmatmul.mubr.f32.gmra.mrb[0].mxu0 %v1343
    %v1411 = vpop.f32.mrb[0].mxu0
    %v1412 = vadd.f32 0.0, %v1411
    %v1413 = vpop.f32.mrb[0].mxu0
    %1414 = vdwg.mxu0
    %v1416 = vrot.slane %v1412, 6
    %v1418 = vadd.f32 %v1227, %v1416
    %v1419 = vxor.u32 %v1418, 2147483648
    %v1420 = vmul.f32 %v1419, 1.442695
    %v1421 = vpow.pop %v1420
    %v1422 = vadd.f32 %v1421, 1.0
    %v1423 = vrcp.pop %v1422
    %v1424 = vmul.f32 1.0, %v1423
    %v1425 = vadd.f32 %v1412, %v1316
    %v1427 = vrot.slane %v1425, 6
    %1428 = vrot.lane.b32.xlu0 %v1427, 32
    %v1429 = vpop.permute.xlu0 %1428
    %v1431 = vmul.f32 %v1424, %v1429
    %1433 = vrot.lane.b32.xlu0 %v1431, 96
    %v1434 = vpop.permute.xlu0 %1433
    %v1436 = vadd.f32 %v1227, %v1434
    %v1437 = vtanh.pop %v1436
    %v1439 = vrot.slane %v1437, 2
    %v1441 = vsub.f32 %v1340, %v1439
    %v1443 = vrot.slane %v1441, 6
    %1444 = vrot.lane.b32.xlu0 %v1443, 64
    %v1445 = vpop.permute.xlu0 %1444
    %v1447 = vmul.f32 %v1424, %v1445
    %1449 = vrot.lane.b32.xlu0 %v1447, 64
    %v1450 = vpop.permute.xlu0 %1449
    %v1452 = vadd.f32 %v1437, %v1450
    %1453 = vst.msk [vmem:[#allocation2] sm:$0xc] %vm455, %v1452
    %v1455 = vrot.slane %v1452, 2
    %v1456 = vsel %vm151, %v1455, 0
    %1458 = vmatprep.subr.mxu0 0.0
    %1459 = vmatpush1.msra.mxu0 %v1138
    %1460 = vmatprep.subr.mxu0 0.0
    %1461 = vmatpush1.msra.mxu0 %v1139
    %1462 = vmatprep.subr.mxu0 0.0
    %1463 = vmatpush1.msra.mxu0 %v1140
    %1464 = vmatprep.subr.mxu0 0.0
    %1465 = vmatpush1.msra.mxu0 %v1141
    %1466 = vmatprep.subr.mxu0 0.0
    %1467 = vmatpush1.msra.mxu0 0.0
    %1468 = vmatprep.subr.mxu0 0.0
    %1469 = vmatpush1.msra.mxu0 0.0
    %1470 = vmatprep.subr.mxu0 0.0
    %1471 = vmatpush1.msra.mxu0 0.0
    %1472 = vmatprep.subr.mxu0 0.0
    %1473 = vmatpush1.msra.mxu0 0.0
    %1474 = vmatprep.subr.mxu0 0.0
    %1475 = vmatpush1.msra.mxu0 0.0
    %1476 = vmatprep.subr.mxu0 0.0
    %1477 = vmatpush1.msra.mxu0 0.0
    %1478 = vmatprep.subr.mxu0 0.0
    %1479 = vmatpush1.msra.mxu0 0.0
    %1480 = vmatprep.subr.mxu0 0.0
    %1481 = vmatpush1.msra.mxu0 0.0
    %1482 = vmatprep.subr.mxu0 0.0
    %1483 = vmatpush1.msra.mxu0 0.0
    %1484 = vmatprep.subr.mxu0 0.0
    %1485 = vmatpush1.msra.mxu0 0.0
    %1486 = vmatprep.subr.mxu0 0.0
    %1487 = vmatpush1.msra.mxu0 0.0
    %1488 = vmatprep.subr.mxu0 0.0
    %1489 = vmatpush1.msra.mxu0 0.0
    %1490 = vmatprep.subr.mxu0 0.0
    %1491 = vmatpush1.msra.mxu0 0.0
    %1492 = vmatprep.subr.mxu0 0.0
    %1493 = vmatpush1.msra.mxu0 0.0
    %1494 = vmatprep.subr.mxu0 0.0
    %1495 = vmatpush1.msra.mxu0 0.0
    %1496 = vmatprep.subr.mxu0 0.0
    %1497 = vmatpush1.msra.mxu0 0.0
    %1498 = vmatprep.subr.mxu0 0.0
    %1499 = vmatpush1.msra.mxu0 0.0
    %1500 = vmatprep.subr.mxu0 0.0
    %1501 = vmatpush1.msra.mxu0 0.0
    %1502 = vmatprep.subr.mxu0 0.0
    %1503 = vmatpush1.msra.mxu0 0.0
    %1504 = vmatprep.subr.mxu0 0.0
    %1505 = vmatpush1.msra.mxu0 0.0
    %1506 = vmatprep.subr.mxu0 0.0
    %1507 = vmatpush1.msra.mxu0 0.0
    %1508 = vmatprep.subr.mxu0 0.0
    %1509 = vmatpush1.msra.mxu0 0.0
    %1510 = vmatprep.subr.mxu0 0.0
    %1511 = vmatpush1.msra.mxu0 0.0
    %1512 = vmatprep.subr.mxu0 0.0
    %1513 = vmatpush1.msra.mxu0 0.0
    %1514 = vmatprep.subr.mxu0 0.0
    %1515 = vmatpush1.msra.mxu0 0.0
    %1516 = vmatprep.subr.mxu0 0.0
    %1517 = vmatpush1.msra.mxu0 0.0
    %1518 = vmatprep.subr.mxu0 0.0
    %1519 = vmatpush1.msra.mxu0 0.0
    %1520 = vmatprep.subr.mxu0 0.0
    %1521 = vmatpush1.msra.mxu0 0.0
    %1522 = vmatprep.mubr.f32.mxu0 0.0
    %1523 = vmatmul.mubr.f32.gmra.mrb[0].mxu0 %v1456
    %v1524 = vpop.f32.mrb[0].mxu0
    %v1525 = vadd.f32 0.0, %v1524
    %v1526 = vpop.f32.mrb[0].mxu0
    %1527 = vdwg.mxu0
    %v1529 = vrot.slane %v1525, 4
    %v1531 = vadd.f32 %v1227, %v1529
    %v1532 = vxor.u32 %v1531, 2147483648
    %v1533 = vmul.f32 %v1532, 1.442695
    %v1534 = vpow.pop %v1533
    %v1535 = vadd.f32 %v1534, 1.0
    %v1536 = vrcp.pop %v1535
    %v1537 = vmul.f32 1.0, %v1536
    %v1538 = vadd.f32 %v1525, %v1316
    %v1540 = vrot.slane %v1538, 4
    %1541 = vrot.lane.b32.xlu0 %v1540, 32
    %v1542 = vpop.permute.xlu0 %1541
    %v1544 = vmul.f32 %v1537, %v1542
    %1546 = vrot.lane.b32.xlu0 %v1544, 96
    %v1547 = vpop.permute.xlu0 %1546
    %v1549 = vadd.f32 %v1227, %v1547
    %v1550 = vtanh.pop %v1549
    %v1552 = vrot.slane %v1550, 2
    %v1554 = vsub.f32 %v1452, %v1552
    %v1556 = vrot.slane %v1554, 6
    %1557 = vrot.lane.b32.xlu0 %v1556, 64
    %v1558 = vpop.permute.xlu0 %1557
    %v1560 = vmul.f32 %v1537, %v1558
    %1562 = vrot.lane.b32.xlu0 %v1560, 64
    %v1563 = vpop.permute.xlu0 %1562
    %v1565 = vadd.f32 %v1550, %v1563
    %1566 = vst.msk [vmem:[#allocation2] sm:$0x30] %vm569, %v1565
    %v1568 = vrot.slane %v1565, 4
    %v1569 = vsel %vm151, %v1568, 0
    %1571 = vmatprep.subr.mxu0 0.0
    %1572 = vmatpush1.msra.mxu0 %v1138
    %1573 = vmatprep.subr.mxu0 0.0
    %1574 = vmatpush1.msra.mxu0 %v1139
    %1575 = vmatprep.subr.mxu0 0.0
    %1576 = vmatpush1.msra.mxu0 %v1140
    %1577 = vmatprep.subr.mxu0 0.0
    %1578 = vmatpush1.msra.mxu0 %v1141
    %1579 = vmatprep.subr.mxu0 0.0
    %1580 = vmatpush1.msra.mxu0 0.0
    %1581 = vmatprep.subr.mxu0 0.0
    %1582 = vmatpush1.msra.mxu0 0.0
    %1583 = vmatprep.subr.mxu0 0.0
    %1584 = vmatpush1.msra.mxu0 0.0
    %1585 = vmatprep.subr.mxu0 0.0
    %1586 = vmatpush1.msra.mxu0 0.0
    %1587 = vmatprep.subr.mxu0 0.0
    %1588 = vmatpush1.msra.mxu0 0.0
    %1589 = vmatprep.subr.mxu0 0.0
    %1590 = vmatpush1.msra.mxu0 0.0
    %1591 = vmatprep.subr.mxu0 0.0
    %1592 = vmatpush1.msra.mxu0 0.0
    %1593 = vmatprep.subr.mxu0 0.0
    %1594 = vmatpush1.msra.mxu0 0.0
    %1595 = vmatprep.subr.mxu0 0.0
    %1596 = vmatpush1.msra.mxu0 0.0
    %1597 = vmatprep.subr.mxu0 0.0
    %1598 = vmatpush1.msra.mxu0 0.0
    %1599 = vmatprep.subr.mxu0 0.0
    %1600 = vmatpush1.msra.mxu0 0.0
    %1601 = vmatprep.subr.mxu0 0.0
    %1602 = vmatpush1.msra.mxu0 0.0
    %1603 = vmatprep.subr.mxu0 0.0
    %1604 = vmatpush1.msra.mxu0 0.0
    %1605 = vmatprep.subr.mxu0 0.0
    %1606 = vmatpush1.msra.mxu0 0.0
    %1607 = vmatprep.subr.mxu0 0.0
    %1608 = vmatpush1.msra.mxu0 0.0
    %1609 = vmatprep.subr.mxu0 0.0
    %1610 = vmatpush1.msra.mxu0 0.0
    %1611 = vmatprep.subr.mxu0 0.0
    %1612 = vmatpush1.msra.mxu0 0.0
    %1613 = vmatprep.subr.mxu0 0.0
    %1614 = vmatpush1.msra.mxu0 0.0
    %1615 = vmatprep.subr.mxu0 0.0
    %1616 = vmatpush1.msra.mxu0 0.0
    %1617 = vmatprep.subr.mxu0 0.0
    %1618 = vmatpush1.msra.mxu0 0.0
    %1619 = vmatprep.subr.mxu0 0.0
    %1620 = vmatpush1.msra.mxu0 0.0
    %1621 = vmatprep.subr.mxu0 0.0
    %1622 = vmatpush1.msra.mxu0 0.0
    %1623 = vmatprep.subr.mxu0 0.0
    %1624 = vmatpush1.msra.mxu0 0.0
    %1625 = vmatprep.subr.mxu0 0.0
    %1626 = vmatpush1.msra.mxu0 0.0
    %1627 = vmatprep.subr.mxu0 0.0
    %1628 = vmatpush1.msra.mxu0 0.0
    %1629 = vmatprep.subr.mxu0 0.0
    %1630 = vmatpush1.msra.mxu0 0.0
    %1631 = vmatprep.subr.mxu0 0.0
    %1632 = vmatpush1.msra.mxu0 0.0
    %1633 = vmatprep.subr.mxu0 0.0
    %1634 = vmatpush1.msra.mxu0 0.0
    %1635 = vmatprep.mubr.f32.mxu0 0.0
    %1636 = vmatmul.mubr.f32.gmra.mrb[0].mxu0 %v1569
    %v1637 = vpop.f32.mrb[0].mxu0
    %v1638 = vadd.f32 0.0, %v1637
    %v1639 = vpop.f32.mrb[0].mxu0
    %1640 = vdwg.mxu0
    %v1642 = vrot.slane %v1638, 2
    %v1644 = vadd.f32 %v1227, %v1642
    %v1645 = vxor.u32 %v1644, 2147483648
    %v1646 = vmul.f32 %v1645, 1.442695
    %v1647 = vpow.pop %v1646
    %v1648 = vadd.f32 %v1647, 1.0
    %v1649 = vrcp.pop %v1648
    %v1650 = vmul.f32 1.0, %v1649
    %v1651 = vadd.f32 %v1638, %v1316
    %v1653 = vrot.slane %v1651, 2
    %1654 = vrot.lane.b32.xlu0 %v1653, 32
    %v1655 = vpop.permute.xlu0 %1654
    %v1657 = vmul.f32 %v1650, %v1655
    %1659 = vrot.lane.b32.xlu0 %v1657, 96
    %v1660 = vpop.permute.xlu0 %1659
    %v1662 = vadd.f32 %v1227, %v1660
    %v1663 = vtanh.pop %v1662
    %v1665 = vrot.slane %v1663, 2
    %v1667 = vsub.f32 %v1565, %v1665
    %v1669 = vrot.slane %v1667, 6
    %1670 = vrot.lane.b32.xlu0 %v1669, 64
    %v1671 = vpop.permute.xlu0 %1670
    %v1673 = vmul.f32 %v1650, %v1671
    %1675 = vrot.lane.b32.xlu0 %v1673, 64
    %v1676 = vpop.permute.xlu0 %1675
    %v1678 = vadd.f32 %v1663, %v1676
    %1679 = vst.msk [vmem:[#allocation2] sm:$0xc0] %vm683, %v1678
    %v1681 = vrot.slane %v1678, 6
    %v1682 = vsel %vm151, %v1681, 0
    %1684 = vmatprep.subr.mxu0 0.0
    %1685 = vmatpush1.msra.mxu0 %v1138
    %1686 = vmatprep.subr.mxu0 0.0
    %1687 = vmatpush1.msra.mxu0 %v1139
    %1688 = vmatprep.subr.mxu0 0.0
    %1689 = vmatpush1.msra.mxu0 %v1140
    %1690 = vmatprep.subr.mxu0 0.0
    %1691 = vmatpush1.msra.mxu0 %v1141
    %1692 = vmatprep.subr.mxu0 0.0
    %1693 = vmatpush1.msra.mxu0 0.0
    %1694 = vmatprep.subr.mxu0 0.0
    %1695 = vmatpush1.msra.mxu0 0.0
    %1696 = vmatprep.subr.mxu0 0.0
    %1697 = vmatpush1.msra.mxu0 0.0
    %1698 = vmatprep.subr.mxu0 0.0
    %1699 = vmatpush1.msra.mxu0 0.0
    %1700 = vmatprep.subr.mxu0 0.0
    %1701 = vmatpush1.msra.mxu0 0.0
    %1702 = vmatprep.subr.mxu0 0.0
    %1703 = vmatpush1.msra.mxu0 0.0
    %1704 = vmatprep.subr.mxu0 0.0
    %1705 = vmatpush1.msra.mxu0 0.0
    %1706 = vmatprep.subr.mxu0 0.0
    %1707 = vmatpush1.msra.mxu0 0.0
    %1708 = vmatprep.subr.mxu0 0.0
    %1709 = vmatpush1.msra.mxu0 0.0
    %1710 = vmatprep.subr.mxu0 0.0
    %1711 = vmatpush1.msra.mxu0 0.0
    %1712 = vmatprep.subr.mxu0 0.0
    %1713 = vmatpush1.msra.mxu0 0.0
    %1714 = vmatprep.subr.mxu0 0.0
    %1715 = vmatpush1.msra.mxu0 0.0
    %1716 = vmatprep.subr.mxu0 0.0
    %1717 = vmatpush1.msra.mxu0 0.0
    %1718 = vmatprep.subr.mxu0 0.0
    %1719 = vmatpush1.msra.mxu0 0.0
    %1720 = vmatprep.subr.mxu0 0.0
    %1721 = vmatpush1.msra.mxu0 0.0
    %1722 = vmatprep.subr.mxu0 0.0
    %1723 = vmatpush1.msra.mxu0 0.0
    %1724 = vmatprep.subr.mxu0 0.0
    %1725 = vmatpush1.msra.mxu0 0.0
    %1726 = vmatprep.subr.mxu0 0.0
    %1727 = vmatpush1.msra.mxu0 0.0
    %1728 = vmatprep.subr.mxu0 0.0
    %1729 = vmatpush1.msra.mxu0 0.0
    %1730 = vmatprep.subr.mxu0 0.0
    %1731 = vmatpush1.msra.mxu0 0.0
    %1732 = vmatprep.subr.mxu0 0.0
    %1733 = vmatpush1.msra.mxu0 0.0
    %1734 = vmatprep.subr.mxu0 0.0
    %1735 = vmatpush1.msra.mxu0 0.0
    %1736 = vmatprep.subr.mxu0 0.0
    %1737 = vmatpush1.msra.mxu0 0.0
    %1738 = vmatprep.subr.mxu0 0.0
    %1739 = vmatpush1.msra.mxu0 0.0
    %1740 = vmatprep.subr.mxu0 0.0
    %1741 = vmatpush1.msra.mxu0 0.0
    %1742 = vmatprep.subr.mxu0 0.0
    %1743 = vmatpush1.msra.mxu0 0.0
    %1744 = vmatprep.subr.mxu0 0.0
    %1745 = vmatpush1.msra.mxu0 0.0
    %1746 = vmatprep.subr.mxu0 0.0
    %1747 = vmatpush1.msra.mxu0 0.0
    %1748 = vmatprep.mubr.f32.mxu0 0.0
    %1749 = vmatmul.mubr.f32.gmra.mrb[0].mxu0 %v1682
    %v1750 = vpop.f32.mrb[0].mxu0
    %v1751 = vadd.f32 0.0, %v1750
    %v1752 = vpop.f32.mrb[0].mxu0
    %1753 = vdwg.mxu0
    %v1754 = vadd.f32 %v1232, %v1751
    %v1755 = vxor.u32 %v1754, 2147483648
    %v1756 = vmul.f32 %v1755, 1.442695
    %v1757 = vpow.pop %v1756
    %v1758 = vadd.f32 %v1757, 1.0
    %v1759 = vrcp.pop %v1758
    %v1760 = vmul.f32 1.0, %v1759
    %v1761 = vadd.f32 %v1751, %v1316
    %1763 = vrot.lane.b32.xlu0 %v1761, 32
    %v1764 = vpop.permute.xlu0 %1763
    %v1766 = vmul.f32 %v1760, %v1764
    %1768 = vrot.lane.b32.xlu0 %v1766, 96
    %v1769 = vpop.permute.xlu0 %1768
    %v1771 = vadd.f32 %v1232, %v1769
    %v1772 = vtanh.pop %v1771
    %v1774 = vrot.slane %v1772, 2
    %v1776 = vsub.f32 %v1678, %v1774
    %v1778 = vrot.slane %v1776, 6
    %1779 = vrot.lane.b32.xlu0 %v1778, 64
    %v1780 = vpop.permute.xlu0 %1779
    %v1782 = vmul.f32 %v1760, %v1780
    %1784 = vrot.lane.b32.xlu0 %v1782, 64
    %v1785 = vpop.permute.xlu0 %1784
    %v1787 = vadd.f32 %v1772, %v1785
    %1788 = vst.msk [vmem:[#allocation2 + $0x8] sm:$0x3] %vm342, %v1787
    %v1790 = vsel %vm151, %v1787, 0
    %1792 = vmatprep.subr.mxu0 0.0
    %1793 = vmatpush1.msra.mxu0 %v1138
    %1794 = vmatprep.subr.mxu0 0.0
    %1795 = vmatpush1.msra.mxu0 %v1139
    %1796 = vmatprep.subr.mxu0 0.0
    %1797 = vmatpush1.msra.mxu0 %v1140
    %1798 = vmatprep.subr.mxu0 0.0
    %1799 = vmatpush1.msra.mxu0 %v1141
    %1800 = vmatprep.subr.mxu0 0.0
    %1801 = vmatpush1.msra.mxu0 0.0
    %1802 = vmatprep.subr.mxu0 0.0
    %1803 = vmatpush1.msra.mxu0 0.0
    %1804 = vmatprep.subr.mxu0 0.0
    %1805 = vmatpush1.msra.mxu0 0.0
    %1806 = vmatprep.subr.mxu0 0.0
    %1807 = vmatpush1.msra.mxu0 0.0
    %1808 = vmatprep.subr.mxu0 0.0
    %1809 = vmatpush1.msra.mxu0 0.0
    %1810 = vmatprep.subr.mxu0 0.0
    %1811 = vmatpush1.msra.mxu0 0.0
    %1812 = vmatprep.subr.mxu0 0.0
    %1813 = vmatpush1.msra.mxu0 0.0
    %1814 = vmatprep.subr.mxu0 0.0
    %1815 = vmatpush1.msra.mxu0 0.0
    %1816 = vmatprep.subr.mxu0 0.0
    %1817 = vmatpush1.msra.mxu0 0.0
    %1818 = vmatprep.subr.mxu0 0.0
    %1819 = vmatpush1.msra.mxu0 0.0
    %1820 = vmatprep.subr.mxu0 0.0
    %1821 = vmatpush1.msra.mxu0 0.0
    %1822 = vmatprep.subr.mxu0 0.0
    %1823 = vmatpush1.msra.mxu0 0.0
    %1824 = vmatprep.subr.mxu0 0.0
    %1825 = vmatpush1.msra.mxu0 0.0
    %1826 = vmatprep.subr.mxu0 0.0
    %1827 = vmatpush1.msra.mxu0 0.0
    %1828 = vmatprep.subr.mxu0 0.0
    %1829 = vmatpush1.msra.mxu0 0.0
    %1830 = vmatprep.subr.mxu0 0.0
    %1831 = vmatpush1.msra.mxu0 0.0
    %1832 = vmatprep.subr.mxu0 0.0
    %1833 = vmatpush1.msra.mxu0 0.0
    %1834 = vmatprep.subr.mxu0 0.0
    %1835 = vmatpush1.msra.mxu0 0.0
    %1836 = vmatprep.subr.mxu0 0.0
    %1837 = vmatpush1.msra.mxu0 0.0
    %1838 = vmatprep.subr.mxu0 0.0
    %1839 = vmatpush1.msra.mxu0 0.0
    %1840 = vmatprep.subr.mxu0 0.0
    %1841 = vmatpush1.msra.mxu0 0.0
    %1842 = vmatprep.subr.mxu0 0.0
    %1843 = vmatpush1.msra.mxu0 0.0
    %1844 = vmatprep.subr.mxu0 0.0
    %1845 = vmatpush1.msra.mxu0 0.0
    %1846 = vmatprep.subr.mxu0 0.0
    %1847 = vmatpush1.msra.mxu0 0.0
    %1848 = vmatprep.subr.mxu0 0.0
    %1849 = vmatpush1.msra.mxu0 0.0
    %1850 = vmatprep.subr.mxu0 0.0
    %1851 = vmatpush1.msra.mxu0 0.0
    %1852 = vmatprep.subr.mxu0 0.0
    %1853 = vmatpush1.msra.mxu0 0.0
    %1854 = vmatprep.subr.mxu0 0.0
    %1855 = vmatpush1.msra.mxu0 0.0
    %1856 = vmatprep.mubr.f32.mxu0 0.0
    %1857 = vmatmul.mubr.f32.gmra.mrb[0].mxu0 %v1790
    %v1858 = vpop.f32.mrb[0].mxu0
    %v1859 = vadd.f32 0.0, %v1858
    %v1860 = vpop.f32.mrb[0].mxu0
    %1861 = vdwg.mxu0
    %v1863 = vrot.slane %v1859, 6
    %v1865 = vadd.f32 %v1232, %v1863
    %v1866 = vxor.u32 %v1865, 2147483648
    %v1867 = vmul.f32 %v1866, 1.442695
    %v1868 = vpow.pop %v1867
    %v1869 = vadd.f32 %v1868, 1.0
    %v1870 = vrcp.pop %v1869
    %v1871 = vmul.f32 1.0, %v1870
    %v1872 = vadd.f32 %v1859, %v1316
    %v1874 = vrot.slane %v1872, 6
    %1875 = vrot.lane.b32.xlu0 %v1874, 32
    %v1876 = vpop.permute.xlu0 %1875
    %v1878 = vmul.f32 %v1871, %v1876
    %1880 = vrot.lane.b32.xlu0 %v1878, 96
    %v1881 = vpop.permute.xlu0 %1880
    %v1883 = vadd.f32 %v1232, %v1881
    %v1884 = vtanh.pop %v1883
    %v1886 = vrot.slane %v1884, 2
    %v1888 = vsub.f32 %v1787, %v1886
    %v1890 = vrot.slane %v1888, 6
    %1891 = vrot.lane.b32.xlu0 %v1890, 64
    %v1892 = vpop.permute.xlu0 %1891
    %v1894 = vmul.f32 %v1871, %v1892
    %1896 = vrot.lane.b32.xlu0 %v1894, 64
    %v1897 = vpop.permute.xlu0 %1896
    %v1899 = vadd.f32 %v1884, %v1897
    %1900 = vst.msk [vmem:[#allocation2 + $0x8] sm:$0xc] %vm455, %v1899
    %v1902 = vrot.slane %v1899, 2
    %v1903 = vsel %vm151, %v1902, 0
    %1905 = vmatprep.subr.mxu0 0.0
    %1906 = vmatpush1.msra.mxu0 %v1138
    %1907 = vmatprep.subr.mxu0 0.0
    %1908 = vmatpush1.msra.mxu0 %v1139
    %1909 = vmatprep.subr.mxu0 0.0
    %1910 = vmatpush1.msra.mxu0 %v1140
    %1911 = vmatprep.subr.mxu0 0.0
    %1912 = vmatpush1.msra.mxu0 %v1141
    %1913 = vmatprep.subr.mxu0 0.0
    %1914 = vmatpush1.msra.mxu0 0.0
    %1915 = vmatprep.subr.mxu0 0.0
    %1916 = vmatpush1.msra.mxu0 0.0
    %1917 = vmatprep.subr.mxu0 0.0
    %1918 = vmatpush1.msra.mxu0 0.0
    %1919 = vmatprep.subr.mxu0 0.0
    %1920 = vmatpush1.msra.mxu0 0.0
    %1921 = vmatprep.subr.mxu0 0.0
    %1922 = vmatpush1.msra.mxu0 0.0
    %1923 = vmatprep.subr.mxu0 0.0
    %1924 = vmatpush1.msra.mxu0 0.0
    %1925 = vmatprep.subr.mxu0 0.0
    %1926 = vmatpush1.msra.mxu0 0.0
    %1927 = vmatprep.subr.mxu0 0.0
    %1928 = vmatpush1.msra.mxu0 0.0
    %1929 = vmatprep.subr.mxu0 0.0
    %1930 = vmatpush1.msra.mxu0 0.0
    %1931 = vmatprep.subr.mxu0 0.0
    %1932 = vmatpush1.msra.mxu0 0.0
    %1933 = vmatprep.subr.mxu0 0.0
    %1934 = vmatpush1.msra.mxu0 0.0
    %1935 = vmatprep.subr.mxu0 0.0
    %1936 = vmatpush1.msra.mxu0 0.0
    %1937 = vmatprep.subr.mxu0 0.0
    %1938 = vmatpush1.msra.mxu0 0.0
    %1939 = vmatprep.subr.mxu0 0.0
    %1940 = vmatpush1.msra.mxu0 0.0
    %1941 = vmatprep.subr.mxu0 0.0
    %1942 = vmatpush1.msra.mxu0 0.0
    %1943 = vmatprep.subr.mxu0 0.0
    %1944 = vmatpush1.msra.mxu0 0.0
    %1945 = vmatprep.subr.mxu0 0.0
    %1946 = vmatpush1.msra.mxu0 0.0
    %1947 = vmatprep.subr.mxu0 0.0
    %1948 = vmatpush1.msra.mxu0 0.0
    %1949 = vmatprep.subr.mxu0 0.0
    %1950 = vmatpush1.msra.mxu0 0.0
    %1951 = vmatprep.subr.mxu0 0.0
    %1952 = vmatpush1.msra.mxu0 0.0
    %1953 = vmatprep.subr.mxu0 0.0
    %1954 = vmatpush1.msra.mxu0 0.0
    %1955 = vmatprep.subr.mxu0 0.0
    %1956 = vmatpush1.msra.mxu0 0.0
    %1957 = vmatprep.subr.mxu0 0.0
    %1958 = vmatpush1.msra.mxu0 0.0
    %1959 = vmatprep.subr.mxu0 0.0
    %1960 = vmatpush1.msra.mxu0 0.0
    %1961 = vmatprep.subr.mxu0 0.0
    %1962 = vmatpush1.msra.mxu0 0.0
    %1963 = vmatprep.subr.mxu0 0.0
    %1964 = vmatpush1.msra.mxu0 0.0
    %1965 = vmatprep.subr.mxu0 0.0
    %1966 = vmatpush1.msra.mxu0 0.0
    %1967 = vmatprep.subr.mxu0 0.0
    %1968 = vmatpush1.msra.mxu0 0.0
    %1969 = vmatprep.mubr.f32.mxu0 0.0
    %1970 = vmatmul.mubr.f32.gmra.mrb[0].mxu0 %v1903
    %v1971 = vpop.f32.mrb[0].mxu0
    %v1972 = vadd.f32 0.0, %v1971
    %v1973 = vpop.f32.mrb[0].mxu0
    %1974 = vdwg.mxu0
    %v1976 = vrot.slane %v1972, 4
    %v1978 = vadd.f32 %v1232, %v1976
    %v1979 = vxor.u32 %v1978, 2147483648
    %v1980 = vmul.f32 %v1979, 1.442695
    %v1981 = vpow.pop %v1980
    %v1982 = vadd.f32 %v1981, 1.0
    %v1983 = vrcp.pop %v1982
    %v1984 = vmul.f32 1.0, %v1983
    %v1985 = vadd.f32 %v1972, %v1316
    %v1987 = vrot.slane %v1985, 4
    %1988 = vrot.lane.b32.xlu0 %v1987, 32
    %v1989 = vpop.permute.xlu0 %1988
    %v1991 = vmul.f32 %v1984, %v1989
    %1993 = vrot.lane.b32.xlu0 %v1991, 96
    %v1994 = vpop.permute.xlu0 %1993
    %v1996 = vadd.f32 %v1232, %v1994
    %v1997 = vtanh.pop %v1996
    %v1999 = vrot.slane %v1997, 2
    %v2001 = vsub.f32 %v1899, %v1999
    %v2003 = vrot.slane %v2001, 6
    %2004 = vrot.lane.b32.xlu0 %v2003, 64
    %v2005 = vpop.permute.xlu0 %2004
    %v2007 = vmul.f32 %v1984, %v2005
    %2009 = vrot.lane.b32.xlu0 %v2007, 64
    %v2010 = vpop.permute.xlu0 %2009
    %v2012 = vadd.f32 %v1997, %v2010
    %2013 = vst.msk [vmem:[#allocation2 + $0x8] sm:$0x30] %vm569, %v2012
    %v2015 = vrot.slane %v2012, 4
    %v2016 = vsel %vm151, %v2015, 0
    %2018 = vmatprep.subr.mxu0 0.0
    %2019 = vmatpush1.msra.mxu0 %v1138
    %2020 = vmatprep.subr.mxu0 0.0
    %2021 = vmatpush1.msra.mxu0 %v1139
    %2022 = vmatprep.subr.mxu0 0.0
    %2023 = vmatpush1.msra.mxu0 %v1140
    %2024 = vmatprep.subr.mxu0 0.0
    %2025 = vmatpush1.msra.mxu0 %v1141
    %2026 = vmatprep.subr.mxu0 0.0
    %2027 = vmatpush1.msra.mxu0 0.0
    %2028 = vmatprep.subr.mxu0 0.0
    %2029 = vmatpush1.msra.mxu0 0.0
    %2030 = vmatprep.subr.mxu0 0.0
    %2031 = vmatpush1.msra.mxu0 0.0
    %2032 = vmatprep.subr.mxu0 0.0
    %2033 = vmatpush1.msra.mxu0 0.0
    %2034 = vmatprep.subr.mxu0 0.0
    %2035 = vmatpush1.msra.mxu0 0.0
    %2036 = vmatprep.subr.mxu0 0.0
    %2037 = vmatpush1.msra.mxu0 0.0
    %2038 = vmatprep.subr.mxu0 0.0
    %2039 = vmatpush1.msra.mxu0 0.0
    %2040 = vmatprep.subr.mxu0 0.0
    %2041 = vmatpush1.msra.mxu0 0.0
    %2042 = vmatprep.subr.mxu0 0.0
    %2043 = vmatpush1.msra.mxu0 0.0
    %2044 = vmatprep.subr.mxu0 0.0
    %2045 = vmatpush1.msra.mxu0 0.0
    %2046 = vmatprep.subr.mxu0 0.0
    %2047 = vmatpush1.msra.mxu0 0.0
    %2048 = vmatprep.subr.mxu0 0.0
    %2049 = vmatpush1.msra.mxu0 0.0
    %2050 = vmatprep.subr.mxu0 0.0
    %2051 = vmatpush1.msra.mxu0 0.0
    %2052 = vmatprep.subr.mxu0 0.0
    %2053 = vmatpush1.msra.mxu0 0.0
    %2054 = vmatprep.subr.mxu0 0.0
    %2055 = vmatpush1.msra.mxu0 0.0
    %2056 = vmatprep.subr.mxu0 0.0
    %2057 = vmatpush1.msra.mxu0 0.0
    %2058 = vmatprep.subr.mxu0 0.0
    %2059 = vmatpush1.msra.mxu0 0.0
    %2060 = vmatprep.subr.mxu0 0.0
    %2061 = vmatpush1.msra.mxu0 0.0
    %2062 = vmatprep.subr.mxu0 0.0
    %2063 = vmatpush1.msra.mxu0 0.0
    %2064 = vmatprep.subr.mxu0 0.0
    %2065 = vmatpush1.msra.mxu0 0.0
    %2066 = vmatprep.subr.mxu0 0.0
    %2067 = vmatpush1.msra.mxu0 0.0
    %2068 = vmatprep.subr.mxu0 0.0
    %2069 = vmatpush1.msra.mxu0 0.0
    %2070 = vmatprep.subr.mxu0 0.0
    %2071 = vmatpush1.msra.mxu0 0.0
    %2072 = vmatprep.subr.mxu0 0.0
    %2073 = vmatpush1.msra.mxu0 0.0
    %2074 = vmatprep.subr.mxu0 0.0
    %2075 = vmatpush1.msra.mxu0 0.0
    %2076 = vmatprep.subr.mxu0 0.0
    %2077 = vmatpush1.msra.mxu0 0.0
    %2078 = vmatprep.subr.mxu0 0.0
    %2079 = vmatpush1.msra.mxu0 0.0
    %2080 = vmatprep.subr.mxu0 0.0
    %2081 = vmatpush1.msra.mxu0 0.0
    %2082 = vmatprep.mubr.f32.mxu0 0.0
    %2083 = vmatmul.mubr.f32.gmra.mrb[0].mxu0 %v2016
    %v2084 = vpop.f32.mrb[0].mxu0
    %v2085 = vadd.f32 0.0, %v2084
    %v2086 = vpop.f32.mrb[0].mxu0
    %2087 = vdwg.mxu0
    %v2089 = vrot.slane %v2085, 2
    %v2091 = vadd.f32 %v1232, %v2089
    %v2092 = vxor.u32 %v2091, 2147483648
    %v2093 = vmul.f32 %v2092, 1.442695
    %v2094 = vpow.pop %v2093
    %v2095 = vadd.f32 %v2094, 1.0
    %v2096 = vrcp.pop %v2095
    %v2097 = vmul.f32 1.0, %v2096
    %v2098 = vadd.f32 %v2085, %v1316
    %v2100 = vrot.slane %v2098, 2
    %2101 = vrot.lane.b32.xlu0 %v2100, 32
    %v2102 = vpop.permute.xlu0 %2101
    %v2104 = vmul.f32 %v2097, %v2102
    %2106 = vrot.lane.b32.xlu0 %v2104, 96
    %v2107 = vpop.permute.xlu0 %2106
    %v2109 = vadd.f32 %v1232, %v2107
    %v2110 = vtanh.pop %v2109
    %v2112 = vrot.slane %v2110, 2
    %v2114 = vsub.f32 %v2012, %v2112
    %v2116 = vrot.slane %v2114, 6
    %2117 = vrot.lane.b32.xlu0 %v2116, 64
    %v2118 = vpop.permute.xlu0 %2117
    %v2120 = vmul.f32 %v2097, %v2118
    %2122 = vrot.lane.b32.xlu0 %v2120, 64
    %v2123 = vpop.permute.xlu0 %2122
    %v2125 = vadd.f32 %v2110, %v2123
    %2126 = vst.msk [vmem:[#allocation2 + $0x8] sm:$0xc0] %vm683, %v2125
    %s2127 = scalar_lea.vmem [#allocation5], 64
    %v2128 = vld [vmem:[%s2127] sm:$0xff]
    %v2129 = vld [vmem:[%s2127 + $0x8] sm:$0xff]
    %v2130 = vld [vmem:[%s2127 + $0x10] sm:$0xff]
    %v2131 = vld [vmem:[%s2127 + $0x18] sm:$0xff]
    %s2132 = scalar_lea.vmem [#allocation8], 64
    %v2133 = vld [vmem:[%s2132] sm:$0xff]
    %v2134 = vld [vmem:[%s2132 + $0x8] sm:$0xff]
    %v2135 = vld [vmem:[%s2132 + $0x10] sm:$0xff]
    %v2136 = vld [vmem:[%s2132 + $0x18] sm:$0xff]
    %s2137 = scalar_lea.vmem %s4, 2
    %v2138 = vld [vmem:[%s2137] sm:$0x1]
    %s2139 = scalar_lea.vmem %s5, 2
    %v2140 = vld [vmem:[%s2139] sm:$0x1]
    %v2141 = vld [vmem:[#allocation2] sm:$0xff]
    %v2142 = vld [vmem:[#allocation2 + $0x8] sm:$0xff]
    %v2144 = vlaneseq
    %v2145 = vshrl.u32 %v2144, 7
    %v2146 = vsub.s32 0, %v2145
    %v2147 = vrot.slane %v2138, %v2146
    %v2150 = vsel %vm151, %v2141, 0
    %v2153 = vsel %vm151, %v2142, 0
    %2155 = vmatprep.subr.mxu0 0.0
    %2156 = vmatpush1.msra.mxu0 %v2128
    %2157 = vmatprep.subr.mxu0 0.0
    %2158 = vmatpush1.msra.mxu0 %v2129
    %2159 = vmatprep.subr.mxu0 0.0
    %2160 = vmatpush1.msra.mxu0 %v2130
    %2161 = vmatprep.subr.mxu0 0.0
    %2162 = vmatpush1.msra.mxu0 %v2131
    %2163 = vmatprep.subr.mxu0 0.0
    %2164 = vmatpush1.msra.mxu0 0.0
    %2165 = vmatprep.subr.mxu0 0.0
    %2166 = vmatpush1.msra.mxu0 0.0
    %2167 = vmatprep.subr.mxu0 0.0
    %2168 = vmatpush1.msra.mxu0 0.0
    %2169 = vmatprep.subr.mxu0 0.0
    %2170 = vmatpush1.msra.mxu0 0.0
    %2171 = vmatprep.subr.mxu0 0.0
    %2172 = vmatpush1.msra.mxu0 0.0
    %2173 = vmatprep.subr.mxu0 0.0
    %2174 = vmatpush1.msra.mxu0 0.0
    %2175 = vmatprep.subr.mxu0 0.0
    %2176 = vmatpush1.msra.mxu0 0.0
    %2177 = vmatprep.subr.mxu0 0.0
    %2178 = vmatpush1.msra.mxu0 0.0
    %2179 = vmatprep.subr.mxu0 0.0
    %2180 = vmatpush1.msra.mxu0 0.0
    %2181 = vmatprep.subr.mxu0 0.0
    %2182 = vmatpush1.msra.mxu0 0.0
    %2183 = vmatprep.subr.mxu0 0.0
    %2184 = vmatpush1.msra.mxu0 0.0
    %2185 = vmatprep.subr.mxu0 0.0
    %2186 = vmatpush1.msra.mxu0 0.0
    %2187 = vmatprep.subr.mxu0 0.0
    %2188 = vmatpush1.msra.mxu0 0.0
    %2189 = vmatprep.subr.mxu0 0.0
    %2190 = vmatpush1.msra.mxu0 0.0
    %2191 = vmatprep.subr.mxu0 0.0
    %2192 = vmatpush1.msra.mxu0 0.0
    %2193 = vmatprep.subr.mxu0 0.0
    %2194 = vmatpush1.msra.mxu0 0.0
    %2195 = vmatprep.subr.mxu0 0.0
    %2196 = vmatpush1.msra.mxu0 0.0
    %2197 = vmatprep.subr.mxu0 0.0
    %2198 = vmatpush1.msra.mxu0 0.0
    %2199 = vmatprep.subr.mxu0 0.0
    %2200 = vmatpush1.msra.mxu0 0.0
    %2201 = vmatprep.subr.mxu0 0.0
    %2202 = vmatpush1.msra.mxu0 0.0
    %2203 = vmatprep.subr.mxu0 0.0
    %2204 = vmatpush1.msra.mxu0 0.0
    %2205 = vmatprep.subr.mxu0 0.0
    %2206 = vmatpush1.msra.mxu0 0.0
    %2207 = vmatprep.subr.mxu0 0.0
    %2208 = vmatpush1.msra.mxu0 0.0
    %2209 = vmatprep.subr.mxu0 0.0
    %2210 = vmatpush1.msra.mxu0 0.0
    %2211 = vmatprep.subr.mxu0 0.0
    %2212 = vmatpush1.msra.mxu0 0.0
    %2213 = vmatprep.subr.mxu0 0.0
    %2214 = vmatpush1.msra.mxu0 0.0
    %2215 = vmatprep.subr.mxu0 0.0
    %2216 = vmatpush1.msra.mxu0 0.0
    %2217 = vmatprep.subr.mxu0 0.0
    %2218 = vmatpush1.msra.mxu0 0.0
    %2219 = vmatprep.mubr.f32.mxu0 0.0
    %2220 = vmatmul.mubr.f32.gmra.mrb[0].mxu0 %v2150
    %v2221 = vpop.f32.mrb[0].mxu0
    %v2222 = vadd.f32 %v2147, %v2221
    %v2223 = vpop.f32.mrb[0].mxu0
    %2224 = vmatprep.mubr.f32.mxu0 0.0
    %2225 = vmatmul.mubr.f32.gmra.mrb[0].mxu0 %v2153
    %v2226 = vpop.f32.mrb[0].mxu0
    %v2227 = vadd.f32 %v2147, %v2226
    %v2228 = vpop.f32.mrb[0].mxu0
    %2229 = vdwg.mxu0
    %2230 = vmatprep.subr.mxu0 0.0
    %2231 = vmatpush1.msra.mxu0 %v2133
    %2232 = vmatprep.subr.mxu0 0.0
    %2233 = vmatpush1.msra.mxu0 %v2134
    %2234 = vmatprep.subr.mxu0 0.0
    %2235 = vmatpush1.msra.mxu0 %v2135
    %2236 = vmatprep.subr.mxu0 0.0
    %2237 = vmatpush1.msra.mxu0 %v2136
    %2238 = vmatprep.subr.mxu0 0.0
    %2239 = vmatpush1.msra.mxu0 0.0
    %2240 = vmatprep.subr.mxu0 0.0
    %2241 = vmatpush1.msra.mxu0 0.0
    %2242 = vmatprep.subr.mxu0 0.0
    %2243 = vmatpush1.msra.mxu0 0.0
    %2244 = vmatprep.subr.mxu0 0.0
    %2245 = vmatpush1.msra.mxu0 0.0
    %2246 = vmatprep.subr.mxu0 0.0
    %2247 = vmatpush1.msra.mxu0 0.0
    %2248 = vmatprep.subr.mxu0 0.0
    %2249 = vmatpush1.msra.mxu0 0.0
    %2250 = vmatprep.subr.mxu0 0.0
    %2251 = vmatpush1.msra.mxu0 0.0
    %2252 = vmatprep.subr.mxu0 0.0
    %2253 = vmatpush1.msra.mxu0 0.0
    %2254 = vmatprep.subr.mxu0 0.0
    %2255 = vmatpush1.msra.mxu0 0.0
    %2256 = vmatprep.subr.mxu0 0.0
    %2257 = vmatpush1.msra.mxu0 0.0
    %2258 = vmatprep.subr.mxu0 0.0
    %2259 = vmatpush1.msra.mxu0 0.0
    %2260 = vmatprep.subr.mxu0 0.0
    %2261 = vmatpush1.msra.mxu0 0.0
    %2262 = vmatprep.subr.mxu0 0.0
    %2263 = vmatpush1.msra.mxu0 0.0
    %2264 = vmatprep.subr.mxu0 0.0
    %2265 = vmatpush1.msra.mxu0 0.0
    %2266 = vmatprep.subr.mxu0 0.0
    %2267 = vmatpush1.msra.mxu0 0.0
    %2268 = vmatprep.subr.mxu0 0.0
    %2269 = vmatpush1.msra.mxu0 0.0
    %2270 = vmatprep.subr.mxu0 0.0
    %2271 = vmatpush1.msra.mxu0 0.0
    %2272 = vmatprep.subr.mxu0 0.0
    %2273 = vmatpush1.msra.mxu0 0.0
    %2274 = vmatprep.subr.mxu0 0.0
    %2275 = vmatpush1.msra.mxu0 0.0
    %2276 = vmatprep.subr.mxu0 0.0
    %2277 = vmatpush1.msra.mxu0 0.0
    %2278 = vmatprep.subr.mxu0 0.0
    %2279 = vmatpush1.msra.mxu0 0.0
    %2280 = vmatprep.subr.mxu0 0.0
    %2281 = vmatpush1.msra.mxu0 0.0
    %2282 = vmatprep.subr.mxu0 0.0
    %2283 = vmatpush1.msra.mxu0 0.0
    %2284 = vmatprep.subr.mxu0 0.0
    %2285 = vmatpush1.msra.mxu0 0.0
    %2286 = vmatprep.subr.mxu0 0.0
    %2287 = vmatpush1.msra.mxu0 0.0
    %2288 = vmatprep.subr.mxu0 0.0
    %2289 = vmatpush1.msra.mxu0 0.0
    %2290 = vmatprep.subr.mxu0 0.0
    %2291 = vmatpush1.msra.mxu0 0.0
    %2292 = vmatprep.subr.mxu0 0.0
    %2293 = vmatpush1.msra.mxu0 0.0
    %2294 = vmatprep.mubr.f32.mxu0 0.0
    %2295 = vmatmul.mubr.f32.gmra.mrb[0].mxu0 %v234
    %v2296 = vpop.f32.mrb[0].mxu0
    %v2297 = vadd.f32 0.0, %v2296
    %v2298 = vpop.f32.mrb[0].mxu0
    %2299 = vdwg.mxu0
    %v2300 = vadd.f32 %v2222, %v2297
    %v2301 = vxor.u32 %v2300, 2147483648
    %v2302 = vmul.f32 %v2301, 1.442695
    %v2303 = vpow.pop %v2302
    %v2304 = vadd.f32 %v2303, 1.0
    %v2305 = vrcp.pop %v2304
    %v2306 = vmul.f32 1.0, %v2305
    %v2308 = vlaneseq
    %v2309 = vshrl.u32 %v2308, 7
    %v2310 = vsub.s32 0, %v2309
    %v2311 = vrot.slane %v2140, %v2310
    %v2313 = vadd.f32 %v2297, %v2311
    %2315 = vrot.lane.b32.xlu0 %v2313, 32
    %v2316 = vpop.permute.xlu0 %2315
    %v2318 = vmul.f32 %v2306, %v2316
    %2320 = vrot.lane.b32.xlu0 %v2318, 96
    %v2321 = vpop.permute.xlu0 %2320
    %v2323 = vadd.f32 %v2222, %v2321
    %v2324 = vtanh.pop %v2323
    %v2325 = vsub.f32 0.0, %v2324
    %2327 = vrot.lane.b32.xlu0 %v2325, 64
    %v2328 = vpop.permute.xlu0 %2327
    %v2330 = vmul.f32 %v2306, %v2328
    %2332 = vrot.lane.b32.xlu0 %v2330, 64
    %v2333 = vpop.permute.xlu0 %2332
    %v2335 = vadd.f32 %v2324, %v2333
    %v2337 = vsel %vm151, %v2335, 0
    %2339 = vmatprep.subr.mxu0 0.0
    %2340 = vmatpush1.msra.mxu0 %v2133
    %2341 = vmatprep.subr.mxu0 0.0
    %2342 = vmatpush1.msra.mxu0 %v2134
    %2343 = vmatprep.subr.mxu0 0.0
    %2344 = vmatpush1.msra.mxu0 %v2135
    %2345 = vmatprep.subr.mxu0 0.0
    %2346 = vmatpush1.msra.mxu0 %v2136
    %2347 = vmatprep.subr.mxu0 0.0
    %2348 = vmatpush1.msra.mxu0 0.0
    %2349 = vmatprep.subr.mxu0 0.0
    %2350 = vmatpush1.msra.mxu0 0.0
    %2351 = vmatprep.subr.mxu0 0.0
    %2352 = vmatpush1.msra.mxu0 0.0
    %2353 = vmatprep.subr.mxu0 0.0
    %2354 = vmatpush1.msra.mxu0 0.0
    %2355 = vmatprep.subr.mxu0 0.0
    %2356 = vmatpush1.msra.mxu0 0.0
    %2357 = vmatprep.subr.mxu0 0.0
    %2358 = vmatpush1.msra.mxu0 0.0
    %2359 = vmatprep.subr.mxu0 0.0
    %2360 = vmatpush1.msra.mxu0 0.0
    %2361 = vmatprep.subr.mxu0 0.0
    %2362 = vmatpush1.msra.mxu0 0.0
    %2363 = vmatprep.subr.mxu0 0.0
    %2364 = vmatpush1.msra.mxu0 0.0
    %2365 = vmatprep.subr.mxu0 0.0
    %2366 = vmatpush1.msra.mxu0 0.0
    %2367 = vmatprep.subr.mxu0 0.0
    %2368 = vmatpush1.msra.mxu0 0.0
    %2369 = vmatprep.subr.mxu0 0.0
    %2370 = vmatpush1.msra.mxu0 0.0
    %2371 = vmatprep.subr.mxu0 0.0
    %2372 = vmatpush1.msra.mxu0 0.0
    %2373 = vmatprep.subr.mxu0 0.0
    %2374 = vmatpush1.msra.mxu0 0.0
    %2375 = vmatprep.subr.mxu0 0.0
    %2376 = vmatpush1.msra.mxu0 0.0
    %2377 = vmatprep.subr.mxu0 0.0
    %2378 = vmatpush1.msra.mxu0 0.0
    %2379 = vmatprep.subr.mxu0 0.0
    %2380 = vmatpush1.msra.mxu0 0.0
    %2381 = vmatprep.subr.mxu0 0.0
    %2382 = vmatpush1.msra.mxu0 0.0
    %2383 = vmatprep.subr.mxu0 0.0
    %2384 = vmatpush1.msra.mxu0 0.0
    %2385 = vmatprep.subr.mxu0 0.0
    %2386 = vmatpush1.msra.mxu0 0.0
    %2387 = vmatprep.subr.mxu0 0.0
    %2388 = vmatpush1.msra.mxu0 0.0
    %2389 = vmatprep.subr.mxu0 0.0
    %2390 = vmatpush1.msra.mxu0 0.0
    %2391 = vmatprep.subr.mxu0 0.0
    %2392 = vmatpush1.msra.mxu0 0.0
    %2393 = vmatprep.subr.mxu0 0.0
    %2394 = vmatpush1.msra.mxu0 0.0
    %2395 = vmatprep.subr.mxu0 0.0
    %2396 = vmatpush1.msra.mxu0 0.0
    %2397 = vmatprep.subr.mxu0 0.0
    %2398 = vmatpush1.msra.mxu0 0.0
    %2399 = vmatprep.subr.mxu0 0.0
    %2400 = vmatpush1.msra.mxu0 0.0
    %2401 = vmatprep.subr.mxu0 0.0
    %2402 = vmatpush1.msra.mxu0 0.0
    %2403 = vmatprep.mubr.f32.mxu0 0.0
    %2404 = vmatmul.mubr.f32.gmra.mrb[0].mxu0 %v2337
    %v2405 = vpop.f32.mrb[0].mxu0
    %v2406 = vadd.f32 0.0, %v2405
    %v2407 = vpop.f32.mrb[0].mxu0
    %2408 = vdwg.mxu0
    %v2410 = vrot.slane %v2406, 6
    %v2412 = vadd.f32 %v2222, %v2410
    %v2413 = vxor.u32 %v2412, 2147483648
    %v2414 = vmul.f32 %v2413, 1.442695
    %v2415 = vpow.pop %v2414
    %v2416 = vadd.f32 %v2415, 1.0
    %v2417 = vrcp.pop %v2416
    %v2418 = vmul.f32 1.0, %v2417
    %v2419 = vadd.f32 %v2406, %v2311
    %v2421 = vrot.slane %v2419, 6
    %2422 = vrot.lane.b32.xlu0 %v2421, 32
    %v2423 = vpop.permute.xlu0 %2422
    %v2425 = vmul.f32 %v2418, %v2423
    %2427 = vrot.lane.b32.xlu0 %v2425, 96
    %v2428 = vpop.permute.xlu0 %2427
    %v2430 = vadd.f32 %v2222, %v2428
    %v2431 = vtanh.pop %v2430
    %v2433 = vrot.slane %v2431, 2
    %v2435 = vsub.f32 %v2335, %v2433
    %v2437 = vrot.slane %v2435, 6
    %2438 = vrot.lane.b32.xlu0 %v2437, 64
    %v2439 = vpop.permute.xlu0 %2438
    %v2441 = vmul.f32 %v2418, %v2439
    %2443 = vrot.lane.b32.xlu0 %v2441, 64
    %v2444 = vpop.permute.xlu0 %2443
    %v2446 = vadd.f32 %v2431, %v2444
    %v2448 = vrot.slane %v2446, 2
    %v2449 = vsel %vm151, %v2448, 0
    %2451 = vmatprep.subr.mxu0 0.0
    %2452 = vmatpush1.msra.mxu0 %v2133
    %2453 = vmatprep.subr.mxu0 0.0
    %2454 = vmatpush1.msra.mxu0 %v2134
    %2455 = vmatprep.subr.mxu0 0.0
    %2456 = vmatpush1.msra.mxu0 %v2135
    %2457 = vmatprep.subr.mxu0 0.0
    %2458 = vmatpush1.msra.mxu0 %v2136
    %2459 = vmatprep.subr.mxu0 0.0
    %2460 = vmatpush1.msra.mxu0 0.0
    %2461 = vmatprep.subr.mxu0 0.0
    %2462 = vmatpush1.msra.mxu0 0.0
    %2463 = vmatprep.subr.mxu0 0.0
    %2464 = vmatpush1.msra.mxu0 0.0
    %2465 = vmatprep.subr.mxu0 0.0
    %2466 = vmatpush1.msra.mxu0 0.0
    %2467 = vmatprep.subr.mxu0 0.0
    %2468 = vmatpush1.msra.mxu0 0.0
    %2469 = vmatprep.subr.mxu0 0.0
    %2470 = vmatpush1.msra.mxu0 0.0
    %2471 = vmatprep.subr.mxu0 0.0
    %2472 = vmatpush1.msra.mxu0 0.0
    %2473 = vmatprep.subr.mxu0 0.0
    %2474 = vmatpush1.msra.mxu0 0.0
    %2475 = vmatprep.subr.mxu0 0.0
    %2476 = vmatpush1.msra.mxu0 0.0
    %2477 = vmatprep.subr.mxu0 0.0
    %2478 = vmatpush1.msra.mxu0 0.0
    %2479 = vmatprep.subr.mxu0 0.0
    %2480 = vmatpush1.msra.mxu0 0.0
    %2481 = vmatprep.subr.mxu0 0.0
    %2482 = vmatpush1.msra.mxu0 0.0
    %2483 = vmatprep.subr.mxu0 0.0
    %2484 = vmatpush1.msra.mxu0 0.0
    %2485 = vmatprep.subr.mxu0 0.0
    %2486 = vmatpush1.msra.mxu0 0.0
    %2487 = vmatprep.subr.mxu0 0.0
    %2488 = vmatpush1.msra.mxu0 0.0
    %2489 = vmatprep.subr.mxu0 0.0
    %2490 = vmatpush1.msra.mxu0 0.0
    %2491 = vmatprep.subr.mxu0 0.0
    %2492 = vmatpush1.msra.mxu0 0.0
    %2493 = vmatprep.subr.mxu0 0.0
    %2494 = vmatpush1.msra.mxu0 0.0
    %2495 = vmatprep.subr.mxu0 0.0
    %2496 = vmatpush1.msra.mxu0 0.0
    %2497 = vmatprep.subr.mxu0 0.0
    %2498 = vmatpush1.msra.mxu0 0.0
    %2499 = vmatprep.subr.mxu0 0.0
    %2500 = vmatpush1.msra.mxu0 0.0
    %2501 = vmatprep.subr.mxu0 0.0
    %2502 = vmatpush1.msra.mxu0 0.0
    %2503 = vmatprep.subr.mxu0 0.0
    %2504 = vmatpush1.msra.mxu0 0.0
    %2505 = vmatprep.subr.mxu0 0.0
    %2506 = vmatpush1.msra.mxu0 0.0
    %2507 = vmatprep.subr.mxu0 0.0
    %2508 = vmatpush1.msra.mxu0 0.0
    %2509 = vmatprep.subr.mxu0 0.0
    %2510 = vmatpush1.msra.mxu0 0.0
    %2511 = vmatprep.subr.mxu0 0.0
    %2512 = vmatpush1.msra.mxu0 0.0
    %2513 = vmatprep.subr.mxu0 0.0
    %2514 = vmatpush1.msra.mxu0 0.0
    %2515 = vmatprep.mubr.f32.mxu0 0.0
    %2516 = vmatmul.mubr.f32.gmra.mrb[0].mxu0 %v2449
    %v2517 = vpop.f32.mrb[0].mxu0
    %v2518 = vadd.f32 0.0, %v2517
    %v2519 = vpop.f32.mrb[0].mxu0
    %2520 = vdwg.mxu0
    %v2522 = vrot.slane %v2518, 4
    %v2524 = vadd.f32 %v2222, %v2522
    %v2525 = vxor.u32 %v2524, 2147483648
    %v2526 = vmul.f32 %v2525, 1.442695
    %v2527 = vpow.pop %v2526
    %v2528 = vadd.f32 %v2527, 1.0
    %v2529 = vrcp.pop %v2528
    %v2530 = vmul.f32 1.0, %v2529
    %v2531 = vadd.f32 %v2518, %v2311
    %v2533 = vrot.slane %v2531, 4
    %2534 = vrot.lane.b32.xlu0 %v2533, 32
    %v2535 = vpop.permute.xlu0 %2534
    %v2537 = vmul.f32 %v2530, %v2535
    %2539 = vrot.lane.b32.xlu0 %v2537, 96
    %v2540 = vpop.permute.xlu0 %2539
    %v2542 = vadd.f32 %v2222, %v2540
    %v2543 = vtanh.pop %v2542
    %v2545 = vrot.slane %v2543, 2
    %v2547 = vsub.f32 %v2446, %v2545
    %v2549 = vrot.slane %v2547, 6
    %2550 = vrot.lane.b32.xlu0 %v2549, 64
    %v2551 = vpop.permute.xlu0 %2550
    %v2553 = vmul.f32 %v2530, %v2551
    %2555 = vrot.lane.b32.xlu0 %v2553, 64
    %v2556 = vpop.permute.xlu0 %2555
    %v2558 = vadd.f32 %v2543, %v2556
    %v2560 = vrot.slane %v2558, 4
    %v2561 = vsel %vm151, %v2560, 0
    %2563 = vmatprep.subr.mxu0 0.0
    %2564 = vmatpush1.msra.mxu0 %v2133
    %2565 = vmatprep.subr.mxu0 0.0
    %2566 = vmatpush1.msra.mxu0 %v2134
    %2567 = vmatprep.subr.mxu0 0.0
    %2568 = vmatpush1.msra.mxu0 %v2135
    %2569 = vmatprep.subr.mxu0 0.0
    %2570 = vmatpush1.msra.mxu0 %v2136
    %2571 = vmatprep.subr.mxu0 0.0
    %2572 = vmatpush1.msra.mxu0 0.0
    %2573 = vmatprep.subr.mxu0 0.0
    %2574 = vmatpush1.msra.mxu0 0.0
    %2575 = vmatprep.subr.mxu0 0.0
    %2576 = vmatpush1.msra.mxu0 0.0
    %2577 = vmatprep.subr.mxu0 0.0
    %2578 = vmatpush1.msra.mxu0 0.0
    %2579 = vmatprep.subr.mxu0 0.0
    %2580 = vmatpush1.msra.mxu0 0.0
    %2581 = vmatprep.subr.mxu0 0.0
    %2582 = vmatpush1.msra.mxu0 0.0
    %2583 = vmatprep.subr.mxu0 0.0
    %2584 = vmatpush1.msra.mxu0 0.0
    %2585 = vmatprep.subr.mxu0 0.0
    %2586 = vmatpush1.msra.mxu0 0.0
    %2587 = vmatprep.subr.mxu0 0.0
    %2588 = vmatpush1.msra.mxu0 0.0
    %2589 = vmatprep.subr.mxu0 0.0
    %2590 = vmatpush1.msra.mxu0 0.0
    %2591 = vmatprep.subr.mxu0 0.0
    %2592 = vmatpush1.msra.mxu0 0.0
    %2593 = vmatprep.subr.mxu0 0.0
    %2594 = vmatpush1.msra.mxu0 0.0
    %2595 = vmatprep.subr.mxu0 0.0
    %2596 = vmatpush1.msra.mxu0 0.0
    %2597 = vmatprep.subr.mxu0 0.0
    %2598 = vmatpush1.msra.mxu0 0.0
    %2599 = vmatprep.subr.mxu0 0.0
    %2600 = vmatpush1.msra.mxu0 0.0
    %2601 = vmatprep.subr.mxu0 0.0
    %2602 = vmatpush1.msra.mxu0 0.0
    %2603 = vmatprep.subr.mxu0 0.0
    %2604 = vmatpush1.msra.mxu0 0.0
    %2605 = vmatprep.subr.mxu0 0.0
    %2606 = vmatpush1.msra.mxu0 0.0
    %2607 = vmatprep.subr.mxu0 0.0
    %2608 = vmatpush1.msra.mxu0 0.0
    %2609 = vmatprep.subr.mxu0 0.0
    %2610 = vmatpush1.msra.mxu0 0.0
    %2611 = vmatprep.subr.mxu0 0.0
    %2612 = vmatpush1.msra.mxu0 0.0
    %2613 = vmatprep.subr.mxu0 0.0
    %2614 = vmatpush1.msra.mxu0 0.0
    %2615 = vmatprep.subr.mxu0 0.0
    %2616 = vmatpush1.msra.mxu0 0.0
    %2617 = vmatprep.subr.mxu0 0.0
    %2618 = vmatpush1.msra.mxu0 0.0
    %2619 = vmatprep.subr.mxu0 0.0
    %2620 = vmatpush1.msra.mxu0 0.0
    %2621 = vmatprep.subr.mxu0 0.0
    %2622 = vmatpush1.msra.mxu0 0.0
    %2623 = vmatprep.subr.mxu0 0.0
    %2624 = vmatpush1.msra.mxu0 0.0
    %2625 = vmatprep.subr.mxu0 0.0
    %2626 = vmatpush1.msra.mxu0 0.0
    %2627 = vmatprep.mubr.f32.mxu0 0.0
    %2628 = vmatmul.mubr.f32.gmra.mrb[0].mxu0 %v2561
    %v2629 = vpop.f32.mrb[0].mxu0
    %v2630 = vadd.f32 0.0, %v2629
    %v2631 = vpop.f32.mrb[0].mxu0
    %2632 = vdwg.mxu0
    %v2634 = vrot.slane %v2630, 2
    %v2636 = vadd.f32 %v2222, %v2634
    %v2637 = vxor.u32 %v2636, 2147483648
    %v2638 = vmul.f32 %v2637, 1.442695
    %v2639 = vpow.pop %v2638
    %v2640 = vadd.f32 %v2639, 1.0
    %v2641 = vrcp.pop %v2640
    %v2642 = vmul.f32 1.0, %v2641
    %v2643 = vadd.f32 %v2630, %v2311
    %v2645 = vrot.slane %v2643, 2
    %2646 = vrot.lane.b32.xlu0 %v2645, 32
    %v2647 = vpop.permute.xlu0 %2646
    %v2649 = vmul.f32 %v2642, %v2647
    %2651 = vrot.lane.b32.xlu0 %v2649, 96
    %v2652 = vpop.permute.xlu0 %2651
    %v2654 = vadd.f32 %v2222, %v2652
    %v2655 = vtanh.pop %v2654
    %v2657 = vrot.slane %v2655, 2
    %v2659 = vsub.f32 %v2558, %v2657
    %v2661 = vrot.slane %v2659, 6
    %2662 = vrot.lane.b32.xlu0 %v2661, 64
    %v2663 = vpop.permute.xlu0 %2662
    %v2665 = vmul.f32 %v2642, %v2663
    %2667 = vrot.lane.b32.xlu0 %v2665, 64
    %v2668 = vpop.permute.xlu0 %2667
    %v2670 = vadd.f32 %v2655, %v2668
    %v2672 = vrot.slane %v2670, 6
    %v2673 = vsel %vm151, %v2672, 0
    %2675 = vmatprep.subr.mxu0 0.0
    %2676 = vmatpush1.msra.mxu0 %v2133
    %2677 = vmatprep.subr.mxu0 0.0
    %2678 = vmatpush1.msra.mxu0 %v2134
    %2679 = vmatprep.subr.mxu0 0.0
    %2680 = vmatpush1.msra.mxu0 %v2135
    %2681 = vmatprep.subr.mxu0 0.0
    %2682 = vmatpush1.msra.mxu0 %v2136
    %2683 = vmatprep.subr.mxu0 0.0
    %2684 = vmatpush1.msra.mxu0 0.0
    %2685 = vmatprep.subr.mxu0 0.0
    %2686 = vmatpush1.msra.mxu0 0.0
    %2687 = vmatprep.subr.mxu0 0.0
    %2688 = vmatpush1.msra.mxu0 0.0
    %2689 = vmatprep.subr.mxu0 0.0
    %2690 = vmatpush1.msra.mxu0 0.0
    %2691 = vmatprep.subr.mxu0 0.0
    %2692 = vmatpush1.msra.mxu0 0.0
    %2693 = vmatprep.subr.mxu0 0.0
    %2694 = vmatpush1.msra.mxu0 0.0
    %2695 = vmatprep.subr.mxu0 0.0
    %2696 = vmatpush1.msra.mxu0 0.0
    %2697 = vmatprep.subr.mxu0 0.0
    %2698 = vmatpush1.msra.mxu0 0.0
    %2699 = vmatprep.subr.mxu0 0.0
    %2700 = vmatpush1.msra.mxu0 0.0
    %2701 = vmatprep.subr.mxu0 0.0
    %2702 = vmatpush1.msra.mxu0 0.0
    %2703 = vmatprep.subr.mxu0 0.0
    %2704 = vmatpush1.msra.mxu0 0.0
    %2705 = vmatprep.subr.mxu0 0.0
    %2706 = vmatpush1.msra.mxu0 0.0
    %2707 = vmatprep.subr.mxu0 0.0
    %2708 = vmatpush1.msra.mxu0 0.0
    %2709 = vmatprep.subr.mxu0 0.0
    %2710 = vmatpush1.msra.mxu0 0.0
    %2711 = vmatprep.subr.mxu0 0.0
    %2712 = vmatpush1.msra.mxu0 0.0
    %2713 = vmatprep.subr.mxu0 0.0
    %2714 = vmatpush1.msra.mxu0 0.0
    %2715 = vmatprep.subr.mxu0 0.0
    %2716 = vmatpush1.msra.mxu0 0.0
    %2717 = vmatprep.subr.mxu0 0.0
    %2718 = vmatpush1.msra.mxu0 0.0
    %2719 = vmatprep.subr.mxu0 0.0
    %2720 = vmatpush1.msra.mxu0 0.0
    %2721 = vmatprep.subr.mxu0 0.0
    %2722 = vmatpush1.msra.mxu0 0.0
    %2723 = vmatprep.subr.mxu0 0.0
    %2724 = vmatpush1.msra.mxu0 0.0
    %2725 = vmatprep.subr.mxu0 0.0
    %2726 = vmatpush1.msra.mxu0 0.0
    %2727 = vmatprep.subr.mxu0 0.0
    %2728 = vmatpush1.msra.mxu0 0.0
    %2729 = vmatprep.subr.mxu0 0.0
    %2730 = vmatpush1.msra.mxu0 0.0
    %2731 = vmatprep.subr.mxu0 0.0
    %2732 = vmatpush1.msra.mxu0 0.0
    %2733 = vmatprep.subr.mxu0 0.0
    %2734 = vmatpush1.msra.mxu0 0.0
    %2735 = vmatprep.subr.mxu0 0.0
    %2736 = vmatpush1.msra.mxu0 0.0
    %2737 = vmatprep.subr.mxu0 0.0
    %2738 = vmatpush1.msra.mxu0 0.0
    %2739 = vmatprep.mubr.f32.mxu0 0.0
    %2740 = vmatmul.mubr.f32.gmra.mrb[0].mxu0 %v2673
    %v2741 = vpop.f32.mrb[0].mxu0
    %v2742 = vadd.f32 0.0, %v2741
    %v2743 = vpop.f32.mrb[0].mxu0
    %2744 = vdwg.mxu0
    %v2745 = vadd.f32 %v2227, %v2742
    %v2746 = vxor.u32 %v2745, 2147483648
    %v2747 = vmul.f32 %v2746, 1.442695
    %v2748 = vpow.pop %v2747
    %v2749 = vadd.f32 %v2748, 1.0
    %v2750 = vrcp.pop %v2749
    %v2751 = vmul.f32 1.0, %v2750
    %v2752 = vadd.f32 %v2742, %v2311
    %2754 = vrot.lane.b32.xlu0 %v2752, 32
    %v2755 = vpop.permute.xlu0 %2754
    %v2757 = vmul.f32 %v2751, %v2755
    %2759 = vrot.lane.b32.xlu0 %v2757, 96
    %v2760 = vpop.permute.xlu0 %2759
    %v2762 = vadd.f32 %v2227, %v2760
    %v2763 = vtanh.pop %v2762
    %v2765 = vrot.slane %v2763, 2
    %v2767 = vsub.f32 %v2670, %v2765
    %v2769 = vrot.slane %v2767, 6
    %2770 = vrot.lane.b32.xlu0 %v2769, 64
    %v2771 = vpop.permute.xlu0 %2770
    %v2773 = vmul.f32 %v2751, %v2771
    %2775 = vrot.lane.b32.xlu0 %v2773, 64
    %v2776 = vpop.permute.xlu0 %2775
    %v2778 = vadd.f32 %v2763, %v2776
    %v2780 = vsel %vm151, %v2778, 0
    %2782 = vmatprep.subr.mxu0 0.0
    %2783 = vmatpush1.msra.mxu0 %v2133
    %2784 = vmatprep.subr.mxu0 0.0
    %2785 = vmatpush1.msra.mxu0 %v2134
    %2786 = vmatprep.subr.mxu0 0.0
    %2787 = vmatpush1.msra.mxu0 %v2135
    %2788 = vmatprep.subr.mxu0 0.0
    %2789 = vmatpush1.msra.mxu0 %v2136
    %2790 = vmatprep.subr.mxu0 0.0
    %2791 = vmatpush1.msra.mxu0 0.0
    %2792 = vmatprep.subr.mxu0 0.0
    %2793 = vmatpush1.msra.mxu0 0.0
    %2794 = vmatprep.subr.mxu0 0.0
    %2795 = vmatpush1.msra.mxu0 0.0
    %2796 = vmatprep.subr.mxu0 0.0
    %2797 = vmatpush1.msra.mxu0 0.0
    %2798 = vmatprep.subr.mxu0 0.0
    %2799 = vmatpush1.msra.mxu0 0.0
    %2800 = vmatprep.subr.mxu0 0.0
    %2801 = vmatpush1.msra.mxu0 0.0
    %2802 = vmatprep.subr.mxu0 0.0
    %2803 = vmatpush1.msra.mxu0 0.0
    %2804 = vmatprep.subr.mxu0 0.0
    %2805 = vmatpush1.msra.mxu0 0.0
    %2806 = vmatprep.subr.mxu0 0.0
    %2807 = vmatpush1.msra.mxu0 0.0
    %2808 = vmatprep.subr.mxu0 0.0
    %2809 = vmatpush1.msra.mxu0 0.0
    %2810 = vmatprep.subr.mxu0 0.0
    %2811 = vmatpush1.msra.mxu0 0.0
    %2812 = vmatprep.subr.mxu0 0.0
    %2813 = vmatpush1.msra.mxu0 0.0
    %2814 = vmatprep.subr.mxu0 0.0
    %2815 = vmatpush1.msra.mxu0 0.0
    %2816 = vmatprep.subr.mxu0 0.0
    %2817 = vmatpush1.msra.mxu0 0.0
    %2818 = vmatprep.subr.mxu0 0.0
    %2819 = vmatpush1.msra.mxu0 0.0
    %2820 = vmatprep.subr.mxu0 0.0
    %2821 = vmatpush1.msra.mxu0 0.0
    %2822 = vmatprep.subr.mxu0 0.0
    %2823 = vmatpush1.msra.mxu0 0.0
    %2824 = vmatprep.subr.mxu0 0.0
    %2825 = vmatpush1.msra.mxu0 0.0
    %2826 = vmatprep.subr.mxu0 0.0
    %2827 = vmatpush1.msra.mxu0 0.0
    %2828 = vmatprep.subr.mxu0 0.0
    %2829 = vmatpush1.msra.mxu0 0.0
    %2830 = vmatprep.subr.mxu0 0.0
    %2831 = vmatpush1.msra.mxu0 0.0
    %2832 = vmatprep.subr.mxu0 0.0
    %2833 = vmatpush1.msra.mxu0 0.0
    %2834 = vmatprep.subr.mxu0 0.0
    %2835 = vmatpush1.msra.mxu0 0.0
    %2836 = vmatprep.subr.mxu0 0.0
    %2837 = vmatpush1.msra.mxu0 0.0
    %2838 = vmatprep.subr.mxu0 0.0
    %2839 = vmatpush1.msra.mxu0 0.0
    %2840 = vmatprep.subr.mxu0 0.0
    %2841 = vmatpush1.msra.mxu0 0.0
    %2842 = vmatprep.subr.mxu0 0.0
    %2843 = vmatpush1.msra.mxu0 0.0
    %2844 = vmatprep.subr.mxu0 0.0
    %2845 = vmatpush1.msra.mxu0 0.0
    %2846 = vmatprep.mubr.f32.mxu0 0.0
    %2847 = vmatmul.mubr.f32.gmra.mrb[0].mxu0 %v2780
    %v2848 = vpop.f32.mrb[0].mxu0
    %v2849 = vadd.f32 0.0, %v2848
    %v2850 = vpop.f32.mrb[0].mxu0
    %2851 = vdwg.mxu0
    %v2853 = vrot.slane %v2849, 6
    %v2855 = vadd.f32 %v2227, %v2853
    %v2856 = vxor.u32 %v2855, 2147483648
    %v2857 = vmul.f32 %v2856, 1.442695
    %v2858 = vpow.pop %v2857
    %v2859 = vadd.f32 %v2858, 1.0
    %v2860 = vrcp.pop %v2859
    %v2861 = vmul.f32 1.0, %v2860
    %v2862 = vadd.f32 %v2849, %v2311
    %v2864 = vrot.slane %v2862, 6
    %2865 = vrot.lane.b32.xlu0 %v2864, 32
    %v2866 = vpop.permute.xlu0 %2865
    %v2868 = vmul.f32 %v2861, %v2866
    %2870 = vrot.lane.b32.xlu0 %v2868, 96
    %v2871 = vpop.permute.xlu0 %2870
    %v2873 = vadd.f32 %v2227, %v2871
    %v2874 = vtanh.pop %v2873
    %v2876 = vrot.slane %v2874, 2
    %v2878 = vsub.f32 %v2778, %v2876
    %v2880 = vrot.slane %v2878, 6
    %2881 = vrot.lane.b32.xlu0 %v2880, 64
    %v2882 = vpop.permute.xlu0 %2881
    %v2884 = vmul.f32 %v2861, %v2882
    %2886 = vrot.lane.b32.xlu0 %v2884, 64
    %v2887 = vpop.permute.xlu0 %2886
    %v2889 = vadd.f32 %v2874, %v2887
    %v2891 = vrot.slane %v2889, 2
    %v2892 = vsel %vm151, %v2891, 0
    %2894 = vmatprep.subr.mxu0 0.0
    %2895 = vmatpush1.msra.mxu0 %v2133
    %2896 = vmatprep.subr.mxu0 0.0
    %2897 = vmatpush1.msra.mxu0 %v2134
    %2898 = vmatprep.subr.mxu0 0.0
    %2899 = vmatpush1.msra.mxu0 %v2135
    %2900 = vmatprep.subr.mxu0 0.0
    %2901 = vmatpush1.msra.mxu0 %v2136
    %2902 = vmatprep.subr.mxu0 0.0
    %2903 = vmatpush1.msra.mxu0 0.0
    %2904 = vmatprep.subr.mxu0 0.0
    %2905 = vmatpush1.msra.mxu0 0.0
    %2906 = vmatprep.subr.mxu0 0.0
    %2907 = vmatpush1.msra.mxu0 0.0
    %2908 = vmatprep.subr.mxu0 0.0
    %2909 = vmatpush1.msra.mxu0 0.0
    %2910 = vmatprep.subr.mxu0 0.0
    %2911 = vmatpush1.msra.mxu0 0.0
    %2912 = vmatprep.subr.mxu0 0.0
    %2913 = vmatpush1.msra.mxu0 0.0
    %2914 = vmatprep.subr.mxu0 0.0
    %2915 = vmatpush1.msra.mxu0 0.0
    %2916 = vmatprep.subr.mxu0 0.0
    %2917 = vmatpush1.msra.mxu0 0.0
    %2918 = vmatprep.subr.mxu0 0.0
    %2919 = vmatpush1.msra.mxu0 0.0
    %2920 = vmatprep.subr.mxu0 0.0
    %2921 = vmatpush1.msra.mxu0 0.0
    %2922 = vmatprep.subr.mxu0 0.0
    %2923 = vmatpush1.msra.mxu0 0.0
    %2924 = vmatprep.subr.mxu0 0.0
    %2925 = vmatpush1.msra.mxu0 0.0
    %2926 = vmatprep.subr.mxu0 0.0
    %2927 = vmatpush1.msra.mxu0 0.0
    %2928 = vmatprep.subr.mxu0 0.0
    %2929 = vmatpush1.msra.mxu0 0.0
    %2930 = vmatprep.subr.mxu0 0.0
    %2931 = vmatpush1.msra.mxu0 0.0
    %2932 = vmatprep.subr.mxu0 0.0
    %2933 = vmatpush1.msra.mxu0 0.0
    %2934 = vmatprep.subr.mxu0 0.0
    %2935 = vmatpush1.msra.mxu0 0.0
    %2936 = vmatprep.subr.mxu0 0.0
    %2937 = vmatpush1.msra.mxu0 0.0
    %2938 = vmatprep.subr.mxu0 0.0
    %2939 = vmatpush1.msra.mxu0 0.0
    %2940 = vmatprep.subr.mxu0 0.0
    %2941 = vmatpush1.msra.mxu0 0.0
    %2942 = vmatprep.subr.mxu0 0.0
    %2943 = vmatpush1.msra.mxu0 0.0
    %2944 = vmatprep.subr.mxu0 0.0
    %2945 = vmatpush1.msra.mxu0 0.0
    %2946 = vmatprep.subr.mxu0 0.0
    %2947 = vmatpush1.msra.mxu0 0.0
    %2948 = vmatprep.subr.mxu0 0.0
    %2949 = vmatpush1.msra.mxu0 0.0
    %2950 = vmatprep.subr.mxu0 0.0
    %2951 = vmatpush1.msra.mxu0 0.0
    %2952 = vmatprep.subr.mxu0 0.0
    %2953 = vmatpush1.msra.mxu0 0.0
    %2954 = vmatprep.subr.mxu0 0.0
    %2955 = vmatpush1.msra.mxu0 0.0
    %2956 = vmatprep.subr.mxu0 0.0
    %2957 = vmatpush1.msra.mxu0 0.0
    %2958 = vmatprep.mubr.f32.mxu0 0.0
    %2959 = vmatmul.mubr.f32.gmra.mrb[0].mxu0 %v2892
    %v2960 = vpop.f32.mrb[0].mxu0
    %v2961 = vadd.f32 0.0, %v2960
    %v2962 = vpop.f32.mrb[0].mxu0
    %2963 = vdwg.mxu0
    %v2965 = vrot.slane %v2961, 4
    %v2967 = vadd.f32 %v2227, %v2965
    %v2968 = vxor.u32 %v2967, 2147483648
    %v2969 = vmul.f32 %v2968, 1.442695
    %v2970 = vpow.pop %v2969
    %v2971 = vadd.f32 %v2970, 1.0
    %v2972 = vrcp.pop %v2971
    %v2973 = vmul.f32 1.0, %v2972
    %v2974 = vadd.f32 %v2961, %v2311
    %v2976 = vrot.slane %v2974, 4
    %2977 = vrot.lane.b32.xlu0 %v2976, 32
    %v2978 = vpop.permute.xlu0 %2977
    %v2980 = vmul.f32 %v2973, %v2978
    %2982 = vrot.lane.b32.xlu0 %v2980, 96
    %v2983 = vpop.permute.xlu0 %2982
    %v2985 = vadd.f32 %v2227, %v2983
    %v2986 = vtanh.pop %v2985
    %v2988 = vrot.slane %v2986, 2
    %v2990 = vsub.f32 %v2889, %v2988
    %v2992 = vrot.slane %v2990, 6
    %2993 = vrot.lane.b32.xlu0 %v2992, 64
    %v2994 = vpop.permute.xlu0 %2993
    %v2996 = vmul.f32 %v2973, %v2994
    %2998 = vrot.lane.b32.xlu0 %v2996, 64
    %v2999 = vpop.permute.xlu0 %2998
    %v3001 = vadd.f32 %v2986, %v2999
    %v3003 = vrot.slane %v3001, 4
    %v3004 = vsel %vm151, %v3003, 0
    %3006 = vmatprep.subr.mxu0 0.0
    %3007 = vmatpush1.msra.mxu0 %v2133
    %3008 = vmatprep.subr.mxu0 0.0
    %3009 = vmatpush1.msra.mxu0 %v2134
    %3010 = vmatprep.subr.mxu0 0.0
    %3011 = vmatpush1.msra.mxu0 %v2135
    %3012 = vmatprep.subr.mxu0 0.0
    %3013 = vmatpush1.msra.mxu0 %v2136
    %3014 = vmatprep.subr.mxu0 0.0
    %3015 = vmatpush1.msra.mxu0 0.0
    %3016 = vmatprep.subr.mxu0 0.0
    %3017 = vmatpush1.msra.mxu0 0.0
    %3018 = vmatprep.subr.mxu0 0.0
    %3019 = vmatpush1.msra.mxu0 0.0
    %3020 = vmatprep.subr.mxu0 0.0
    %3021 = vmatpush1.msra.mxu0 0.0
    %3022 = vmatprep.subr.mxu0 0.0
    %3023 = vmatpush1.msra.mxu0 0.0
    %3024 = vmatprep.subr.mxu0 0.0
    %3025 = vmatpush1.msra.mxu0 0.0
    %3026 = vmatprep.subr.mxu0 0.0
    %3027 = vmatpush1.msra.mxu0 0.0
    %3028 = vmatprep.subr.mxu0 0.0
    %3029 = vmatpush1.msra.mxu0 0.0
    %3030 = vmatprep.subr.mxu0 0.0
    %3031 = vmatpush1.msra.mxu0 0.0
    %3032 = vmatprep.subr.mxu0 0.0
    %3033 = vmatpush1.msra.mxu0 0.0
    %3034 = vmatprep.subr.mxu0 0.0
    %3035 = vmatpush1.msra.mxu0 0.0
    %3036 = vmatprep.subr.mxu0 0.0
    %3037 = vmatpush1.msra.mxu0 0.0
    %3038 = vmatprep.subr.mxu0 0.0
    %3039 = vmatpush1.msra.mxu0 0.0
    %3040 = vmatprep.subr.mxu0 0.0
    %3041 = vmatpush1.msra.mxu0 0.0
    %3042 = vmatprep.subr.mxu0 0.0
    %3043 = vmatpush1.msra.mxu0 0.0
    %3044 = vmatprep.subr.mxu0 0.0
    %3045 = vmatpush1.msra.mxu0 0.0
    %3046 = vmatprep.subr.mxu0 0.0
    %3047 = vmatpush1.msra.mxu0 0.0
    %3048 = vmatprep.subr.mxu0 0.0
    %3049 = vmatpush1.msra.mxu0 0.0
    %3050 = vmatprep.subr.mxu0 0.0
    %3051 = vmatpush1.msra.mxu0 0.0
    %3052 = vmatprep.subr.mxu0 0.0
    %3053 = vmatpush1.msra.mxu0 0.0
    %3054 = vmatprep.subr.mxu0 0.0
    %3055 = vmatpush1.msra.mxu0 0.0
    %3056 = vmatprep.subr.mxu0 0.0
    %3057 = vmatpush1.msra.mxu0 0.0
    %3058 = vmatprep.subr.mxu0 0.0
    %3059 = vmatpush1.msra.mxu0 0.0
    %3060 = vmatprep.subr.mxu0 0.0
    %3061 = vmatpush1.msra.mxu0 0.0
    %3062 = vmatprep.subr.mxu0 0.0
    %3063 = vmatpush1.msra.mxu0 0.0
    %3064 = vmatprep.subr.mxu0 0.0
    %3065 = vmatpush1.msra.mxu0 0.0
    %3066 = vmatprep.subr.mxu0 0.0
    %3067 = vmatpush1.msra.mxu0 0.0
    %3068 = vmatprep.subr.mxu0 0.0
    %3069 = vmatpush1.msra.mxu0 0.0
    %3070 = vmatprep.mubr.f32.mxu0 0.0
    %3071 = vmatmul.mubr.f32.gmra.mrb[0].mxu0 %v3004
    %v3072 = vpop.f32.mrb[0].mxu0
    %v3073 = vadd.f32 0.0, %v3072
    %v3074 = vpop.f32.mrb[0].mxu0
    %3075 = vdwg.mxu0
    %v3077 = vrot.slane %v3073, 2
    %v3079 = vadd.f32 %v2227, %v3077
    %v3080 = vxor.u32 %v3079, 2147483648
    %v3081 = vmul.f32 %v3080, 1.442695
    %v3082 = vpow.pop %v3081
    %v3083 = vadd.f32 %v3082, 1.0
    %v3084 = vrcp.pop %v3083
    %v3085 = vmul.f32 1.0, %v3084
    %v3086 = vadd.f32 %v3073, %v2311
    %v3088 = vrot.slane %v3086, 2
    %3089 = vrot.lane.b32.xlu0 %v3088, 32
    %v3090 = vpop.permute.xlu0 %3089
    %v3092 = vmul.f32 %v3085, %v3090
    %3094 = vrot.lane.b32.xlu0 %v3092, 96
    %v3095 = vpop.permute.xlu0 %3094
    %v3097 = vadd.f32 %v2227, %v3095
    %v3098 = vtanh.pop %v3097
    %v3100 = vrot.slane %v3098, 2
    %v3102 = vsub.f32 %v3001, %v3100
    %v3104 = vrot.slane %v3102, 6
    %3105 = vrot.lane.b32.xlu0 %v3104, 64
    %v3106 = vpop.permute.xlu0 %3105
    %v3108 = vmul.f32 %v3085, %v3106
    %3110 = vrot.lane.b32.xlu0 %v3108, 64
    %v3111 = vpop.permute.xlu0 %3110
    %v3113 = vadd.f32 %v3098, %v3111
    %v3114 = vld [vmem:[%s6] sm:$0xff]
    %v3115 = vld [vmem:[%s6 + $0x8] sm:$0xff]
    %v3116 = vld [vmem:[%s6 + $0x10] sm:$0xff]
    %v3117 = vld [vmem:[%s6 + $0x18] sm:$0xff]
    %v3118 = vld [vmem:[%s7] sm:$0x1]
    %v3120 = vlaneseq
    %v3121 = vshrl.u32 %v3120, 7
    %v3122 = vsub.s32 0, %v3121
    %v3123 = vrot.slane %v3118, %v3122
    %v3126 = vrot.slane %v3113, 6
    %v3127 = vsel %vm151, %v3126, 0
    %3129 = vmatprep.subr.mxu0 0.0
    %3130 = vmatpush1.msra.mxu0 %v3114
    %3131 = vmatprep.subr.mxu0 0.0
    %3132 = vmatpush1.msra.mxu0 %v3115
    %3133 = vmatprep.subr.mxu0 0.0
    %3134 = vmatpush1.msra.mxu0 %v3116
    %3135 = vmatprep.subr.mxu0 0.0
    %3136 = vmatpush1.msra.mxu0 %v3117
    %3137 = vmatprep.subr.mxu0 0.0
    %3138 = vmatpush1.msra.mxu0 0.0
    %3139 = vmatprep.subr.mxu0 0.0
    %3140 = vmatpush1.msra.mxu0 0.0
    %3141 = vmatprep.subr.mxu0 0.0
    %3142 = vmatpush1.msra.mxu0 0.0
    %3143 = vmatprep.subr.mxu0 0.0
    %3144 = vmatpush1.msra.mxu0 0.0
    %3145 = vmatprep.subr.mxu0 0.0
    %3146 = vmatpush1.msra.mxu0 0.0
    %3147 = vmatprep.subr.mxu0 0.0
    %3148 = vmatpush1.msra.mxu0 0.0
    %3149 = vmatprep.subr.mxu0 0.0
    %3150 = vmatpush1.msra.mxu0 0.0
    %3151 = vmatprep.subr.mxu0 0.0
    %3152 = vmatpush1.msra.mxu0 0.0
    %3153 = vmatprep.subr.mxu0 0.0
    %3154 = vmatpush1.msra.mxu0 0.0
    %3155 = vmatprep.subr.mxu0 0.0
    %3156 = vmatpush1.msra.mxu0 0.0
    %3157 = vmatprep.subr.mxu0 0.0
    %3158 = vmatpush1.msra.mxu0 0.0
    %3159 = vmatprep.subr.mxu0 0.0
    %3160 = vmatpush1.msra.mxu0 0.0
    %3161 = vmatprep.subr.mxu0 0.0
    %3162 = vmatpush1.msra.mxu0 0.0
    %3163 = vmatprep.subr.mxu0 0.0
    %3164 = vmatpush1.msra.mxu0 0.0
    %3165 = vmatprep.subr.mxu0 0.0
    %3166 = vmatpush1.msra.mxu0 0.0
    %3167 = vmatprep.subr.mxu0 0.0
    %3168 = vmatpush1.msra.mxu0 0.0
    %3169 = vmatprep.subr.mxu0 0.0
    %3170 = vmatpush1.msra.mxu0 0.0
    %3171 = vmatprep.subr.mxu0 0.0
    %3172 = vmatpush1.msra.mxu0 0.0
    %3173 = vmatprep.subr.mxu0 0.0
    %3174 = vmatpush1.msra.mxu0 0.0
    %3175 = vmatprep.subr.mxu0 0.0
    %3176 = vmatpush1.msra.mxu0 0.0
    %3177 = vmatprep.subr.mxu0 0.0
    %3178 = vmatpush1.msra.mxu0 0.0
    %3179 = vmatprep.subr.mxu0 0.0
    %3180 = vmatpush1.msra.mxu0 0.0
    %3181 = vmatprep.subr.mxu0 0.0
    %3182 = vmatpush1.msra.mxu0 0.0
    %3183 = vmatprep.subr.mxu0 0.0
    %3184 = vmatpush1.msra.mxu0 0.0
    %3185 = vmatprep.subr.mxu0 0.0
    %3186 = vmatpush1.msra.mxu0 0.0
    %3187 = vmatprep.subr.mxu0 0.0
    %3188 = vmatpush1.msra.mxu0 0.0
    %3189 = vmatprep.subr.mxu0 0.0
    %3190 = vmatpush1.msra.mxu0 0.0
    %3191 = vmatprep.subr.mxu0 0.0
    %3192 = vmatpush1.msra.mxu0 0.0
    %3193 = vmatprep.mubr.f32.mxu0 0.0
    %3194 = vmatmul.mubr.f32.gmra.mrb[0].mxu0 %v3127
    %v3195 = vpop.f32.mrb[0].mxu0
    %v3196 = vadd.f32 %v3123, %v3195
    %v3197 = vpop.f32.mrb[0].mxu0
    %3198 = vdwg.mxu0
    %v3199 = vmax.f32 %v3196, 0.0
    %v3200 = vld [vmem:[%s8] sm:$0xff]
    %v3201 = vld [vmem:[%s8 + $0x8] sm:$0xff]
    %v3202 = vld [vmem:[%s8 + $0x10] sm:$0xff]
    %v3203 = vld [vmem:[%s8 + $0x18] sm:$0xff]
    %v3204 = vld [vmem:[%s9] sm:$0x1]
    %v3206 = vlaneseq
    %v3207 = vshrl.u32 %v3206, 7
    %v3208 = vsub.s32 0, %v3207
    %v3209 = vrot.slane %v3204, %v3208
    %v3212 = vsel %vm151, %v3199, 0
    %3214 = vmatprep.subr.mxu0 0.0
    %3215 = vmatpush1.msra.mxu0 %v3200
    %3216 = vmatprep.subr.mxu0 0.0
    %3217 = vmatpush1.msra.mxu0 %v3201
    %3218 = vmatprep.subr.mxu0 0.0
    %3219 = vmatpush1.msra.mxu0 %v3202
    %3220 = vmatprep.subr.mxu0 0.0
    %3221 = vmatpush1.msra.mxu0 %v3203
    %3222 = vmatprep.subr.mxu0 0.0
    %3223 = vmatpush1.msra.mxu0 0.0
    %3224 = vmatprep.subr.mxu0 0.0
    %3225 = vmatpush1.msra.mxu0 0.0
    %3226 = vmatprep.subr.mxu0 0.0
    %3227 = vmatpush1.msra.mxu0 0.0
    %3228 = vmatprep.subr.mxu0 0.0
    %3229 = vmatpush1.msra.mxu0 0.0
    %3230 = vmatprep.subr.mxu0 0.0
    %3231 = vmatpush1.msra.mxu0 0.0
    %3232 = vmatprep.subr.mxu0 0.0
    %3233 = vmatpush1.msra.mxu0 0.0
    %3234 = vmatprep.subr.mxu0 0.0
    %3235 = vmatpush1.msra.mxu0 0.0
    %3236 = vmatprep.subr.mxu0 0.0
    %3237 = vmatpush1.msra.mxu0 0.0
    %3238 = vmatprep.subr.mxu0 0.0
    %3239 = vmatpush1.msra.mxu0 0.0
    %3240 = vmatprep.subr.mxu0 0.0
    %3241 = vmatpush1.msra.mxu0 0.0
    %3242 = vmatprep.subr.mxu0 0.0
    %3243 = vmatpush1.msra.mxu0 0.0
    %3244 = vmatprep.subr.mxu0 0.0
    %3245 = vmatpush1.msra.mxu0 0.0
    %3246 = vmatprep.subr.mxu0 0.0
    %3247 = vmatpush1.msra.mxu0 0.0
    %3248 = vmatprep.subr.mxu0 0.0
    %3249 = vmatpush1.msra.mxu0 0.0
    %3250 = vmatprep.subr.mxu0 0.0
    %3251 = vmatpush1.msra.mxu0 0.0
    %3252 = vmatprep.subr.mxu0 0.0
    %3253 = vmatpush1.msra.mxu0 0.0
    %3254 = vmatprep.subr.mxu0 0.0
    %3255 = vmatpush1.msra.mxu0 0.0
    %3256 = vmatprep.subr.mxu0 0.0
    %3257 = vmatpush1.msra.mxu0 0.0
    %3258 = vmatprep.subr.mxu0 0.0
    %3259 = vmatpush1.msra.mxu0 0.0
    %3260 = vmatprep.subr.mxu0 0.0
    %3261 = vmatpush1.msra.mxu0 0.0
    %3262 = vmatprep.subr.mxu0 0.0
    %3263 = vmatpush1.msra.mxu0 0.0
    %3264 = vmatprep.subr.mxu0 0.0
    %3265 = vmatpush1.msra.mxu0 0.0
    %3266 = vmatprep.subr.mxu0 0.0
    %3267 = vmatpush1.msra.mxu0 0.0
    %3268 = vmatprep.subr.mxu0 0.0
    %3269 = vmatpush1.msra.mxu0 0.0
    %3270 = vmatprep.subr.mxu0 0.0
    %3271 = vmatpush1.msra.mxu0 0.0
    %3272 = vmatprep.subr.mxu0 0.0
    %3273 = vmatpush1.msra.mxu0 0.0
    %3274 = vmatprep.subr.mxu0 0.0
    %3275 = vmatpush1.msra.mxu0 0.0
    %3276 = vmatprep.subr.mxu0 0.0
    %3277 = vmatpush1.msra.mxu0 0.0
    %3278 = vmatprep.mubr.f32.mxu0 0.0
    %3279 = vmatmul.mubr.f32.gmra.mrb[0].mxu0 %v3212
    %v3280 = vpop.f32.mrb[0].mxu0
    %v3281 = vadd.f32 %v3209, %v3280
    %v3282 = vpop.f32.mrb[0].mxu0
    %3283 = vdwg.mxu0
    %vm3284 = vcmask 123904
    %3285 = vst.msk [vmem:[#allocation10] sm:$0x3] %vm3284, %v3281
    // Predicated region
    $region46: #{char_gru_forward.1} parent=1 // pred_check
      _
    $region47: #{char_gru_forward.1} parent=1 // pred_check_branch
      %3287 = sbr.rel (0) target = $region49
    $region48: #{char_gru_forward.1} parent=1 // pred_region
      %s3289 = ssub.s32 32, 32
      %3290 = vsyncadd [#allocation7], %s3289
      %s3292 = sshll.u32 [#allocation10], 4
      %s3293 = int_to_ptr.vmem [resolvable:$true] %s3292
      %3295 = dma.vmem_to_hbm [thread:$0]  %s3293, 32, %s10, [#allocation7]
    $region49: #{char_gru_forward.1} parent=1 // pred_fallthru
      _
    // Predicated region
    $region50: #{char_gru_forward.1} parent=1 // pred_check
      _
    $region51: #{char_gru_forward.1} parent=1 // pred_check_branch
      %3297 = sbr.rel (0) target = $region53
    $region52: #{char_gru_forward.1} parent=1 // pred_region
      %3298 = dma.done [#allocation7], 32
    $region53: #{char_gru_forward.1} parent=1 // pred_fallthru
      _
    %3299 = vsyncpa [#allocation6], 1
    %3300 = vsyncpa [#allocation9], 1
    %3301 = vsyncpa [#allocation7], 1

</llo_original>
